<compile_context>
chip_gen: v5e
topology: v5e:2x2
jax: 0.10.0
libtpu: 0.0.40
codegen_flags: <defaults>
</compile_context>

<pallas_src>
import numpy as np
import jax
import jax.numpy as jnp
from jax import lax
from jax.experimental import pallas as pl
from jax.experimental.pallas import tpu as pltpu


def _round_up(x, m):
    return ((x + m - 1) // m) * m


# ----------------------------------------------------------------------------
# Fused Pallas kernel: (embedding⊕layer-0 projection) -> L x LSTM -> linear
# ----------------------------------------------------------------------------
def make_fused_generator_kernel(num_layers, T, BB, Hp, Vp, mxu_dtype):
    TB = T * BB

    def kernel(*refs):
        it = iter(refs)
        tok_ref = next(it)          # [T, BB, 1] int32 (time-major batch block)
        len_ref = next(it)          # [BB, 1]    int32 sequence lengths
        layer_refs = [(next(it), next(it), next(it)) for _ in range(num_layers)]
        #   layer 0: in_w = emb @ W_ih^T padded  [Vp, 4*Hp]
        #   layer>0: in_w = W_ih^T padded        [Hp, 4*Hp]
        #   whh  = W_hh^T padded                 [Hp, 4*Hp]
        #   bias = (b_ih + b_hh) padded          [1,  4*Hp]  (f32)
        linw_ref = next(it)         # [Hp, Vp]
        linb_ref = next(it)         # [1, Vp]   f32
        h0_ref = next(it)           # [L, BB, Hp] f32
        c0_ref = next(it)           # [L, BB, Hp] f32
        logits_ref = next(it)       # [T, BB, Vp] f32
        hn_ref = next(it)           # [L, BB, Hp] f32
        cn_ref = next(it)           # [L, BB, Hp] f32
        gates_sc = next(it)         # [TB, 4*Hp] f32  hoisted input projection
        y_sc = next(it)             # [TB, Hp]   f32  per-layer hidden outputs
        h_sc = next(it)             # [BB, Hp]   f32
        c_sc = next(it)             # [BB, Hp]   f32

        lengths = len_ref[...]                                       # [BB, 1]

        # Embedding folded into the layer-0 input projection: one-hot tokens matmul
        # the fused [Vp, 4*Hp] table directly into gate space (exact fold — there is
        # no nonlinearity between embedding and W_ih).
        tok = tok_ref[...]                                           # [T, BB, 1]
        vocab_iota = lax.broadcasted_iota(jnp.int32, (T, BB, Vp), 2)
        onehot = (tok == vocab_iota).astype(mxu_dtype).reshape(TB, Vp)

        for layer in range(num_layers):
            inw_ref, whh_ref, b_ref = layer_refs[layer]
            if layer == 0:
                x = onehot                                           # [TB, Vp]
            else:
                x = y_sc[...].astype(mxu_dtype)                      # [TB, Hp]

            # Input projection + bias hoisted out of the serial time loop:
            # one big MXU matmul over the whole sequence block.
            gates_sc[...] = (jnp.dot(x, inw_ref[...],
                                     preferred_element_type=jnp.float32)
                             + b_ref[...])                           # [TB, 4Hp] f32

            h_sc[...] = h0_ref[layer]
            c_sc[...] = c0_ref[layer]
            whh = whh_ref[...]                                       # hoist the load

            # Static, fully-unrolled time loop (T is small & known at trace time).
            for t in range(T):
                h = h_sc[...]
                c = c_sc[...]
                # t*BB is a multiple of 8 -> unmasked full-vreg load.
                g = (gates_sc[pl.ds(t * BB, BB), :]
                     + jnp.dot(h.astype(mxu_dtype), whh,
                               preferred_element_type=jnp.float32))  # [BB, 4Hp]
                # PyTorch gate order i, f, g, o — each block lane-padded to Hp.
                i_g = jax.nn.sigmoid(g[:, 0 * Hp:1 * Hp])
                f_g = jax.nn.sigmoid(g[:, 1 * Hp:2 * Hp])
                g_g = jnp.tanh(g[:, 2 * Hp:3 * Hp])
                o_g = jax.nn.sigmoid(g[:, 3 * Hp:4 * Hp])
                c_new = f_g * c + i_g * g_g
                h_new = o_g * jnp.tanh(c_new)

                # pack_padded mask (one VPU compare per step) + vsel blends.
                m = lengths > t                                      # [BB, 1] bool
                h_sc[...] = jnp.where(m, h_new, h)
                c_sc[...] = jnp.where(m, c_new, c)
                y_sc[pl.ds(t * BB, BB), :] = jnp.where(m, h_new, 0.0)

            hn_ref[layer] = h_sc[...]
            cn_ref[layer] = c_sc[...]

        # Final linear over the whole (time-major, flattened) sequence block.
        out = (jnp.dot(y_sc[...].astype(mxu_dtype), linw_ref[...],
                       preferred_element_type=jnp.float32)
               + linb_ref[...])                                      # [TB, Vp]
        for t in range(T):
            logits_ref[t] = out[t * BB:(t + 1) * BB, :]

    return kernel


# ----------------------------------------------------------------------------
# Host-side wrapper (jitted)
# ----------------------------------------------------------------------------
def _pad_gate_cols(w, H, Hp, rows_p):
    """w: [rows, 4H] -> [rows_p, 4*Hp]; gate k goes to lanes [k*Hp, k*Hp+H)."""
    rows = w.shape[0]
    out = jnp.zeros((rows_p, 4 * Hp), jnp.float32)
    for k in range(4):
        out = out.at[:rows, k * Hp:k * Hp + H].set(w[:, k * H:(k + 1) * H])
    return out


def _pick_batch_block(Bp):
    for bb in (128, 64, 32, 16, 8):
        if bb <= Bp and Bp % bb == 0:
            return bb
    return Bp


def _generator_forward(params, tokens, lengths, states=None, *,
                       mxu_dtype=jnp.float32):
    """JAX/Pallas equivalent of Generator.forward.

    tokens  : [B, T] int32 (ids < vocab)
    lengths : [B] int32 (max == T)
    returns : (logits [B, T, V], lengths, (h_n [L,B,H], c_n [L,B,H]))
    """
    B, T = tokens.shape
    L = len(params["lstm"])
    H = params["lstm"][0]["w_hh"].shape[1]
    V, E = params["embedding"].shape
    Hp, Vp = _round_up(H, 128), _round_up(V, 128)
    Bp = _round_up(B, 8)
    BB = _pick_batch_block(Bp)          # batch block (multiple of 8, divides Bp)
    nb = Bp // BB
    TB = T * BB

    # --- tiny glue, all folded under jit -------------------------------------
    tok_pad = jnp.zeros((Bp, T), jnp.int32).at[:B, :].set(tokens.astype(jnp.int32))
    tok_tm = jnp.transpose(tok_pad).reshape(T, Bp, 1)                # time-major
    len_pad = jnp.zeros((Bp, 1), jnp.int32).at[:B, 0].set(lengths.astype(jnp.int32))

    emb = params["embedding"].astype(jnp.float32)                    # [V, E]

    layer_args = []
    for li, lp in enumerate(params["lstm"]):
        whh_t = lp["w_hh"].T.astype(jnp.float32)                     # [H, 4H]
        bias = (lp["b_ih"] + lp["b_hh"]).astype(jnp.float32)[None, :]
        if li == 0:
            # Fold the embedding into the layer-0 input projection (exact).
            fused = emb @ lp["w_ih"].T.astype(jnp.float32)           # [V, 4H]
            in_w = _pad_gate_cols(fused, H, Hp, Vp)                  # [Vp, 4Hp]
        else:
            in_w = _pad_gate_cols(lp["w_ih"].T.astype(jnp.float32), H, Hp, Hp)
        layer_args += [in_w.astype(mxu_dtype),
                       _pad_gate_cols(whh_t, H, Hp, Hp).astype(mxu_dtype),
                       _pad_gate_cols(bias, H, Hp, 1)]               # bias stays f32

    linw_pad = jnp.zeros((Hp, Vp), jnp.float32).at[:H, :V].set(
        params["linear_w"].T.astype(jnp.float32)).astype(mxu_dtype)
    linb_pad = jnp.zeros((1, Vp), jnp.float32).at[0, :V].set(
        params["linear_b"].astype(jnp.float32))

    if states is None:
        h0p = jnp.zeros((L, Bp, Hp), jnp.float32)
        c0p = jnp.zeros((L, Bp, Hp), jnp.float32)
    else:
        h0, c0 = states
        h0p = jnp.zeros((L, Bp, Hp), jnp.float32).at[:, :B, :H].set(
            h0.astype(jnp.float32))
        c0p = jnp.zeros((L, Bp, Hp), jnp.float32).at[:, :B, :H].set(
            c0.astype(jnp.float32))

    # --- BlockSpecs: batch-blocked grid (parallel across TensorCores) --------
    def full2d(shape):
        return pl.BlockSpec(shape, lambda b: (0, 0))

    in_specs = [
        pl.BlockSpec((T, BB, 1), lambda b: (0, b, 0)),               # tokens
        pl.BlockSpec((BB, 1), lambda b: (b, 0)),                     # lengths
    ]
    for li in range(L):
        in_rows = Vp if li == 0 else Hp
        in_specs += [full2d((in_rows, 4 * Hp)),                      # in_w
                     full2d((Hp, 4 * Hp)),                           # whh
                     full2d((1, 4 * Hp))]                            # bias
    in_specs += [full2d((Hp, Vp)), full2d((1, Vp)),
                 pl.BlockSpec((L, BB, Hp), lambda b: (0, b, 0)),     # h0
                 pl.BlockSpec((L, BB, Hp), lambda b: (0, b, 0))]     # c0
    out_specs = (pl.BlockSpec((T, BB, Vp), lambda b: (0, b, 0)),     # logits
                 pl.BlockSpec((L, BB, Hp), lambda b: (0, b, 0)),     # h_n
                 pl.BlockSpec((L, BB, Hp), lambda b: (0, b, 0)))     # c_n

    scratch_shapes = [pltpu.VMEM((TB, 4 * Hp), jnp.float32),         # hoisted gates
                      pltpu.VMEM((TB, Hp), jnp.float32),             # layer outputs
                      pltpu.VMEM((BB, Hp), jnp.float32),             # h state
                      pltpu.VMEM((BB, Hp), jnp.float32)]             # c state

    # Explicit scoped-VMEM budget: double-buffered blocks + scratch + headroom.
    itm = jnp.dtype(mxu_dtype).itemsize
    blk_bytes = (T * BB * 4 + BB * 4
                 + (Vp + (2 * L - 1) * Hp) * 4 * Hp * itm            # in_w + whh
                 + L * 4 * Hp * 4                                    # biases
                 + Hp * Vp * itm + Vp * 4                            # linear
                 + 4 * L * BB * Hp * 4                               # h0,c0,hn,cn
                 + T * BB * Vp * 4)                                  # logits
    scr_bytes = TB * (4 * Hp + Hp) * 4 + 2 * BB * Hp * 4
    vmem_limit = int(min(64 << 20,
                         max(32 << 20, 2 * blk_bytes + scr_bytes + (4 << 20))))

    kernel = make_fused_generator_kernel(L, T, BB, Hp, Vp, mxu_dtype)

    logits_pad, hn_pad, cn_pad = pl.pallas_call(
        kernel,
        out_shape=(jax.ShapeDtypeStruct((T, Bp, Vp), jnp.float32),
                   jax.ShapeDtypeStruct((L, Bp, Hp), jnp.float32),
                   jax.ShapeDtypeStruct((L, Bp, Hp), jnp.float32)),
        grid_spec=pltpu.PrefetchScalarGridSpec(
            num_scalar_prefetch=0,
            grid=(nb,),
            in_specs=in_specs,
            out_specs=out_specs,
            scratch_shapes=scratch_shapes),
        compiler_params=pltpu.CompilerParams(
            dimension_semantics=("parallel",),
            vmem_limit_bytes=vmem_limit),
    )(tok_tm, len_pad, *layer_args, linw_pad, linb_pad, h0p, c0p)

    # Only the small logits tensor is transposed to batch-first; pads sliced off.
    logits = jnp.transpose(logits_pad, (1, 0, 2))[:B, :, :V]
    h_n = hn_pad[:, :B, :H]
    c_n = cn_pad[:, :B, :H]
    return logits, lengths, (h_n, c_n)


generator_forward = jax.jit(_generator_forward, static_argnames=("mxu_dtype",))


# ----------------------------------------------------------------------------
# Pure-JAX reference (for correctness check)
# ----------------------------------------------------------------------------
def reference_forward(params, tokens, lengths):
    B, T = tokens.shape
    H = params["lstm"][0]["w_hh"].shape[1]
    emb = jnp.take(params["embedding"], tokens, axis=0)  # [B, T, E]
    mask = (jnp.arange(T)[None, :] < lengths[:, None]).astype(jnp.float32)

    layer_in = emb
    h_ns, c_ns = [], []
    for lp in params["lstm"]:
        h = jnp.zeros((B, H), jnp.float32)
        c = jnp.zeros((B, H), jnp.float32)
        outs = []
        for t in range(T):
            x_t = layer_in[:, t, :]
            gates = x_t @ lp["w_ih"].T + h @ lp["w_hh"].T + lp["b_ih"] + lp["b_hh"]
            i_g = jax.nn.sigmoid(gates[:, 0 * H:1 * H])
            f_g = jax.nn.sigmoid(gates[:, 1 * H:2 * H])
            g_g = jnp.tanh(gates[:, 2 * H:3 * H])
            o_g = jax.nn.sigmoid(gates[:, 3 * H:4 * H])
            c_new = f_g * c + i_g * g_g
            h_new = o_g * jnp.tanh(c_new)
            m = mask[:, t][:, None]
            h = m * h_new + (1 - m) * h
            c = m * c_new + (1 - m) * c
            outs.append(m * h_new)
        layer_in = jnp.stack(outs, axis=1)
        h_ns.append(h)
        c_ns.append(c)
    logits = layer_in @ params["linear_w"].T + params["linear_b"]
    return logits, (jnp.stack(h_ns), jnp.stack(c_ns))


# ----------------------------------------------------------------------------
# Main
# ----------------------------------------------------------------------------
if __name__ == "__main__":
    VOCAB = 16       # embedding_layer.num_embeddings
    EMBED = 8        # embedding_layer.embedding_dim
    HIDDEN = 32      # hidden_size
    LAYERS = 2       # num_layers
    B, T = 2, 8

    key = jax.random.PRNGKey(0)
    ks = list(jax.random.split(key, 4 + 4 * LAYERS))
    kidx = iter(range(len(ks)))
    bound = 1.0 / np.sqrt(HIDDEN)

    def u(k, shape):
        return jax.random.uniform(k, shape, jnp.float32, -bound, bound)

    params = {
        "embedding": jax.random.normal(ks[next(kidx)], (VOCAB, EMBED), jnp.float32),
        "lstm": [],
        "linear_w": u(ks[next(kidx)], (VOCAB, HIDDEN)),   # PyTorch Linear [out, in]
        "linear_b": u(ks[next(kidx)], (VOCAB,)),
    }
    for layer in range(LAYERS):
        e_in = EMBED if layer == 0 else HIDDEN
        params["lstm"].append({
            "w_ih": u(ks[next(kidx)], (4 * HIDDEN, e_in)),    # weight_ih_l{k}
            "w_hh": u(ks[next(kidx)], (4 * HIDDEN, HIDDEN)),  # weight_hh_l{k}
            "b_ih": u(ks[next(kidx)], (4 * HIDDEN,)),
            "b_hh": u(ks[next(kidx)], (4 * HIDDEN,)),
        })

    tok_key = jax.random.PRNGKey(42)
    tokens = jax.random.randint(tok_key, (B, T), 0, VOCAB, jnp.int32)
    lengths = jnp.array([8, 5], jnp.int32)   # max == T

    ref_logits, (ref_h, ref_c) = reference_forward(params, tokens, lengths)

    # --- f32 MXU path: bit-comparable to the reference ----------------------
    logits, out_lengths, (h_n, c_n) = generator_forward(params, tokens, lengths)
    jax.block_until_ready(logits)
    jax.block_until_ready(h_n)
    jax.block_until_ready(c_n)

    assert logits.shape == (B, T, VOCAB)
    assert h_n.shape == (LAYERS, B, HIDDEN) and c_n.shape == (LAYERS, B, HIDDEN)
    np.testing.assert_allclose(np.asarray(logits), np.asarray(ref_logits),
                               rtol=1e-4, atol=1e-4)
    np.testing.assert_allclose(np.asarray(h_n), np.asarray(ref_h), rtol=1e-4, atol=1e-4)
    np.testing.assert_allclose(np.asarray(c_n), np.asarray(ref_c), rtol=1e-4, atol=1e-4)

    # --- bf16 MXU-operand path (v6e/v7x throughput / VMEM), f32 accumulate ---
    logits_bf, _, (h_bf, c_bf) = generator_forward(params, tokens, lengths,
                                                   mxu_dtype=jnp.bfloat16)
    jax.block_until_ready(logits_bf)
    jax.block_until_ready(h_bf)
    jax.block_until_ready(c_bf)
    np.testing.assert_allclose(np.asarray(logits_bf), np.asarray(ref_logits),
                               rtol=5e-2, atol=5e-2)
    np.testing.assert_allclose(np.asarray(h_bf), np.asarray(ref_h),
                               rtol=5e-2, atol=5e-2)
    np.testing.assert_allclose(np.asarray(c_bf), np.asarray(ref_c),
                               rtol=5e-2, atol=5e-2)

    print("KERNEL_OK")
</pallas_src>

<mosaic_0001>
module attributes {stable_mosaic.version = 11 : i64} {
  func.func @kernel(%arg0: i32, %arg1: memref<8x8x1xi32, #tpu.memory_space<vmem>>, %arg2: memref<8x1xi32, #tpu.memory_space<vmem>>, %arg3: memref<128x512xf32, #tpu.memory_space<vmem>>, %arg4: memref<128x512xf32, #tpu.memory_space<vmem>>, %arg5: memref<1x512xf32, #tpu.memory_space<vmem>>, %arg6: memref<128x512xf32, #tpu.memory_space<vmem>>, %arg7: memref<128x512xf32, #tpu.memory_space<vmem>>, %arg8: memref<1x512xf32, #tpu.memory_space<vmem>>, %arg9: memref<128x128xf32, #tpu.memory_space<vmem>>, %arg10: memref<1x128xf32, #tpu.memory_space<vmem>>, %arg11: memref<2x8x128xf32, #tpu.memory_space<vmem>>, %arg12: memref<2x8x128xf32, #tpu.memory_space<vmem>>, %arg13: memref<8x8x128xf32, #tpu.memory_space<vmem>>, %arg14: memref<2x8x128xf32, #tpu.memory_space<vmem>>, %arg15: memref<2x8x128xf32, #tpu.memory_space<vmem>>, %arg16: memref<64x512xf32, #tpu.memory_space<vmem>>, %arg17: memref<64x128xf32, #tpu.memory_space<vmem>>, %arg18: memref<8x128xf32, #tpu.memory_space<vmem>>, %arg19: memref<8x128xf32, #tpu.memory_space<vmem>>) attributes {dimension_semantics = [#tpu.dimension_semantics<parallel>], iteration_bounds = array<i64: 1>, scalar_prefetch = 0 : i64, scratch_operands = 4 : i64, tpu.core_type = #tpu.core_type<tc>, window_params = [{transform_indices = @transform_0, window_bounds = array<i64: 8, 8, 1>}, {transform_indices = @transform_1, window_bounds = array<i64: 8, 1>}, {pipeline_mode = #tpu.pipeline_mode<synchronous>, transform_indices = @transform_2, window_bounds = array<i64: 128, 512>}, {pipeline_mode = #tpu.pipeline_mode<synchronous>, transform_indices = @transform_3, window_bounds = array<i64: 128, 512>}, {pipeline_mode = #tpu.pipeline_mode<synchronous>, transform_indices = @transform_4, window_bounds = array<i64: 1, 512>}, {pipeline_mode = #tpu.pipeline_mode<synchronous>, transform_indices = @transform_5, window_bounds = array<i64: 128, 512>}, {pipeline_mode = #tpu.pipeline_mode<synchronous>, transform_indices = @transform_6, window_bounds = array<i64: 128, 512>}, {pipeline_mode = #tpu.pipeline_mode<synchronous>, transform_indices = @transform_7, window_bounds = array<i64: 1, 512>}, {pipeline_mode = #tpu.pipeline_mode<synchronous>, transform_indices = @transform_8, window_bounds = array<i64: 128, 128>}, {pipeline_mode = #tpu.pipeline_mode<synchronous>, transform_indices = @transform_9, window_bounds = array<i64: 1, 128>}, {transform_indices = @transform_10, window_bounds = array<i64: 2, 8, 128>}, {transform_indices = @transform_11, window_bounds = array<i64: 2, 8, 128>}, {transform_indices = @transform_12, window_bounds = array<i64: 8, 8, 128>}, {transform_indices = @transform_13, window_bounds = array<i64: 2, 8, 128>}, {transform_indices = @transform_14, window_bounds = array<i64: 2, 8, 128>}]} {
    %c0 = arith.constant 0 : index
    %c0_0 = arith.constant 0 : index
    %0 = vector.load %arg2[%c0, %c0_0] : memref<8x1xi32, #tpu.memory_space<vmem>>, vector<8x1xi32>
    %c0_1 = arith.constant 0 : index
    %c0_2 = arith.constant 0 : index
    %c0_3 = arith.constant 0 : index
    %1 = vector.load %arg1[%c0_1, %c0_2, %c0_3] : memref<8x8x1xi32, #tpu.memory_space<vmem>>, vector<8x8x1xi32>
    %2 = tpu.iota {dimensions = array<i32: 2>} : vector<8x8x128xi32>
    %3 = vector.broadcast %1 : vector<8x8x1xi32> to vector<8x8x128xi32>
    %4 = arith.cmpi eq, %3, %2 : vector<8x8x128xi32>
    %5 = arith.extui %4 : vector<8x8x128xi1> to vector<8x8x128xi32>
    %6 = arith.sitofp %5 : vector<8x8x128xi32> to vector<8x8x128xf32>
    %7 = vector.shape_cast %6 : vector<8x8x128xf32> to vector<64x128xf32>
    %c0_4 = arith.constant 0 : index
    %c0_5 = arith.constant 0 : index
    %8 = vector.load %arg3[%c0_4, %c0_5] : memref<128x512xf32, #tpu.memory_space<vmem>>, vector<128x512xf32>
    %cst = arith.constant dense<0.000000e+00> : vector<64x512xf32>
    %9 = tpu.matmul %7, %8, %cst {dimension_numbers = #tpu.dot_dimension_numbers<[1], [0], [0], [1], [0, 0, 1, 1], [], []>} : vector<64x128xf32>, vector<128x512xf32>, vector<64x512xf32> -> vector<64x512xf32>
    %c0_6 = arith.constant 0 : index
    %c0_7 = arith.constant 0 : index
    %10 = vector.load %arg5[%c0_6, %c0_7] : memref<1x512xf32, #tpu.memory_space<vmem>>, vector<1x512xf32>
    %11 = vector.broadcast %10 : vector<1x512xf32> to vector<64x512xf32>
    %12 = arith.addf %9, %11 : vector<64x512xf32>
    %c0_8 = arith.constant 0 : index
    %c0_9 = arith.constant 0 : index
    %13 = vector.load %arg16[%c0_8, %c0_9] : memref<64x512xf32, #tpu.memory_space<vmem>>, vector<64x512xf32>
    tpu.vector_store %arg16[%c0_8, %c0_9], %12 {strides = array<i32>} : memref<64x512xf32, #tpu.memory_space<vmem>>, vector<64x512xf32>,
    %c0_10 = arith.constant 0 : index
    %c0_11 = arith.constant 0 : index
    %c0_12 = arith.constant 0 : index
    %14 = vector.load %arg11[%c0_10, %c0_11, %c0_12] : memref<2x8x128xf32, #tpu.memory_space<vmem>>, vector<1x8x128xf32>
    %15 = vector.shape_cast %14 : vector<1x8x128xf32> to vector<8x128xf32>
    %c0_13 = arith.constant 0 : index
    %c0_14 = arith.constant 0 : index
    %16 = vector.load %arg18[%c0_13, %c0_14] : memref<8x128xf32, #tpu.memory_space<vmem>>, vector<8x128xf32>
    tpu.vector_store %arg18[%c0_13, %c0_14], %15 {strides = array<i32>} : memref<8x128xf32, #tpu.memory_space<vmem>>, vector<8x128xf32>,
    %c0_15 = arith.constant 0 : index
    %c0_16 = arith.constant 0 : index
    %c0_17 = arith.constant 0 : index
    %17 = vector.load %arg12[%c0_15, %c0_16, %c0_17] : memref<2x8x128xf32, #tpu.memory_space<vmem>>, vector<1x8x128xf32>
    %18 = vector.shape_cast %17 : vector<1x8x128xf32> to vector<8x128xf32>
    %c0_18 = arith.constant 0 : index
    %c0_19 = arith.constant 0 : index
    %19 = vector.load %arg19[%c0_18, %c0_19] : memref<8x128xf32, #tpu.memory_space<vmem>>, vector<8x128xf32>
    tpu.vector_store %arg19[%c0_18, %c0_19], %18 {strides = array<i32>} : memref<8x128xf32, #tpu.memory_space<vmem>>, vector<8x128xf32>,
    %c0_20 = arith.constant 0 : index
    %c0_21 = arith.constant 0 : index
    %20 = vector.load %arg4[%c0_20, %c0_21] : memref<128x512xf32, #tpu.memory_space<vmem>>, vector<128x512xf32>
    %c0_22 = arith.constant 0 : index
    %c0_23 = arith.constant 0 : index
    %21 = vector.load %arg18[%c0_22, %c0_23] : memref<8x128xf32, #tpu.memory_space<vmem>>, vector<8x128xf32>
    %c0_24 = arith.constant 0 : index
    %c0_25 = arith.constant 0 : index
    %22 = vector.load %arg19[%c0_24, %c0_25] : memref<8x128xf32, #tpu.memory_space<vmem>>, vector<8x128xf32>
    %c0_26 = arith.constant 0 : index
    %c0_27 = arith.constant 0 : index
    %23 = vector.load %arg16[%c0_26, %c0_27] : memref<64x512xf32, #tpu.memory_space<vmem>>, vector<8x512xf32>
    %cst_28 = arith.constant dense<0.000000e+00> : vector<8x512xf32>
    %24 = tpu.matmul %21, %20, %cst_28 {dimension_numbers = #tpu.dot_dimension_numbers<[1], [0], [0], [1], [0, 0, 1, 1], [], []>} : vector<8x128xf32>, vector<128x512xf32>, vector<8x512xf32> -> vector<8x512xf32>
    %25 = arith.addf %23, %24 : vector<8x512xf32>
    %26 = vector.extract_strided_slice %25 {offsets = [0, 0], sizes = [8, 128], strides = [1, 1]} : vector<8x512xf32> to vector<8x128xf32>
    %27 = arith.negf %26 : vector<8x128xf32>
    %28 = math.exp %27 : vector<8x128xf32>
    %cst_29 = arith.constant 1.000000e+00 : f32
    %29 = vector.broadcast %cst_29 : f32 to vector<8x128xf32>
    %30 = arith.addf %29, %28 : vector<8x128xf32>
    %31 = arith.divf %29, %30 : vector<8x128xf32>
    %32 = vector.extract_strided_slice %25 {offsets = [0, 128], sizes = [8, 128], strides = [1, 1]} : vector<8x512xf32> to vector<8x128xf32>
    %33 = arith.negf %32 : vector<8x128xf32>
    %34 = math.exp %33 : vector<8x128xf32>
    %cst_30 = arith.constant 1.000000e+00 : f32
    %35 = vector.broadcast %cst_30 : f32 to vector<8x128xf32>
    %36 = arith.addf %35, %34 : vector<8x128xf32>
    %37 = arith.divf %35, %36 : vector<8x128xf32>
    %38 = vector.extract_strided_slice %25 {offsets = [0, 256], sizes = [8, 128], strides = [1, 1]} : vector<8x512xf32> to vector<8x128xf32>
    %39 = math.tanh %38 : vector<8x128xf32>
    %40 = vector.extract_strided_slice %25 {offsets = [0, 384], sizes = [8, 128], strides = [1, 1]} : vector<8x512xf32> to vector<8x128xf32>
    %41 = arith.negf %40 : vector<8x128xf32>
    %42 = math.exp %41 : vector<8x128xf32>
    %cst_31 = arith.constant 1.000000e+00 : f32
    %43 = vector.broadcast %cst_31 : f32 to vector<8x128xf32>
    %44 = arith.addf %43, %42 : vector<8x128xf32>
    %45 = arith.divf %43, %44 : vector<8x128xf32>
    %46 = arith.mulf %37, %22 : vector<8x128xf32>
    %47 = arith.mulf %31, %39 : vector<8x128xf32>
    %48 = arith.addf %46, %47 : vector<8x128xf32>
    %49 = math.tanh %48 : vector<8x128xf32>
    %50 = arith.mulf %45, %49 : vector<8x128xf32>
    %c0_i32 = arith.constant 0 : i32
    %51 = vector.broadcast %c0_i32 : i32 to vector<8x1xi32>
    %52 = arith.cmpi sgt, %0, %51 : vector<8x1xi32>
    %53 = vector.shape_cast %52 : vector<8x1xi1> to vector<8x1xi1>
    %54 = vector.broadcast %53 : vector<8x1xi1> to vector<8x128xi1>
    %55 = arith.select %54, %50, %21 : vector<8x128xi1>, vector<8x128xf32>
    %c0_32 = arith.constant 0 : index
    %c0_33 = arith.constant 0 : index
    %56 = vector.load %arg18[%c0_32, %c0_33] : memref<8x128xf32, #tpu.memory_space<vmem>>, vector<8x128xf32>
    tpu.vector_store %arg18[%c0_32, %c0_33], %55 {strides = array<i32>} : memref<8x128xf32, #tpu.memory_space<vmem>>, vector<8x128xf32>,
    %57 = vector.shape_cast %52 : vector<8x1xi1> to vector<8x1xi1>
    %58 = vector.broadcast %57 : vector<8x1xi1> to vector<8x128xi1>
    %59 = arith.select %58, %48, %22 : vector<8x128xi1>, vector<8x128xf32>
    %c0_34 = arith.constant 0 : index
    %c0_35 = arith.constant 0 : index
    %60 = vector.load %arg19[%c0_34, %c0_35] : memref<8x128xf32, #tpu.memory_space<vmem>>, vector<8x128xf32>
    tpu.vector_store %arg19[%c0_34, %c0_35], %59 {strides = array<i32>} : memref<8x128xf32, #tpu.memory_space<vmem>>, vector<8x128xf32>,
    %cst_36 = arith.constant 0.000000e+00 : f32
    %61 = vector.shape_cast %52 : vector<8x1xi1> to vector<8x1xi1>
    %62 = vector.broadcast %61 : vector<8x1xi1> to vector<8x128xi1>
    %63 = vector.broadcast %cst_36 : f32 to vector<8x128xf32>
    %64 = arith.select %62, %50, %63 : vector<8x128xi1>, vector<8x128xf32>
    %c0_37 = arith.constant 0 : index
    %c0_38 = arith.constant 0 : index
    %65 = vector.load %arg17[%c0_37, %c0_38] : memref<64x128xf32, #tpu.memory_space<vmem>>, vector<8x128xf32>
    tpu.vector_store %arg17[%c0_37, %c0_38], %64 {strides = array<i32>} : memref<64x128xf32, #tpu.memory_space<vmem>>, vector<8x128xf32>,
    %c0_39 = arith.constant 0 : index
    %c0_40 = arith.constant 0 : index
    %66 = vector.load %arg18[%c0_39, %c0_40] : memref<8x128xf32, #tpu.memory_space<vmem>>, vector<8x128xf32>
    %c0_41 = arith.constant 0 : index
    %c0_42 = arith.constant 0 : index
    %67 = vector.load %arg19[%c0_41, %c0_42] : memref<8x128xf32, #tpu.memory_space<vmem>>, vector<8x128xf32>
    %c8 = arith.constant 8 : index
    %c0_43 = arith.constant 0 : index
    %68 = vector.load %arg16[%c8, %c0_43] : memref<64x512xf32, #tpu.memory_space<vmem>>, vector<8x512xf32>
    %cst_44 = arith.constant dense<0.000000e+00> : vector<8x512xf32>
    %69 = tpu.matmul %66, %20, %cst_44 {dimension_numbers = #tpu.dot_dimension_numbers<[1], [0], [0], [1], [0, 0, 1, 1], [], []>} : vector<8x128xf32>, vector<128x512xf32>, vector<8x512xf32> -> vector<8x512xf32>
    %70 = arith.addf %68, %69 : vector<8x512xf32>
    %71 = vector.extract_strided_slice %70 {offsets = [0, 0], sizes = [8, 128], strides = [1, 1]} : vector<8x512xf32> to vector<8x128xf32>
    %72 = arith.negf %71 : vector<8x128xf32>
    %73 = math.exp %72 : vector<8x128xf32>
    %cst_45 = arith.constant 1.000000e+00 : f32
    %74 = vector.broadcast %cst_45 : f32 to vector<8x128xf32>
    %75 = arith.addf %74, %73 : vector<8x128xf32>
    %76 = arith.divf %74, %75 : vector<8x128xf32>
    %77 = vector.extract_strided_slice %70 {offsets = [0, 128], sizes = [8, 128], strides = [1, 1]} : vector<8x512xf32> to vector<8x128xf32>
    %78 = arith.negf %77 : vector<8x128xf32>
    %79 = math.exp %78 : vector<8x128xf32>
    %cst_46 = arith.constant 1.000000e+00 : f32
    %80 = vector.broadcast %cst_46 : f32 to vector<8x128xf32>
    %81 = arith.addf %80, %79 : vector<8x128xf32>
    %82 = arith.divf %80, %81 : vector<8x128xf32>
    %83 = vector.extract_strided_slice %70 {offsets = [0, 256], sizes = [8, 128], strides = [1, 1]} : vector<8x512xf32> to vector<8x128xf32>
    %84 = math.tanh %83 : vector<8x128xf32>
    %85 = vector.extract_strided_slice %70 {offsets = [0, 384], sizes = [8, 128], strides = [1, 1]} : vector<8x512xf32> to vector<8x128xf32>
    %86 = arith.negf %85 : vector<8x128xf32>
    %87 = math.exp %86 : vector<8x128xf32>
    %cst_47 = arith.constant 1.000000e+00 : f32
    %88 = vector.broadcast %cst_47 : f32 to vector<8x128xf32>
    %89 = arith.addf %88, %87 : vector<8x128xf32>
    %90 = arith.divf %88, %89 : vector<8x128xf32>
    %91 = arith.mulf %82, %67 : vector<8x128xf32>
    %92 = arith.mulf %76, %84 : vector<8x128xf32>
    %93 = arith.addf %91, %92 : vector<8x128xf32>
    %94 = math.tanh %93 : vector<8x128xf32>
    %95 = arith.mulf %90, %94 : vector<8x128xf32>
    %c1_i32 = arith.constant 1 : i32
    %96 = vector.broadcast %c1_i32 : i32 to vector<8x1xi32>
    %97 = arith.cmpi sgt, %0, %96 : vector<8x1xi32>
    %98 = vector.shape_cast %97 : vector<8x1xi1> to vector<8x1xi1>
    %99 = vector.broadcast %98 : vector<8x1xi1> to vector<8x128xi1>
    %100 = arith.select %99, %95, %66 : vector<8x128xi1>, vector<8x128xf32>
    %c0_48 = arith.constant 0 : index
    %c0_49 = arith.constant 0 : index
    %101 = vector.load %arg18[%c0_48, %c0_49] : memref<8x128xf32, #tpu.memory_space<vmem>>, vector<8x128xf32>
    tpu.vector_store %arg18[%c0_48, %c0_49], %100 {strides = array<i32>} : memref<8x128xf32, #tpu.memory_space<vmem>>, vector<8x128xf32>,
    %102 = vector.shape_cast %97 : vector<8x1xi1> to vector<8x1xi1>
    %103 = vector.broadcast %102 : vector<8x1xi1> to vector<8x128xi1>
    %104 = arith.select %103, %93, %67 : vector<8x128xi1>, vector<8x128xf32>
    %c0_50 = arith.constant 0 : index
    %c0_51 = arith.constant 0 : index
    %105 = vector.load %arg19[%c0_50, %c0_51] : memref<8x128xf32, #tpu.memory_space<vmem>>, vector<8x128xf32>
    tpu.vector_store %arg19[%c0_50, %c0_51], %104 {strides = array<i32>} : memref<8x128xf32, #tpu.memory_space<vmem>>, vector<8x128xf32>,
    %cst_52 = arith.constant 0.000000e+00 : f32
    %106 = vector.shape_cast %97 : vector<8x1xi1> to vector<8x1xi1>
    %107 = vector.broadcast %106 : vector<8x1xi1> to vector<8x128xi1>
    %108 = vector.broadcast %cst_52 : f32 to vector<8x128xf32>
    %109 = arith.select %107, %95, %108 : vector<8x128xi1>, vector<8x128xf32>
    %c8_53 = arith.constant 8 : index
    %c0_54 = arith.constant 0 : index
    %110 = vector.load %arg17[%c8_53, %c0_54] : memref<64x128xf32, #tpu.memory_space<vmem>>, vector<8x128xf32>
    tpu.vector_store %arg17[%c8_53, %c0_54], %109 {strides = array<i32>} : memref<64x128xf32, #tpu.memory_space<vmem>>, vector<8x128xf32>,
    %c0_55 = arith.constant 0 : index
    %c0_56 = arith.constant 0 : index
    %111 = vector.load %arg18[%c0_55, %c0_56] : memref<8x128xf32, #tpu.memory_space<vmem>>, vector<8x128xf32>
    %c0_57 = arith.constant 0 : index
    %c0_58 = arith.constant 0 : index
    %112 = vector.load %arg19[%c0_57, %c0_58] : memref<8x128xf32, #tpu.memory_space<vmem>>, vector<8x128xf32>
    %c16 = arith.constant 16 : index
    %c0_59 = arith.constant 0 : index
    %113 = vector.load %arg16[%c16, %c0_59] : memref<64x512xf32, #tpu.memory_space<vmem>>, vector<8x512xf32>
    %cst_60 = arith.constant dense<0.000000e+00> : vector<8x512xf32>
    %114 = tpu.matmul %111, %20, %cst_60 {dimension_numbers = #tpu.dot_dimension_numbers<[1], [0], [0], [1], [0, 0, 1, 1], [], []>} : vector<8x128xf32>, vector<128x512xf32>, vector<8x512xf32> -> vector<8x512xf32>
    %115 = arith.addf %113, %114 : vector<8x512xf32>
    %116 = vector.extract_strided_slice %115 {offsets = [0, 0], sizes = [8, 128], strides = [1, 1]} : vector<8x512xf32> to vector<8x128xf32>
    %117 = arith.negf %116 : vector<8x128xf32>
    %118 = math.exp %117 : vector<8x128xf32>
    %cst_61 = arith.constant 1.000000e+00 : f32
    %119 = vector.broadcast %cst_61 : f32 to vector<8x128xf32>
    %120 = arith.addf %119, %118 : vector<8x128xf32>
    %121 = arith.divf %119, %120 : vector<8x128xf32>
    %122 = vector.extract_strided_slice %115 {offsets = [0, 128], sizes = [8, 128], strides = [1, 1]} : vector<8x512xf32> to vector<8x128xf32>
    %123 = arith.negf %122 : vector<8x128xf32>
    %124 = math.exp %123 : vector<8x128xf32>
    %cst_62 = arith.constant 1.000000e+00 : f32
    %125 = vector.broadcast %cst_62 : f32 to vector<8x128xf32>
    %126 = arith.addf %125, %124 : vector<8x128xf32>
    %127 = arith.divf %125, %126 : vector<8x128xf32>
    %128 = vector.extract_strided_slice %115 {offsets = [0, 256], sizes = [8, 128], strides = [1, 1]} : vector<8x512xf32> to vector<8x128xf32>
    %129 = math.tanh %128 : vector<8x128xf32>
    %130 = vector.extract_strided_slice %115 {offsets = [0, 384], sizes = [8, 128], strides = [1, 1]} : vector<8x512xf32> to vector<8x128xf32>
    %131 = arith.negf %130 : vector<8x128xf32>
    %132 = math.exp %131 : vector<8x128xf32>
    %cst_63 = arith.constant 1.000000e+00 : f32
    %133 = vector.broadcast %cst_63 : f32 to vector<8x128xf32>
    %134 = arith.addf %133, %132 : vector<8x128xf32>
    %135 = arith.divf %133, %134 : vector<8x128xf32>
    %136 = arith.mulf %127, %112 : vector<8x128xf32>
    %137 = arith.mulf %121, %129 : vector<8x128xf32>
    %138 = arith.addf %136, %137 : vector<8x128xf32>
    %139 = math.tanh %138 : vector<8x128xf32>
    %140 = arith.mulf %135, %139 : vector<8x128xf32>
    %c2_i32 = arith.constant 2 : i32
    %141 = vector.broadcast %c2_i32 : i32 to vector<8x1xi32>
    %142 = arith.cmpi sgt, %0, %141 : vector<8x1xi32>
    %143 = vector.shape_cast %142 : vector<8x1xi1> to vector<8x1xi1>
    %144 = vector.broadcast %143 : vector<8x1xi1> to vector<8x128xi1>
    %145 = arith.select %144, %140, %111 : vector<8x128xi1>, vector<8x128xf32>
    %c0_64 = arith.constant 0 : index
    %c0_65 = arith.constant 0 : index
    %146 = vector.load %arg18[%c0_64, %c0_65] : memref<8x128xf32, #tpu.memory_space<vmem>>, vector<8x128xf32>
    tpu.vector_store %arg18[%c0_64, %c0_65], %145 {strides = array<i32>} : memref<8x128xf32, #tpu.memory_space<vmem>>, vector<8x128xf32>,
    %147 = vector.shape_cast %142 : vector<8x1xi1> to vector<8x1xi1>
    %148 = vector.broadcast %147 : vector<8x1xi1> to vector<8x128xi1>
    %149 = arith.select %148, %138, %112 : vector<8x128xi1>, vector<8x128xf32>
    %c0_66 = arith.constant 0 : index
    %c0_67 = arith.constant 0 : index
    %150 = vector.load %arg19[%c0_66, %c0_67] : memref<8x128xf32, #tpu.memory_space<vmem>>, vector<8x128xf32>
    tpu.vector_store %arg19[%c0_66, %c0_67], %149 {strides = array<i32>} : memref<8x128xf32, #tpu.memory_space<vmem>>, vector<8x128xf32>,
    %cst_68 = arith.constant 0.000000e+00 : f32
    %151 = vector.shape_cast %142 : vector<8x1xi1> to vector<8x1xi1>
    %152 = vector.broadcast %151 : vector<8x1xi1> to vector<8x128xi1>
    %153 = vector.broadcast %cst_68 : f32 to vector<8x128xf32>
    %154 = arith.select %152, %140, %153 : vector<8x128xi1>, vector<8x128xf32>
    %c16_69 = arith.constant 16 : index
    %c0_70 = arith.constant 0 : index
    %155 = vector.load %arg17[%c16_69, %c0_70] : memref<64x128xf32, #tpu.memory_space<vmem>>, vector<8x128xf32>
    tpu.vector_store %arg17[%c16_69, %c0_70], %154 {strides = array<i32>} : memref<64x128xf32, #tpu.memory_space<vmem>>, vector<8x128xf32>,
    %c0_71 = arith.constant 0 : index
    %c0_72 = arith.constant 0 : index
    %156 = vector.load %arg18[%c0_71, %c0_72] : memref<8x128xf32, #tpu.memory_space<vmem>>, vector<8x128xf32>
    %c0_73 = arith.constant 0 : index
    %c0_74 = arith.constant 0 : index
    %157 = vector.load %arg19[%c0_73, %c0_74] : memref<8x128xf32, #tpu.memory_space<vmem>>, vector<8x128xf32>
    %c24 = arith.constant 24 : index
    %c0_75 = arith.constant 0 : index
    %158 = vector.load %arg16[%c24, %c0_75] : memref<64x512xf32, #tpu.memory_space<vmem>>, vector<8x512xf32>
    %cst_76 = arith.constant dense<0.000000e+00> : vector<8x512xf32>
    %159 = tpu.matmul %156, %20, %cst_76 {dimension_numbers = #tpu.dot_dimension_numbers<[1], [0], [0], [1], [0, 0, 1, 1], [], []>} : vector<8x128xf32>, vector<128x512xf32>, vector<8x512xf32> -> vector<8x512xf32>
    %160 = arith.addf %158, %159 : vector<8x512xf32>
    %161 = vector.extract_strided_slice %160 {offsets = [0, 0], sizes = [8, 128], strides = [1, 1]} : vector<8x512xf32> to vector<8x128xf32>
    %162 = arith.negf %161 : vector<8x128xf32>
    %163 = math.exp %162 : vector<8x128xf32>
    %cst_77 = arith.constant 1.000000e+00 : f32
    %164 = vector.broadcast %cst_77 : f32 to vector<8x128xf32>
    %165 = arith.addf %164, %163 : vector<8x128xf32>
    %166 = arith.divf %164, %165 : vector<8x128xf32>
    %167 = vector.extract_strided_slice %160 {offsets = [0, 128], sizes = [8, 128], strides = [1, 1]} : vector<8x512xf32> to vector<8x128xf32>
    %168 = arith.negf %167 : vector<8x128xf32>
    %169 = math.exp %168 : vector<8x128xf32>
    %cst_78 = arith.constant 1.000000e+00 : f32
    %170 = vector.broadcast %cst_78 : f32 to vector<8x128xf32>
    %171 = arith.addf %170, %169 : vector<8x128xf32>
    %172 = arith.divf %170, %171 : vector<8x128xf32>
    %173 = vector.extract_strided_slice %160 {offsets = [0, 256], sizes = [8, 128], strides = [1, 1]} : vector<8x512xf32> to vector<8x128xf32>
    %174 = math.tanh %173 : vector<8x128xf32>
    %175 = vector.extract_strided_slice %160 {offsets = [0, 384], sizes = [8, 128], strides = [1, 1]} : vector<8x512xf32> to vector<8x128xf32>
    %176 = arith.negf %175 : vector<8x128xf32>
    %177 = math.exp %176 : vector<8x128xf32>
    %cst_79 = arith.constant 1.000000e+00 : f32
    %178 = vector.broadcast %cst_79 : f32 to vector<8x128xf32>
    %179 = arith.addf %178, %177 : vector<8x128xf32>
    %180 = arith.divf %178, %179 : vector<8x128xf32>
    %181 = arith.mulf %172, %157 : vector<8x128xf32>
    %182 = arith.mulf %166, %174 : vector<8x128xf32>
    %183 = arith.addf %181, %182 : vector<8x128xf32>
    %184 = math.tanh %183 : vector<8x128xf32>
    %185 = arith.mulf %180, %184 : vector<8x128xf32>
    %c3_i32 = arith.constant 3 : i32
    %186 = vector.broadcast %c3_i32 : i32 to vector<8x1xi32>
    %187 = arith.cmpi sgt, %0, %186 : vector<8x1xi32>
    %188 = vector.shape_cast %187 : vector<8x1xi1> to vector<8x1xi1>
    %189 = vector.broadcast %188 : vector<8x1xi1> to vector<8x128xi1>
    %190 = arith.select %189, %185, %156 : vector<8x128xi1>, vector<8x128xf32>
    %c0_80 = arith.constant 0 : index
    %c0_81 = arith.constant 0 : index
    %191 = vector.load %arg18[%c0_80, %c0_81] : memref<8x128xf32, #tpu.memory_space<vmem>>, vector<8x128xf32>
    tpu.vector_store %arg18[%c0_80, %c0_81], %190 {strides = array<i32>} : memref<8x128xf32, #tpu.memory_space<vmem>>, vector<8x128xf32>,
    %192 = vector.shape_cast %187 : vector<8x1xi1> to vector<8x1xi1>
    %193 = vector.broadcast %192 : vector<8x1xi1> to vector<8x128xi1>
    %194 = arith.select %193, %183, %157 : vector<8x128xi1>, vector<8x128xf32>
    %c0_82 = arith.constant 0 : index
    %c0_83 = arith.constant 0 : index
    %195 = vector.load %arg19[%c0_82, %c0_83] : memref<8x128xf32, #tpu.memory_space<vmem>>, vector<8x128xf32>
    tpu.vector_store %arg19[%c0_82, %c0_83], %194 {strides = array<i32>} : memref<8x128xf32, #tpu.memory_space<vmem>>, vector<8x128xf32>,
    %cst_84 = arith.constant 0.000000e+00 : f32
    %196 = vector.shape_cast %187 : vector<8x1xi1> to vector<8x1xi1>
    %197 = vector.broadcast %196 : vector<8x1xi1> to vector<8x128xi1>
    %198 = vector.broadcast %cst_84 : f32 to vector<8x128xf32>
    %199 = arith.select %197, %185, %198 : vector<8x128xi1>, vector<8x128xf32>
    %c24_85 = arith.constant 24 : index
    %c0_86 = arith.constant 0 : index
    %200 = vector.load %arg17[%c24_85, %c0_86] : memref<64x128xf32, #tpu.memory_space<vmem>>, vector<8x128xf32>
    tpu.vector_store %arg17[%c24_85, %c0_86], %199 {strides = array<i32>} : memref<64x128xf32, #tpu.memory_space<vmem>>, vector<8x128xf32>,
    %c0_87 = arith.constant 0 : index
    %c0_88 = arith.constant 0 : index
    %201 = vector.load %arg18[%c0_87, %c0_88] : memref<8x128xf32, #tpu.memory_space<vmem>>, vector<8x128xf32>
    %c0_89 = arith.constant 0 : index
    %c0_90 = arith.constant 0 : index
    %202 = vector.load %arg19[%c0_89, %c0_90] : memref<8x128xf32, #tpu.memory_space<vmem>>, vector<8x128xf32>
    %c32 = arith.constant 32 : index
    %c0_91 = arith.constant 0 : index
    %203 = vector.load %arg16[%c32, %c0_91] : memref<64x512xf32, #tpu.memory_space<vmem>>, vector<8x512xf32>
    %cst_92 = arith.constant dense<0.000000e+00> : vector<8x512xf32>
    %204 = tpu.matmul %201, %20, %cst_92 {dimension_numbers = #tpu.dot_dimension_numbers<[1], [0], [0], [1], [0, 0, 1, 1], [], []>} : vector<8x128xf32>, vector<128x512xf32>, vector<8x512xf32> -> vector<8x512xf32>
    %205 = arith.addf %203, %204 : vector<8x512xf32>
    %206 = vector.extract_strided_slice %205 {offsets = [0, 0], sizes = [8, 128], strides = [1, 1]} : vector<8x512xf32> to vector<8x128xf32>
    %207 = arith.negf %206 : vector<8x128xf32>
    %208 = math.exp %207 : vector<8x128xf32>
    %cst_93 = arith.constant 1.000000e+00 : f32
    %209 = vector.broadcast %cst_93 : f32 to vector<8x128xf32>
    %210 = arith.addf %209, %208 : vector<8x128xf32>
    %211 = arith.divf %209, %210 : vector<8x128xf32>
    %212 = vector.extract_strided_slice %205 {offsets = [0, 128], sizes = [8, 128], strides = [1, 1]} : vector<8x512xf32> to vector<8x128xf32>
    %213 = arith.negf %212 : vector<8x128xf32>
    %214 = math.exp %213 : vector<8x128xf32>
    %cst_94 = arith.constant 1.000000e+00 : f32
    %215 = vector.broadcast %cst_94 : f32 to vector<8x128xf32>
    %216 = arith.addf %215, %214 : vector<8x128xf32>
    %217 = arith.divf %215, %216 : vector<8x128xf32>
    %218 = vector.extract_strided_slice %205 {offsets = [0, 256], sizes = [8, 128], strides = [1, 1]} : vector<8x512xf32> to vector<8x128xf32>
    %219 = math.tanh %218 : vector<8x128xf32>
    %220 = vector.extract_strided_slice %205 {offsets = [0, 384], sizes = [8, 128], strides = [1, 1]} : vector<8x512xf32> to vector<8x128xf32>
    %221 = arith.negf %220 : vector<8x128xf32>
    %222 = math.exp %221 : vector<8x128xf32>
    %cst_95 = arith.constant 1.000000e+00 : f32
    %223 = vector.broadcast %cst_95 : f32 to vector<8x128xf32>
    %224 = arith.addf %223, %222 : vector<8x128xf32>
    %225 = arith.divf %223, %224 : vector<8x128xf32>
    %226 = arith.mulf %217, %202 : vector<8x128xf32>
    %227 = arith.mulf %211, %219 : vector<8x128xf32>
    %228 = arith.addf %226, %227 : vector<8x128xf32>
    %229 = math.tanh %228 : vector<8x128xf32>
    %230 = arith.mulf %225, %229 : vector<8x128xf32>
    %c4_i32 = arith.constant 4 : i32
    %231 = vector.broadcast %c4_i32 : i32 to vector<8x1xi32>
    %232 = arith.cmpi sgt, %0, %231 : vector<8x1xi32>
    %233 = vector.shape_cast %232 : vector<8x1xi1> to vector<8x1xi1>
    %234 = vector.broadcast %233 : vector<8x1xi1> to vector<8x128xi1>
    %235 = arith.select %234, %230, %201 : vector<8x128xi1>, vector<8x128xf32>
    %c0_96 = arith.constant 0 : index
    %c0_97 = arith.constant 0 : index
    %236 = vector.load %arg18[%c0_96, %c0_97] : memref<8x128xf32, #tpu.memory_space<vmem>>, vector<8x128xf32>
    tpu.vector_store %arg18[%c0_96, %c0_97], %235 {strides = array<i32>} : memref<8x128xf32, #tpu.memory_space<vmem>>, vector<8x128xf32>,
    %237 = vector.shape_cast %232 : vector<8x1xi1> to vector<8x1xi1>
    %238 = vector.broadcast %237 : vector<8x1xi1> to vector<8x128xi1>
    %239 = arith.select %238, %228, %202 : vector<8x128xi1>, vector<8x128xf32>
    %c0_98 = arith.constant 0 : index
    %c0_99 = arith.constant 0 : index
    %240 = vector.load %arg19[%c0_98, %c0_99] : memref<8x128xf32, #tpu.memory_space<vmem>>, vector<8x128xf32>
    tpu.vector_store %arg19[%c0_98, %c0_99], %239 {strides = array<i32>} : memref<8x128xf32, #tpu.memory_space<vmem>>, vector<8x128xf32>,
    %cst_100 = arith.constant 0.000000e+00 : f32
    %241 = vector.shape_cast %232 : vector<8x1xi1> to vector<8x1xi1>
    %242 = vector.broadcast %241 : vector<8x1xi1> to vector<8x128xi1>
    %243 = vector.broadcast %cst_100 : f32 to vector<8x128xf32>
    %244 = arith.select %242, %230, %243 : vector<8x128xi1>, vector<8x128xf32>
    %c32_101 = arith.constant 32 : index
    %c0_102 = arith.constant 0 : index
    %245 = vector.load %arg17[%c32_101, %c0_102] : memref<64x128xf32, #tpu.memory_space<vmem>>, vector<8x128xf32>
    tpu.vector_store %arg17[%c32_101, %c0_102], %244 {strides = array<i32>} : memref<64x128xf32, #tpu.memory_space<vmem>>, vector<8x128xf32>,
    %c0_103 = arith.constant 0 : index
    %c0_104 = arith.constant 0 : index
    %246 = vector.load %arg18[%c0_103, %c0_104] : memref<8x128xf32, #tpu.memory_space<vmem>>, vector<8x128xf32>
    %c0_105 = arith.constant 0 : index
    %c0_106 = arith.constant 0 : index
    %247 = vector.load %arg19[%c0_105, %c0_106] : memref<8x128xf32, #tpu.memory_space<vmem>>, vector<8x128xf32>
    %c40 = arith.constant 40 : index
    %c0_107 = arith.constant 0 : index
    %248 = vector.load %arg16[%c40, %c0_107] : memref<64x512xf32, #tpu.memory_space<vmem>>, vector<8x512xf32>
    %cst_108 = arith.constant dense<0.000000e+00> : vector<8x512xf32>
    %249 = tpu.matmul %246, %20, %cst_108 {dimension_numbers = #tpu.dot_dimension_numbers<[1], [0], [0], [1], [0, 0, 1, 1], [], []>} : vector<8x128xf32>, vector<128x512xf32>, vector<8x512xf32> -> vector<8x512xf32>
    %250 = arith.addf %248, %249 : vector<8x512xf32>
    %251 = vector.extract_strided_slice %250 {offsets = [0, 0], sizes = [8, 128], strides = [1, 1]} : vector<8x512xf32> to vector<8x128xf32>
    %252 = arith.negf %251 : vector<8x128xf32>
    %253 = math.exp %252 : vector<8x128xf32>
    %cst_109 = arith.constant 1.000000e+00 : f32
    %254 = vector.broadcast %cst_109 : f32 to vector<8x128xf32>
    %255 = arith.addf %254, %253 : vector<8x128xf32>
    %256 = arith.divf %254, %255 : vector<8x128xf32>
    %257 = vector.extract_strided_slice %250 {offsets = [0, 128], sizes = [8, 128], strides = [1, 1]} : vector<8x512xf32> to vector<8x128xf32>
    %258 = arith.negf %257 : vector<8x128xf32>
    %259 = math.exp %258 : vector<8x128xf32>
    %cst_110 = arith.constant 1.000000e+00 : f32
    %260 = vector.broadcast %cst_110 : f32 to vector<8x128xf32>
    %261 = arith.addf %260, %259 : vector<8x128xf32>
    %262 = arith.divf %260, %261 : vector<8x128xf32>
    %263 = vector.extract_strided_slice %250 {offsets = [0, 256], sizes = [8, 128], strides = [1, 1]} : vector<8x512xf32> to vector<8x128xf32>
    %264 = math.tanh %263 : vector<8x128xf32>
    %265 = vector.extract_strided_slice %250 {offsets = [0, 384], sizes = [8, 128], strides = [1, 1]} : vector<8x512xf32> to vector<8x128xf32>
    %266 = arith.negf %265 : vector<8x128xf32>
    %267 = math.exp %266 : vector<8x128xf32>
    %cst_111 = arith.constant 1.000000e+00 : f32
    %268 = vector.broadcast %cst_111 : f32 to vector<8x128xf32>
    %269 = arith.addf %268, %267 : vector<8x128xf32>
    %270 = arith.divf %268, %269 : vector<8x128xf32>
    %271 = arith.mulf %262, %247 : vector<8x128xf32>
    %272 = arith.mulf %256, %264 : vector<8x128xf32>
    %273 = arith.addf %271, %272 : vector<8x128xf32>
    %274 = math.tanh %273 : vector<8x128xf32>
    %275 = arith.mulf %270, %274 : vector<8x128xf32>
    %c5_i32 = arith.constant 5 : i32
    %276 = vector.broadcast %c5_i32 : i32 to vector<8x1xi32>
    %277 = arith.cmpi sgt, %0, %276 : vector<8x1xi32>
    %278 = vector.shape_cast %277 : vector<8x1xi1> to vector<8x1xi1>
    %279 = vector.broadcast %278 : vector<8x1xi1> to vector<8x128xi1>
    %280 = arith.select %279, %275, %246 : vector<8x128xi1>, vector<8x128xf32>
    %c0_112 = arith.constant 0 : index
    %c0_113 = arith.constant 0 : index
    %281 = vector.load %arg18[%c0_112, %c0_113] : memref<8x128xf32, #tpu.memory_space<vmem>>, vector<8x128xf32>
    tpu.vector_store %arg18[%c0_112, %c0_113], %280 {strides = array<i32>} : memref<8x128xf32, #tpu.memory_space<vmem>>, vector<8x128xf32>,
    %282 = vector.shape_cast %277 : vector<8x1xi1> to vector<8x1xi1>
    %283 = vector.broadcast %282 : vector<8x1xi1> to vector<8x128xi1>
    %284 = arith.select %283, %273, %247 : vector<8x128xi1>, vector<8x128xf32>
    %c0_114 = arith.constant 0 : index
    %c0_115 = arith.constant 0 : index
    %285 = vector.load %arg19[%c0_114, %c0_115] : memref<8x128xf32, #tpu.memory_space<vmem>>, vector<8x128xf32>
    tpu.vector_store %arg19[%c0_114, %c0_115], %284 {strides = array<i32>} : memref<8x128xf32, #tpu.memory_space<vmem>>, vector<8x128xf32>,
    %cst_116 = arith.constant 0.000000e+00 : f32
    %286 = vector.shape_cast %277 : vector<8x1xi1> to vector<8x1xi1>
    %287 = vector.broadcast %286 : vector<8x1xi1> to vector<8x128xi1>
    %288 = vector.broadcast %cst_116 : f32 to vector<8x128xf32>
    %289 = arith.select %287, %275, %288 : vector<8x128xi1>, vector<8x128xf32>
    %c40_117 = arith.constant 40 : index
    %c0_118 = arith.constant 0 : index
    %290 = vector.load %arg17[%c40_117, %c0_118] : memref<64x128xf32, #tpu.memory_space<vmem>>, vector<8x128xf32>
    tpu.vector_store %arg17[%c40_117, %c0_118], %289 {strides = array<i32>} : memref<64x128xf32, #tpu.memory_space<vmem>>, vector<8x128xf32>,
    %c0_119 = arith.constant 0 : index
    %c0_120 = arith.constant 0 : index
    %291 = vector.load %arg18[%c0_119, %c0_120] : memref<8x128xf32, #tpu.memory_space<vmem>>, vector<8x128xf32>
    %c0_121 = arith.constant 0 : index
    %c0_122 = arith.constant 0 : index
    %292 = vector.load %arg19[%c0_121, %c0_122] : memref<8x128xf32, #tpu.memory_space<vmem>>, vector<8x128xf32>
    %c48 = arith.constant 48 : index
    %c0_123 = arith.constant 0 : index
    %293 = vector.load %arg16[%c48, %c0_123] : memref<64x512xf32, #tpu.memory_space<vmem>>, vector<8x512xf32>
    %cst_124 = arith.constant dense<0.000000e+00> : vector<8x512xf32>
    %294 = tpu.matmul %291, %20, %cst_124 {dimension_numbers = #tpu.dot_dimension_numbers<[1], [0], [0], [1], [0, 0, 1, 1], [], []>} : vector<8x128xf32>, vector<128x512xf32>, vector<8x512xf32> -> vector<8x512xf32>
    %295 = arith.addf %293, %294 : vector<8x512xf32>
    %296 = vector.extract_strided_slice %295 {offsets = [0, 0], sizes = [8, 128], strides = [1, 1]} : vector<8x512xf32> to vector<8x128xf32>
    %297 = arith.negf %296 : vector<8x128xf32>
    %298 = math.exp %297 : vector<8x128xf32>
    %cst_125 = arith.constant 1.000000e+00 : f32
    %299 = vector.broadcast %cst_125 : f32 to vector<8x128xf32>
    %300 = arith.addf %299, %298 : vector<8x128xf32>
    %301 = arith.divf %299, %300 : vector<8x128xf32>
    %302 = vector.extract_strided_slice %295 {offsets = [0, 128], sizes = [8, 128], strides = [1, 1]} : vector<8x512xf32> to vector<8x128xf32>
    %303 = arith.negf %302 : vector<8x128xf32>
    %304 = math.exp %303 : vector<8x128xf32>
    %cst_126 = arith.constant 1.000000e+00 : f32
    %305 = vector.broadcast %cst_126 : f32 to vector<8x128xf32>
    %306 = arith.addf %305, %304 : vector<8x128xf32>
    %307 = arith.divf %305, %306 : vector<8x128xf32>
    %308 = vector.extract_strided_slice %295 {offsets = [0, 256], sizes = [8, 128], strides = [1, 1]} : vector<8x512xf32> to vector<8x128xf32>
    %309 = math.tanh %308 : vector<8x128xf32>
    %310 = vector.extract_strided_slice %295 {offsets = [0, 384], sizes = [8, 128], strides = [1, 1]} : vector<8x512xf32> to vector<8x128xf32>
    %311 = arith.negf %310 : vector<8x128xf32>
    %312 = math.exp %311 : vector<8x128xf32>
    %cst_127 = arith.constant 1.000000e+00 : f32
    %313 = vector.broadcast %cst_127 : f32 to vector<8x128xf32>
    %314 = arith.addf %313, %312 : vector<8x128xf32>
    %315 = arith.divf %313, %314 : vector<8x128xf32>
    %316 = arith.mulf %307, %292 : vector<8x128xf32>
    %317 = arith.mulf %301, %309 : vector<8x128xf32>
    %318 = arith.addf %316, %317 : vector<8x128xf32>
    %319 = math.tanh %318 : vector<8x128xf32>
    %320 = arith.mulf %315, %319 : vector<8x128xf32>
    %c6_i32 = arith.constant 6 : i32
    %321 = vector.broadcast %c6_i32 : i32 to vector<8x1xi32>
    %322 = arith.cmpi sgt, %0, %321 : vector<8x1xi32>
    %323 = vector.shape_cast %322 : vector<8x1xi1> to vector<8x1xi1>
    %324 = vector.broadcast %323 : vector<8x1xi1> to vector<8x128xi1>
    %325 = arith.select %324, %320, %291 : vector<8x128xi1>, vector<8x128xf32>
    %c0_128 = arith.constant 0 : index
    %c0_129 = arith.constant 0 : index
    %326 = vector.load %arg18[%c0_128, %c0_129] : memref<8x128xf32, #tpu.memory_space<vmem>>, vector<8x128xf32>
    tpu.vector_store %arg18[%c0_128, %c0_129], %325 {strides = array<i32>} : memref<8x128xf32, #tpu.memory_space<vmem>>, vector<8x128xf32>,
    %327 = vector.shape_cast %322 : vector<8x1xi1> to vector<8x1xi1>
    %328 = vector.broadcast %327 : vector<8x1xi1> to vector<8x128xi1>
    %329 = arith.select %328, %318, %292 : vector<8x128xi1>, vector<8x128xf32>
    %c0_130 = arith.constant 0 : index
    %c0_131 = arith.constant 0 : index
    %330 = vector.load %arg19[%c0_130, %c0_131] : memref<8x128xf32, #tpu.memory_space<vmem>>, vector<8x128xf32>
    tpu.vector_store %arg19[%c0_130, %c0_131], %329 {strides = array<i32>} : memref<8x128xf32, #tpu.memory_space<vmem>>, vector<8x128xf32>,
    %cst_132 = arith.constant 0.000000e+00 : f32
    %331 = vector.shape_cast %322 : vector<8x1xi1> to vector<8x1xi1>
    %332 = vector.broadcast %331 : vector<8x1xi1> to vector<8x128xi1>
    %333 = vector.broadcast %cst_132 : f32 to vector<8x128xf32>
    %334 = arith.select %332, %320, %333 : vector<8x128xi1>, vector<8x128xf32>
    %c48_133 = arith.constant 48 : index
    %c0_134 = arith.constant 0 : index
    %335 = vector.load %arg17[%c48_133, %c0_134] : memref<64x128xf32, #tpu.memory_space<vmem>>, vector<8x128xf32>
    tpu.vector_store %arg17[%c48_133, %c0_134], %334 {strides = array<i32>} : memref<64x128xf32, #tpu.memory_space<vmem>>, vector<8x128xf32>,
    %c0_135 = arith.constant 0 : index
    %c0_136 = arith.constant 0 : index
    %336 = vector.load %arg18[%c0_135, %c0_136] : memref<8x128xf32, #tpu.memory_space<vmem>>, vector<8x128xf32>
    %c0_137 = arith.constant 0 : index
    %c0_138 = arith.constant 0 : index
    %337 = vector.load %arg19[%c0_137, %c0_138] : memref<8x128xf32, #tpu.memory_space<vmem>>, vector<8x128xf32>
    %c56 = arith.constant 56 : index
    %c0_139 = arith.constant 0 : index
    %338 = vector.load %arg16[%c56, %c0_139] : memref<64x512xf32, #tpu.memory_space<vmem>>, vector<8x512xf32>
    %cst_140 = arith.constant dense<0.000000e+00> : vector<8x512xf32>
    %339 = tpu.matmul %336, %20, %cst_140 {dimension_numbers = #tpu.dot_dimension_numbers<[1], [0], [0], [1], [0, 0, 1, 1], [], []>} : vector<8x128xf32>, vector<128x512xf32>, vector<8x512xf32> -> vector<8x512xf32>
    %340 = arith.addf %338, %339 : vector<8x512xf32>
    %341 = vector.extract_strided_slice %340 {offsets = [0, 0], sizes = [8, 128], strides = [1, 1]} : vector<8x512xf32> to vector<8x128xf32>
    %342 = arith.negf %341 : vector<8x128xf32>
    %343 = math.exp %342 : vector<8x128xf32>
    %cst_141 = arith.constant 1.000000e+00 : f32
    %344 = vector.broadcast %cst_141 : f32 to vector<8x128xf32>
    %345 = arith.addf %344, %343 : vector<8x128xf32>
    %346 = arith.divf %344, %345 : vector<8x128xf32>
    %347 = vector.extract_strided_slice %340 {offsets = [0, 128], sizes = [8, 128], strides = [1, 1]} : vector<8x512xf32> to vector<8x128xf32>
    %348 = arith.negf %347 : vector<8x128xf32>
    %349 = math.exp %348 : vector<8x128xf32>
    %cst_142 = arith.constant 1.000000e+00 : f32
    %350 = vector.broadcast %cst_142 : f32 to vector<8x128xf32>
    %351 = arith.addf %350, %349 : vector<8x128xf32>
    %352 = arith.divf %350, %351 : vector<8x128xf32>
    %353 = vector.extract_strided_slice %340 {offsets = [0, 256], sizes = [8, 128], strides = [1, 1]} : vector<8x512xf32> to vector<8x128xf32>
    %354 = math.tanh %353 : vector<8x128xf32>
    %355 = vector.extract_strided_slice %340 {offsets = [0, 384], sizes = [8, 128], strides = [1, 1]} : vector<8x512xf32> to vector<8x128xf32>
    %356 = arith.negf %355 : vector<8x128xf32>
    %357 = math.exp %356 : vector<8x128xf32>
    %cst_143 = arith.constant 1.000000e+00 : f32
    %358 = vector.broadcast %cst_143 : f32 to vector<8x128xf32>
    %359 = arith.addf %358, %357 : vector<8x128xf32>
    %360 = arith.divf %358, %359 : vector<8x128xf32>
    %361 = arith.mulf %352, %337 : vector<8x128xf32>
    %362 = arith.mulf %346, %354 : vector<8x128xf32>
    %363 = arith.addf %361, %362 : vector<8x128xf32>
    %364 = math.tanh %363 : vector<8x128xf32>
    %365 = arith.mulf %360, %364 : vector<8x128xf32>
    %c7_i32 = arith.constant 7 : i32
    %366 = vector.broadcast %c7_i32 : i32 to vector<8x1xi32>
    %367 = arith.cmpi sgt, %0, %366 : vector<8x1xi32>
    %368 = vector.shape_cast %367 : vector<8x1xi1> to vector<8x1xi1>
    %369 = vector.broadcast %368 : vector<8x1xi1> to vector<8x128xi1>
    %370 = arith.select %369, %365, %336 : vector<8x128xi1>, vector<8x128xf32>
    %c0_144 = arith.constant 0 : index
    %c0_145 = arith.constant 0 : index
    %371 = vector.load %arg18[%c0_144, %c0_145] : memref<8x128xf32, #tpu.memory_space<vmem>>, vector<8x128xf32>
    tpu.vector_store %arg18[%c0_144, %c0_145], %370 {strides = array<i32>} : memref<8x128xf32, #tpu.memory_space<vmem>>, vector<8x128xf32>,
    %372 = vector.shape_cast %367 : vector<8x1xi1> to vector<8x1xi1>
    %373 = vector.broadcast %372 : vector<8x1xi1> to vector<8x128xi1>
    %374 = arith.select %373, %363, %337 : vector<8x128xi1>, vector<8x128xf32>
    %c0_146 = arith.constant 0 : index
    %c0_147 = arith.constant 0 : index
    %375 = vector.load %arg19[%c0_146, %c0_147] : memref<8x128xf32, #tpu.memory_space<vmem>>, vector<8x128xf32>
    tpu.vector_store %arg19[%c0_146, %c0_147], %374 {strides = array<i32>} : memref<8x128xf32, #tpu.memory_space<vmem>>, vector<8x128xf32>,
    %cst_148 = arith.constant 0.000000e+00 : f32
    %376 = vector.shape_cast %367 : vector<8x1xi1> to vector<8x1xi1>
    %377 = vector.broadcast %376 : vector<8x1xi1> to vector<8x128xi1>
    %378 = vector.broadcast %cst_148 : f32 to vector<8x128xf32>
    %379 = arith.select %377, %365, %378 : vector<8x128xi1>, vector<8x128xf32>
    %c56_149 = arith.constant 56 : index
    %c0_150 = arith.constant 0 : index
    %380 = vector.load %arg17[%c56_149, %c0_150] : memref<64x128xf32, #tpu.memory_space<vmem>>, vector<8x128xf32>
    tpu.vector_store %arg17[%c56_149, %c0_150], %379 {strides = array<i32>} : memref<64x128xf32, #tpu.memory_space<vmem>>, vector<8x128xf32>,
    %c0_151 = arith.constant 0 : index
    %c0_152 = arith.constant 0 : index
    %381 = vector.load %arg18[%c0_151, %c0_152] : memref<8x128xf32, #tpu.memory_space<vmem>>, vector<8x128xf32>
    %c0_153 = arith.constant 0 : index
    %c0_154 = arith.constant 0 : index
    %c0_155 = arith.constant 0 : index
    %382 = vector.load %arg14[%c0_153, %c0_154, %c0_155] : memref<2x8x128xf32, #tpu.memory_space<vmem>>, vector<1x8x128xf32>
    %383 = vector.shape_cast %382 : vector<1x8x128xf32> to vector<8x128xf32>
    %384 = vector.shape_cast %381 : vector<8x128xf32> to vector<1x8x128xf32>
    tpu.vector_store %arg14[%c0_153, %c0_154, %c0_155], %384 {strides = array<i32>} : memref<2x8x128xf32, #tpu.memory_space<vmem>>, vector<1x8x128xf32>,
    %c0_156 = arith.constant 0 : index
    %c0_157 = arith.constant 0 : index
    %385 = vector.load %arg19[%c0_156, %c0_157] : memref<8x128xf32, #tpu.memory_space<vmem>>, vector<8x128xf32>
    %c0_158 = arith.constant 0 : index
    %c0_159 = arith.constant 0 : index
    %c0_160 = arith.constant 0 : index
    %386 = vector.load %arg15[%c0_158, %c0_159, %c0_160] : memref<2x8x128xf32, #tpu.memory_space<vmem>>, vector<1x8x128xf32>
    %387 = vector.shape_cast %386 : vector<1x8x128xf32> to vector<8x128xf32>
    %388 = vector.shape_cast %385 : vector<8x128xf32> to vector<1x8x128xf32>
    tpu.vector_store %arg15[%c0_158, %c0_159, %c0_160], %388 {strides = array<i32>} : memref<2x8x128xf32, #tpu.memory_space<vmem>>, vector<1x8x128xf32>,
    %c0_161 = arith.constant 0 : index
    %c0_162 = arith.constant 0 : index
    %389 = vector.load %arg17[%c0_161, %c0_162] : memref<64x128xf32, #tpu.memory_space<vmem>>, vector<64x128xf32>
    %c0_163 = arith.constant 0 : index
    %c0_164 = arith.constant 0 : index
    %390 = vector.load %arg6[%c0_163, %c0_164] : memref<128x512xf32, #tpu.memory_space<vmem>>, vector<128x512xf32>
    %cst_165 = arith.constant dense<0.000000e+00> : vector<64x512xf32>
    %391 = tpu.matmul %389, %390, %cst_165 {dimension_numbers = #tpu.dot_dimension_numbers<[1], [0], [0], [1], [0, 0, 1, 1], [], []>} : vector<64x128xf32>, vector<128x512xf32>, vector<64x512xf32> -> vector<64x512xf32>
    %c0_166 = arith.constant 0 : index
    %c0_167 = arith.constant 0 : index
    %392 = vector.load %arg8[%c0_166, %c0_167] : memref<1x512xf32, #tpu.memory_space<vmem>>, vector<1x512xf32>
    %393 = vector.broadcast %392 : vector<1x512xf32> to vector<64x512xf32>
    %394 = arith.addf %391, %393 : vector<64x512xf32>
    %c0_168 = arith.constant 0 : index
    %c0_169 = arith.constant 0 : index
    %395 = vector.load %arg16[%c0_168, %c0_169] : memref<64x512xf32, #tpu.memory_space<vmem>>, vector<64x512xf32>
    tpu.vector_store %arg16[%c0_168, %c0_169], %394 {strides = array<i32>} : memref<64x512xf32, #tpu.memory_space<vmem>>, vector<64x512xf32>,
    %c1 = arith.constant 1 : index
    %c0_170 = arith.constant 0 : index
    %c0_171 = arith.constant 0 : index
    %396 = vector.load %arg11[%c1, %c0_170, %c0_171] : memref<2x8x128xf32, #tpu.memory_space<vmem>>, vector<1x8x128xf32>
    %397 = vector.shape_cast %396 : vector<1x8x128xf32> to vector<8x128xf32>
    %c0_172 = arith.constant 0 : index
    %c0_173 = arith.constant 0 : index
    %398 = vector.load %arg18[%c0_172, %c0_173] : memref<8x128xf32, #tpu.memory_space<vmem>>, vector<8x128xf32>
    tpu.vector_store %arg18[%c0_172, %c0_173], %397 {strides = array<i32>} : memref<8x128xf32, #tpu.memory_space<vmem>>, vector<8x128xf32>,
    %c1_174 = arith.constant 1 : index
    %c0_175 = arith.constant 0 : index
    %c0_176 = arith.constant 0 : index
    %399 = vector.load %arg12[%c1_174, %c0_175, %c0_176] : memref<2x8x128xf32, #tpu.memory_space<vmem>>, vector<1x8x128xf32>
    %400 = vector.shape_cast %399 : vector<1x8x128xf32> to vector<8x128xf32>
    %c0_177 = arith.constant 0 : index
    %c0_178 = arith.constant 0 : index
    %401 = vector.load %arg19[%c0_177, %c0_178] : memref<8x128xf32, #tpu.memory_space<vmem>>, vector<8x128xf32>
    tpu.vector_store %arg19[%c0_177, %c0_178], %400 {strides = array<i32>} : memref<8x128xf32, #tpu.memory_space<vmem>>, vector<8x128xf32>,
    %c0_179 = arith.constant 0 : index
    %c0_180 = arith.constant 0 : index
    %402 = vector.load %arg7[%c0_179, %c0_180] : memref<128x512xf32, #tpu.memory_space<vmem>>, vector<128x512xf32>
    %c0_181 = arith.constant 0 : index
    %c0_182 = arith.constant 0 : index
    %403 = vector.load %arg18[%c0_181, %c0_182] : memref<8x128xf32, #tpu.memory_space<vmem>>, vector<8x128xf32>
    %c0_183 = arith.constant 0 : index
    %c0_184 = arith.constant 0 : index
    %404 = vector.load %arg19[%c0_183, %c0_184] : memref<8x128xf32, #tpu.memory_space<vmem>>, vector<8x128xf32>
    %c0_185 = arith.constant 0 : index
    %c0_186 = arith.constant 0 : index
    %405 = vector.load %arg16[%c0_185, %c0_186] : memref<64x512xf32, #tpu.memory_space<vmem>>, vector<8x512xf32>
    %cst_187 = arith.constant dense<0.000000e+00> : vector<8x512xf32>
    %406 = tpu.matmul %403, %402, %cst_187 {dimension_numbers = #tpu.dot_dimension_numbers<[1], [0], [0], [1], [0, 0, 1, 1], [], []>} : vector<8x128xf32>, vector<128x512xf32>, vector<8x512xf32> -> vector<8x512xf32>
    %407 = arith.addf %405, %406 : vector<8x512xf32>
    %408 = vector.extract_strided_slice %407 {offsets = [0, 0], sizes = [8, 128], strides = [1, 1]} : vector<8x512xf32> to vector<8x128xf32>
    %409 = arith.negf %408 : vector<8x128xf32>
    %410 = math.exp %409 : vector<8x128xf32>
    %cst_188 = arith.constant 1.000000e+00 : f32
    %411 = vector.broadcast %cst_188 : f32 to vector<8x128xf32>
    %412 = arith.addf %411, %410 : vector<8x128xf32>
    %413 = arith.divf %411, %412 : vector<8x128xf32>
    %414 = vector.extract_strided_slice %407 {offsets = [0, 128], sizes = [8, 128], strides = [1, 1]} : vector<8x512xf32> to vector<8x128xf32>
    %415 = arith.negf %414 : vector<8x128xf32>
    %416 = math.exp %415 : vector<8x128xf32>
    %cst_189 = arith.constant 1.000000e+00 : f32
    %417 = vector.broadcast %cst_189 : f32 to vector<8x128xf32>
    %418 = arith.addf %417, %416 : vector<8x128xf32>
    %419 = arith.divf %417, %418 : vector<8x128xf32>
    %420 = vector.extract_strided_slice %407 {offsets = [0, 256], sizes = [8, 128], strides = [1, 1]} : vector<8x512xf32> to vector<8x128xf32>
    %421 = math.tanh %420 : vector<8x128xf32>
    %422 = vector.extract_strided_slice %407 {offsets = [0, 384], sizes = [8, 128], strides = [1, 1]} : vector<8x512xf32> to vector<8x128xf32>
    %423 = arith.negf %422 : vector<8x128xf32>
    %424 = math.exp %423 : vector<8x128xf32>
    %cst_190 = arith.constant 1.000000e+00 : f32
    %425 = vector.broadcast %cst_190 : f32 to vector<8x128xf32>
    %426 = arith.addf %425, %424 : vector<8x128xf32>
    %427 = arith.divf %425, %426 : vector<8x128xf32>
    %428 = arith.mulf %419, %404 : vector<8x128xf32>
    %429 = arith.mulf %413, %421 : vector<8x128xf32>
    %430 = arith.addf %428, %429 : vector<8x128xf32>
    %431 = math.tanh %430 : vector<8x128xf32>
    %432 = arith.mulf %427, %431 : vector<8x128xf32>
    %c0_i32_191 = arith.constant 0 : i32
    %433 = vector.broadcast %c0_i32_191 : i32 to vector<8x1xi32>
    %434 = arith.cmpi sgt, %0, %433 : vector<8x1xi32>
    %435 = vector.shape_cast %434 : vector<8x1xi1> to vector<8x1xi1>
    %436 = vector.broadcast %435 : vector<8x1xi1> to vector<8x128xi1>
    %437 = arith.select %436, %432, %403 : vector<8x128xi1>, vector<8x128xf32>
    %c0_192 = arith.constant 0 : index
    %c0_193 = arith.constant 0 : index
    %438 = vector.load %arg18[%c0_192, %c0_193] : memref<8x128xf32, #tpu.memory_space<vmem>>, vector<8x128xf32>
    tpu.vector_store %arg18[%c0_192, %c0_193], %437 {strides = array<i32>} : memref<8x128xf32, #tpu.memory_space<vmem>>, vector<8x128xf32>,
    %439 = vector.shape_cast %434 : vector<8x1xi1> to vector<8x1xi1>
    %440 = vector.broadcast %439 : vector<8x1xi1> to vector<8x128xi1>
    %441 = arith.select %440, %430, %404 : vector<8x128xi1>, vector<8x128xf32>
    %c0_194 = arith.constant 0 : index
    %c0_195 = arith.constant 0 : index
    %442 = vector.load %arg19[%c0_194, %c0_195] : memref<8x128xf32, #tpu.memory_space<vmem>>, vector<8x128xf32>
    tpu.vector_store %arg19[%c0_194, %c0_195], %441 {strides = array<i32>} : memref<8x128xf32, #tpu.memory_space<vmem>>, vector<8x128xf32>,
    %cst_196 = arith.constant 0.000000e+00 : f32
    %443 = vector.shape_cast %434 : vector<8x1xi1> to vector<8x1xi1>
    %444 = vector.broadcast %443 : vector<8x1xi1> to vector<8x128xi1>
    %445 = vector.broadcast %cst_196 : f32 to vector<8x128xf32>
    %446 = arith.select %444, %432, %445 : vector<8x128xi1>, vector<8x128xf32>
    %c0_197 = arith.constant 0 : index
    %c0_198 = arith.constant 0 : index
    %447 = vector.load %arg17[%c0_197, %c0_198] : memref<64x128xf32, #tpu.memory_space<vmem>>, vector<8x128xf32>
    tpu.vector_store %arg17[%c0_197, %c0_198], %446 {strides = array<i32>} : memref<64x128xf32, #tpu.memory_space<vmem>>, vector<8x128xf32>,
    %c0_199 = arith.constant 0 : index
    %c0_200 = arith.constant 0 : index
    %448 = vector.load %arg18[%c0_199, %c0_200] : memref<8x128xf32, #tpu.memory_space<vmem>>, vector<8x128xf32>
    %c0_201 = arith.constant 0 : index
    %c0_202 = arith.constant 0 : index
    %449 = vector.load %arg19[%c0_201, %c0_202] : memref<8x128xf32, #tpu.memory_space<vmem>>, vector<8x128xf32>
    %c8_203 = arith.constant 8 : index
    %c0_204 = arith.constant 0 : index
    %450 = vector.load %arg16[%c8_203, %c0_204] : memref<64x512xf32, #tpu.memory_space<vmem>>, vector<8x512xf32>
    %cst_205 = arith.constant dense<0.000000e+00> : vector<8x512xf32>
    %451 = tpu.matmul %448, %402, %cst_205 {dimension_numbers = #tpu.dot_dimension_numbers<[1], [0], [0], [1], [0, 0, 1, 1], [], []>} : vector<8x128xf32>, vector<128x512xf32>, vector<8x512xf32> -> vector<8x512xf32>
    %452 = arith.addf %450, %451 : vector<8x512xf32>
    %453 = vector.extract_strided_slice %452 {offsets = [0, 0], sizes = [8, 128], strides = [1, 1]} : vector<8x512xf32> to vector<8x128xf32>
    %454 = arith.negf %453 : vector<8x128xf32>
    %455 = math.exp %454 : vector<8x128xf32>
    %cst_206 = arith.constant 1.000000e+00 : f32
    %456 = vector.broadcast %cst_206 : f32 to vector<8x128xf32>
    %457 = arith.addf %456, %455 : vector<8x128xf32>
    %458 = arith.divf %456, %457 : vector<8x128xf32>
    %459 = vector.extract_strided_slice %452 {offsets = [0, 128], sizes = [8, 128], strides = [1, 1]} : vector<8x512xf32> to vector<8x128xf32>
    %460 = arith.negf %459 : vector<8x128xf32>
    %461 = math.exp %460 : vector<8x128xf32>
    %cst_207 = arith.constant 1.000000e+00 : f32
    %462 = vector.broadcast %cst_207 : f32 to vector<8x128xf32>
    %463 = arith.addf %462, %461 : vector<8x128xf32>
    %464 = arith.divf %462, %463 : vector<8x128xf32>
    %465 = vector.extract_strided_slice %452 {offsets = [0, 256], sizes = [8, 128], strides = [1, 1]} : vector<8x512xf32> to vector<8x128xf32>
    %466 = math.tanh %465 : vector<8x128xf32>
    %467 = vector.extract_strided_slice %452 {offsets = [0, 384], sizes = [8, 128], strides = [1, 1]} : vector<8x512xf32> to vector<8x128xf32>
    %468 = arith.negf %467 : vector<8x128xf32>
    %469 = math.exp %468 : vector<8x128xf32>
    %cst_208 = arith.constant 1.000000e+00 : f32
    %470 = vector.broadcast %cst_208 : f32 to vector<8x128xf32>
    %471 = arith.addf %470, %469 : vector<8x128xf32>
    %472 = arith.divf %470, %471 : vector<8x128xf32>
    %473 = arith.mulf %464, %449 : vector<8x128xf32>
    %474 = arith.mulf %458, %466 : vector<8x128xf32>
    %475 = arith.addf %473, %474 : vector<8x128xf32>
    %476 = math.tanh %475 : vector<8x128xf32>
    %477 = arith.mulf %472, %476 : vector<8x128xf32>
    %c1_i32_209 = arith.constant 1 : i32
    %478 = vector.broadcast %c1_i32_209 : i32 to vector<8x1xi32>
    %479 = arith.cmpi sgt, %0, %478 : vector<8x1xi32>
    %480 = vector.shape_cast %479 : vector<8x1xi1> to vector<8x1xi1>
    %481 = vector.broadcast %480 : vector<8x1xi1> to vector<8x128xi1>
    %482 = arith.select %481, %477, %448 : vector<8x128xi1>, vector<8x128xf32>
    %c0_210 = arith.constant 0 : index
    %c0_211 = arith.constant 0 : index
    %483 = vector.load %arg18[%c0_210, %c0_211] : memref<8x128xf32, #tpu.memory_space<vmem>>, vector<8x128xf32>
    tpu.vector_store %arg18[%c0_210, %c0_211], %482 {strides = array<i32>} : memref<8x128xf32, #tpu.memory_space<vmem>>, vector<8x128xf32>,
    %484 = vector.shape_cast %479 : vector<8x1xi1> to vector<8x1xi1>
    %485 = vector.broadcast %484 : vector<8x1xi1> to vector<8x128xi1>
    %486 = arith.select %485, %475, %449 : vector<8x128xi1>, vector<8x128xf32>
    %c0_212 = arith.constant 0 : index
    %c0_213 = arith.constant 0 : index
    %487 = vector.load %arg19[%c0_212, %c0_213] : memref<8x128xf32, #tpu.memory_space<vmem>>, vector<8x128xf32>
    tpu.vector_store %arg19[%c0_212, %c0_213], %486 {strides = array<i32>} : memref<8x128xf32, #tpu.memory_space<vmem>>, vector<8x128xf32>,
    %cst_214 = arith.constant 0.000000e+00 : f32
    %488 = vector.shape_cast %479 : vector<8x1xi1> to vector<8x1xi1>
    %489 = vector.broadcast %488 : vector<8x1xi1> to vector<8x128xi1>
    %490 = vector.broadcast %cst_214 : f32 to vector<8x128xf32>
    %491 = arith.select %489, %477, %490 : vector<8x128xi1>, vector<8x128xf32>
    %c8_215 = arith.constant 8 : index
    %c0_216 = arith.constant 0 : index
    %492 = vector.load %arg17[%c8_215, %c0_216] : memref<64x128xf32, #tpu.memory_space<vmem>>, vector<8x128xf32>
    tpu.vector_store %arg17[%c8_215, %c0_216], %491 {strides = array<i32>} : memref<64x128xf32, #tpu.memory_space<vmem>>, vector<8x128xf32>,
    %c0_217 = arith.constant 0 : index
    %c0_218 = arith.constant 0 : index
    %493 = vector.load %arg18[%c0_217, %c0_218] : memref<8x128xf32, #tpu.memory_space<vmem>>, vector<8x128xf32>
    %c0_219 = arith.constant 0 : index
    %c0_220 = arith.constant 0 : index
    %494 = vector.load %arg19[%c0_219, %c0_220] : memref<8x128xf32, #tpu.memory_space<vmem>>, vector<8x128xf32>
    %c16_221 = arith.constant 16 : index
    %c0_222 = arith.constant 0 : index
    %495 = vector.load %arg16[%c16_221, %c0_222] : memref<64x512xf32, #tpu.memory_space<vmem>>, vector<8x512xf32>
    %cst_223 = arith.constant dense<0.000000e+00> : vector<8x512xf32>
    %496 = tpu.matmul %493, %402, %cst_223 {dimension_numbers = #tpu.dot_dimension_numbers<[1], [0], [0], [1], [0, 0, 1, 1], [], []>} : vector<8x128xf32>, vector<128x512xf32>, vector<8x512xf32> -> vector<8x512xf32>
    %497 = arith.addf %495, %496 : vector<8x512xf32>
    %498 = vector.extract_strided_slice %497 {offsets = [0, 0], sizes = [8, 128], strides = [1, 1]} : vector<8x512xf32> to vector<8x128xf32>
    %499 = arith.negf %498 : vector<8x128xf32>
    %500 = math.exp %499 : vector<8x128xf32>
    %cst_224 = arith.constant 1.000000e+00 : f32
    %501 = vector.broadcast %cst_224 : f32 to vector<8x128xf32>
    %502 = arith.addf %501, %500 : vector<8x128xf32>
    %503 = arith.divf %501, %502 : vector<8x128xf32>
    %504 = vector.extract_strided_slice %497 {offsets = [0, 128], sizes = [8, 128], strides = [1, 1]} : vector<8x512xf32> to vector<8x128xf32>
    %505 = arith.negf %504 : vector<8x128xf32>
    %506 = math.exp %505 : vector<8x128xf32>
    %cst_225 = arith.constant 1.000000e+00 : f32
    %507 = vector.broadcast %cst_225 : f32 to vector<8x128xf32>
    %508 = arith.addf %507, %506 : vector<8x128xf32>
    %509 = arith.divf %507, %508 : vector<8x128xf32>
    %510 = vector.extract_strided_slice %497 {offsets = [0, 256], sizes = [8, 128], strides = [1, 1]} : vector<8x512xf32> to vector<8x128xf32>
    %511 = math.tanh %510 : vector<8x128xf32>
    %512 = vector.extract_strided_slice %497 {offsets = [0, 384], sizes = [8, 128], strides = [1, 1]} : vector<8x512xf32> to vector<8x128xf32>
    %513 = arith.negf %512 : vector<8x128xf32>
    %514 = math.exp %513 : vector<8x128xf32>
    %cst_226 = arith.constant 1.000000e+00 : f32
    %515 = vector.broadcast %cst_226 : f32 to vector<8x128xf32>
    %516 = arith.addf %515, %514 : vector<8x128xf32>
    %517 = arith.divf %515, %516 : vector<8x128xf32>
    %518 = arith.mulf %509, %494 : vector<8x128xf32>
    %519 = arith.mulf %503, %511 : vector<8x128xf32>
    %520 = arith.addf %518, %519 : vector<8x128xf32>
    %521 = math.tanh %520 : vector<8x128xf32>
    %522 = arith.mulf %517, %521 : vector<8x128xf32>
    %c2_i32_227 = arith.constant 2 : i32
    %523 = vector.broadcast %c2_i32_227 : i32 to vector<8x1xi32>
    %524 = arith.cmpi sgt, %0, %523 : vector<8x1xi32>
    %525 = vector.shape_cast %524 : vector<8x1xi1> to vector<8x1xi1>
    %526 = vector.broadcast %525 : vector<8x1xi1> to vector<8x128xi1>
    %527 = arith.select %526, %522, %493 : vector<8x128xi1>, vector<8x128xf32>
    %c0_228 = arith.constant 0 : index
    %c0_229 = arith.constant 0 : index
    %528 = vector.load %arg18[%c0_228, %c0_229] : memref<8x128xf32, #tpu.memory_space<vmem>>, vector<8x128xf32>
    tpu.vector_store %arg18[%c0_228, %c0_229], %527 {strides = array<i32>} : memref<8x128xf32, #tpu.memory_space<vmem>>, vector<8x128xf32>,
    %529 = vector.shape_cast %524 : vector<8x1xi1> to vector<8x1xi1>
    %530 = vector.broadcast %529 : vector<8x1xi1> to vector<8x128xi1>
    %531 = arith.select %530, %520, %494 : vector<8x128xi1>, vector<8x128xf32>
    %c0_230 = arith.constant 0 : index
    %c0_231 = arith.constant 0 : index
    %532 = vector.load %arg19[%c0_230, %c0_231] : memref<8x128xf32, #tpu.memory_space<vmem>>, vector<8x128xf32>
    tpu.vector_store %arg19[%c0_230, %c0_231], %531 {strides = array<i32>} : memref<8x128xf32, #tpu.memory_space<vmem>>, vector<8x128xf32>,
    %cst_232 = arith.constant 0.000000e+00 : f32
    %533 = vector.shape_cast %524 : vector<8x1xi1> to vector<8x1xi1>
    %534 = vector.broadcast %533 : vector<8x1xi1> to vector<8x128xi1>
    %535 = vector.broadcast %cst_232 : f32 to vector<8x128xf32>
    %536 = arith.select %534, %522, %535 : vector<8x128xi1>, vector<8x128xf32>
    %c16_233 = arith.constant 16 : index
    %c0_234 = arith.constant 0 : index
    %537 = vector.load %arg17[%c16_233, %c0_234] : memref<64x128xf32, #tpu.memory_space<vmem>>, vector<8x128xf32>
    tpu.vector_store %arg17[%c16_233, %c0_234], %536 {strides = array<i32>} : memref<64x128xf32, #tpu.memory_space<vmem>>, vector<8x128xf32>,
    %c0_235 = arith.constant 0 : index
    %c0_236 = arith.constant 0 : index
    %538 = vector.load %arg18[%c0_235, %c0_236] : memref<8x128xf32, #tpu.memory_space<vmem>>, vector<8x128xf32>
    %c0_237 = arith.constant 0 : index
    %c0_238 = arith.constant 0 : index
    %539 = vector.load %arg19[%c0_237, %c0_238] : memref<8x128xf32, #tpu.memory_space<vmem>>, vector<8x128xf32>
    %c24_239 = arith.constant 24 : index
    %c0_240 = arith.constant 0 : index
    %540 = vector.load %arg16[%c24_239, %c0_240] : memref<64x512xf32, #tpu.memory_space<vmem>>, vector<8x512xf32>
    %cst_241 = arith.constant dense<0.000000e+00> : vector<8x512xf32>
    %541 = tpu.matmul %538, %402, %cst_241 {dimension_numbers = #tpu.dot_dimension_numbers<[1], [0], [0], [1], [0, 0, 1, 1], [], []>} : vector<8x128xf32>, vector<128x512xf32>, vector<8x512xf32> -> vector<8x512xf32>
    %542 = arith.addf %540, %541 : vector<8x512xf32>
    %543 = vector.extract_strided_slice %542 {offsets = [0, 0], sizes = [8, 128], strides = [1, 1]} : vector<8x512xf32> to vector<8x128xf32>
    %544 = arith.negf %543 : vector<8x128xf32>
    %545 = math.exp %544 : vector<8x128xf32>
    %cst_242 = arith.constant 1.000000e+00 : f32
    %546 = vector.broadcast %cst_242 : f32 to vector<8x128xf32>
    %547 = arith.addf %546, %545 : vector<8x128xf32>
    %548 = arith.divf %546, %547 : vector<8x128xf32>
    %549 = vector.extract_strided_slice %542 {offsets = [0, 128], sizes = [8, 128], strides = [1, 1]} : vector<8x512xf32> to vector<8x128xf32>
    %550 = arith.negf %549 : vector<8x128xf32>
    %551 = math.exp %550 : vector<8x128xf32>
    %cst_243 = arith.constant 1.000000e+00 : f32
    %552 = vector.broadcast %cst_243 : f32 to vector<8x128xf32>
    %553 = arith.addf %552, %551 : vector<8x128xf32>
    %554 = arith.divf %552, %553 : vector<8x128xf32>
    %555 = vector.extract_strided_slice %542 {offsets = [0, 256], sizes = [8, 128], strides = [1, 1]} : vector<8x512xf32> to vector<8x128xf32>
    %556 = math.tanh %555 : vector<8x128xf32>
    %557 = vector.extract_strided_slice %542 {offsets = [0, 384], sizes = [8, 128], strides = [1, 1]} : vector<8x512xf32> to vector<8x128xf32>
    %558 = arith.negf %557 : vector<8x128xf32>
    %559 = math.exp %558 : vector<8x128xf32>
    %cst_244 = arith.constant 1.000000e+00 : f32
    %560 = vector.broadcast %cst_244 : f32 to vector<8x128xf32>
    %561 = arith.addf %560, %559 : vector<8x128xf32>
    %562 = arith.divf %560, %561 : vector<8x128xf32>
    %563 = arith.mulf %554, %539 : vector<8x128xf32>
    %564 = arith.mulf %548, %556 : vector<8x128xf32>
    %565 = arith.addf %563, %564 : vector<8x128xf32>
    %566 = math.tanh %565 : vector<8x128xf32>
    %567 = arith.mulf %562, %566 : vector<8x128xf32>
    %c3_i32_245 = arith.constant 3 : i32
    %568 = vector.broadcast %c3_i32_245 : i32 to vector<8x1xi32>
    %569 = arith.cmpi sgt, %0, %568 : vector<8x1xi32>
    %570 = vector.shape_cast %569 : vector<8x1xi1> to vector<8x1xi1>
    %571 = vector.broadcast %570 : vector<8x1xi1> to vector<8x128xi1>
    %572 = arith.select %571, %567, %538 : vector<8x128xi1>, vector<8x128xf32>
    %c0_246 = arith.constant 0 : index
    %c0_247 = arith.constant 0 : index
    %573 = vector.load %arg18[%c0_246, %c0_247] : memref<8x128xf32, #tpu.memory_space<vmem>>, vector<8x128xf32>
    tpu.vector_store %arg18[%c0_246, %c0_247], %572 {strides = array<i32>} : memref<8x128xf32, #tpu.memory_space<vmem>>, vector<8x128xf32>,
    %574 = vector.shape_cast %569 : vector<8x1xi1> to vector<8x1xi1>
    %575 = vector.broadcast %574 : vector<8x1xi1> to vector<8x128xi1>
    %576 = arith.select %575, %565, %539 : vector<8x128xi1>, vector<8x128xf32>
    %c0_248 = arith.constant 0 : index
    %c0_249 = arith.constant 0 : index
    %577 = vector.load %arg19[%c0_248, %c0_249] : memref<8x128xf32, #tpu.memory_space<vmem>>, vector<8x128xf32>
    tpu.vector_store %arg19[%c0_248, %c0_249], %576 {strides = array<i32>} : memref<8x128xf32, #tpu.memory_space<vmem>>, vector<8x128xf32>,
    %cst_250 = arith.constant 0.000000e+00 : f32
    %578 = vector.shape_cast %569 : vector<8x1xi1> to vector<8x1xi1>
    %579 = vector.broadcast %578 : vector<8x1xi1> to vector<8x128xi1>
    %580 = vector.broadcast %cst_250 : f32 to vector<8x128xf32>
    %581 = arith.select %579, %567, %580 : vector<8x128xi1>, vector<8x128xf32>
    %c24_251 = arith.constant 24 : index
    %c0_252 = arith.constant 0 : index
    %582 = vector.load %arg17[%c24_251, %c0_252] : memref<64x128xf32, #tpu.memory_space<vmem>>, vector<8x128xf32>
    tpu.vector_store %arg17[%c24_251, %c0_252], %581 {strides = array<i32>} : memref<64x128xf32, #tpu.memory_space<vmem>>, vector<8x128xf32>,
    %c0_253 = arith.constant 0 : index
    %c0_254 = arith.constant 0 : index
    %583 = vector.load %arg18[%c0_253, %c0_254] : memref<8x128xf32, #tpu.memory_space<vmem>>, vector<8x128xf32>
    %c0_255 = arith.constant 0 : index
    %c0_256 = arith.constant 0 : index
    %584 = vector.load %arg19[%c0_255, %c0_256] : memref<8x128xf32, #tpu.memory_space<vmem>>, vector<8x128xf32>
    %c32_257 = arith.constant 32 : index
    %c0_258 = arith.constant 0 : index
    %585 = vector.load %arg16[%c32_257, %c0_258] : memref<64x512xf32, #tpu.memory_space<vmem>>, vector<8x512xf32>
    %cst_259 = arith.constant dense<0.000000e+00> : vector<8x512xf32>
    %586 = tpu.matmul %583, %402, %cst_259 {dimension_numbers = #tpu.dot_dimension_numbers<[1], [0], [0], [1], [0, 0, 1, 1], [], []>} : vector<8x128xf32>, vector<128x512xf32>, vector<8x512xf32> -> vector<8x512xf32>
    %587 = arith.addf %585, %586 : vector<8x512xf32>
    %588 = vector.extract_strided_slice %587 {offsets = [0, 0], sizes = [8, 128], strides = [1, 1]} : vector<8x512xf32> to vector<8x128xf32>
    %589 = arith.negf %588 : vector<8x128xf32>
    %590 = math.exp %589 : vector<8x128xf32>
    %cst_260 = arith.constant 1.000000e+00 : f32
    %591 = vector.broadcast %cst_260 : f32 to vector<8x128xf32>
    %592 = arith.addf %591, %590 : vector<8x128xf32>
    %593 = arith.divf %591, %592 : vector<8x128xf32>
    %594 = vector.extract_strided_slice %587 {offsets = [0, 128], sizes = [8, 128], strides = [1, 1]} : vector<8x512xf32> to vector<8x128xf32>
    %595 = arith.negf %594 : vector<8x128xf32>
    %596 = math.exp %595 : vector<8x128xf32>
    %cst_261 = arith.constant 1.000000e+00 : f32
    %597 = vector.broadcast %cst_261 : f32 to vector<8x128xf32>
    %598 = arith.addf %597, %596 : vector<8x128xf32>
    %599 = arith.divf %597, %598 : vector<8x128xf32>
    %600 = vector.extract_strided_slice %587 {offsets = [0, 256], sizes = [8, 128], strides = [1, 1]} : vector<8x512xf32> to vector<8x128xf32>
    %601 = math.tanh %600 : vector<8x128xf32>
    %602 = vector.extract_strided_slice %587 {offsets = [0, 384], sizes = [8, 128], strides = [1, 1]} : vector<8x512xf32> to vector<8x128xf32>
    %603 = arith.negf %602 : vector<8x128xf32>
    %604 = math.exp %603 : vector<8x128xf32>
    %cst_262 = arith.constant 1.000000e+00 : f32
    %605 = vector.broadcast %cst_262 : f32 to vector<8x128xf32>
    %606 = arith.addf %605, %604 : vector<8x128xf32>
    %607 = arith.divf %605, %606 : vector<8x128xf32>
    %608 = arith.mulf %599, %584 : vector<8x128xf32>
    %609 = arith.mulf %593, %601 : vector<8x128xf32>
    %610 = arith.addf %608, %609 : vector<8x128xf32>
    %611 = math.tanh %610 : vector<8x128xf32>
    %612 = arith.mulf %607, %611 : vector<8x128xf32>
    %c4_i32_263 = arith.constant 4 : i32
    %613 = vector.broadcast %c4_i32_263 : i32 to vector<8x1xi32>
    %614 = arith.cmpi sgt, %0, %613 : vector<8x1xi32>
    %615 = vector.shape_cast %614 : vector<8x1xi1> to vector<8x1xi1>
    %616 = vector.broadcast %615 : vector<8x1xi1> to vector<8x128xi1>
    %617 = arith.select %616, %612, %583 : vector<8x128xi1>, vector<8x128xf32>
    %c0_264 = arith.constant 0 : index
    %c0_265 = arith.constant 0 : index
    %618 = vector.load %arg18[%c0_264, %c0_265] : memref<8x128xf32, #tpu.memory_space<vmem>>, vector<8x128xf32>
    tpu.vector_store %arg18[%c0_264, %c0_265], %617 {strides = array<i32>} : memref<8x128xf32, #tpu.memory_space<vmem>>, vector<8x128xf32>,
    %619 = vector.shape_cast %614 : vector<8x1xi1> to vector<8x1xi1>
    %620 = vector.broadcast %619 : vector<8x1xi1> to vector<8x128xi1>
    %621 = arith.select %620, %610, %584 : vector<8x128xi1>, vector<8x128xf32>
    %c0_266 = arith.constant 0 : index
    %c0_267 = arith.constant 0 : index
    %622 = vector.load %arg19[%c0_266, %c0_267] : memref<8x128xf32, #tpu.memory_space<vmem>>, vector<8x128xf32>
    tpu.vector_store %arg19[%c0_266, %c0_267], %621 {strides = array<i32>} : memref<8x128xf32, #tpu.memory_space<vmem>>, vector<8x128xf32>,
    %cst_268 = arith.constant 0.000000e+00 : f32
    %623 = vector.shape_cast %614 : vector<8x1xi1> to vector<8x1xi1>
    %624 = vector.broadcast %623 : vector<8x1xi1> to vector<8x128xi1>
    %625 = vector.broadcast %cst_268 : f32 to vector<8x128xf32>
    %626 = arith.select %624, %612, %625 : vector<8x128xi1>, vector<8x128xf32>
    %c32_269 = arith.constant 32 : index
    %c0_270 = arith.constant 0 : index
    %627 = vector.load %arg17[%c32_269, %c0_270] : memref<64x128xf32, #tpu.memory_space<vmem>>, vector<8x128xf32>
    tpu.vector_store %arg17[%c32_269, %c0_270], %626 {strides = array<i32>} : memref<64x128xf32, #tpu.memory_space<vmem>>, vector<8x128xf32>,
    %c0_271 = arith.constant 0 : index
    %c0_272 = arith.constant 0 : index
    %628 = vector.load %arg18[%c0_271, %c0_272] : memref<8x128xf32, #tpu.memory_space<vmem>>, vector<8x128xf32>
    %c0_273 = arith.constant 0 : index
    %c0_274 = arith.constant 0 : index
    %629 = vector.load %arg19[%c0_273, %c0_274] : memref<8x128xf32, #tpu.memory_space<vmem>>, vector<8x128xf32>
    %c40_275 = arith.constant 40 : index
    %c0_276 = arith.constant 0 : index
    %630 = vector.load %arg16[%c40_275, %c0_276] : memref<64x512xf32, #tpu.memory_space<vmem>>, vector<8x512xf32>
    %cst_277 = arith.constant dense<0.000000e+00> : vector<8x512xf32>
    %631 = tpu.matmul %628, %402, %cst_277 {dimension_numbers = #tpu.dot_dimension_numbers<[1], [0], [0], [1], [0, 0, 1, 1], [], []>} : vector<8x128xf32>, vector<128x512xf32>, vector<8x512xf32> -> vector<8x512xf32>
    %632 = arith.addf %630, %631 : vector<8x512xf32>
    %633 = vector.extract_strided_slice %632 {offsets = [0, 0], sizes = [8, 128], strides = [1, 1]} : vector<8x512xf32> to vector<8x128xf32>
    %634 = arith.negf %633 : vector<8x128xf32>
    %635 = math.exp %634 : vector<8x128xf32>
    %cst_278 = arith.constant 1.000000e+00 : f32
    %636 = vector.broadcast %cst_278 : f32 to vector<8x128xf32>
    %637 = arith.addf %636, %635 : vector<8x128xf32>
    %638 = arith.divf %636, %637 : vector<8x128xf32>
    %639 = vector.extract_strided_slice %632 {offsets = [0, 128], sizes = [8, 128], strides = [1, 1]} : vector<8x512xf32> to vector<8x128xf32>
    %640 = arith.negf %639 : vector<8x128xf32>
    %641 = math.exp %640 : vector<8x128xf32>
    %cst_279 = arith.constant 1.000000e+00 : f32
    %642 = vector.broadcast %cst_279 : f32 to vector<8x128xf32>
    %643 = arith.addf %642, %641 : vector<8x128xf32>
    %644 = arith.divf %642, %643 : vector<8x128xf32>
    %645 = vector.extract_strided_slice %632 {offsets = [0, 256], sizes = [8, 128], strides = [1, 1]} : vector<8x512xf32> to vector<8x128xf32>
    %646 = math.tanh %645 : vector<8x128xf32>
    %647 = vector.extract_strided_slice %632 {offsets = [0, 384], sizes = [8, 128], strides = [1, 1]} : vector<8x512xf32> to vector<8x128xf32>
    %648 = arith.negf %647 : vector<8x128xf32>
    %649 = math.exp %648 : vector<8x128xf32>
    %cst_280 = arith.constant 1.000000e+00 : f32
    %650 = vector.broadcast %cst_280 : f32 to vector<8x128xf32>
    %651 = arith.addf %650, %649 : vector<8x128xf32>
    %652 = arith.divf %650, %651 : vector<8x128xf32>
    %653 = arith.mulf %644, %629 : vector<8x128xf32>
    %654 = arith.mulf %638, %646 : vector<8x128xf32>
    %655 = arith.addf %653, %654 : vector<8x128xf32>
    %656 = math.tanh %655 : vector<8x128xf32>
    %657 = arith.mulf %652, %656 : vector<8x128xf32>
    %c5_i32_281 = arith.constant 5 : i32
    %658 = vector.broadcast %c5_i32_281 : i32 to vector<8x1xi32>
    %659 = arith.cmpi sgt, %0, %658 : vector<8x1xi32>
    %660 = vector.shape_cast %659 : vector<8x1xi1> to vector<8x1xi1>
    %661 = vector.broadcast %660 : vector<8x1xi1> to vector<8x128xi1>
    %662 = arith.select %661, %657, %628 : vector<8x128xi1>, vector<8x128xf32>
    %c0_282 = arith.constant 0 : index
    %c0_283 = arith.constant 0 : index
    %663 = vector.load %arg18[%c0_282, %c0_283] : memref<8x128xf32, #tpu.memory_space<vmem>>, vector<8x128xf32>
    tpu.vector_store %arg18[%c0_282, %c0_283], %662 {strides = array<i32>} : memref<8x128xf32, #tpu.memory_space<vmem>>, vector<8x128xf32>,
    %664 = vector.shape_cast %659 : vector<8x1xi1> to vector<8x1xi1>
    %665 = vector.broadcast %664 : vector<8x1xi1> to vector<8x128xi1>
    %666 = arith.select %665, %655, %629 : vector<8x128xi1>, vector<8x128xf32>
    %c0_284 = arith.constant 0 : index
    %c0_285 = arith.constant 0 : index
    %667 = vector.load %arg19[%c0_284, %c0_285] : memref<8x128xf32, #tpu.memory_space<vmem>>, vector<8x128xf32>
    tpu.vector_store %arg19[%c0_284, %c0_285], %666 {strides = array<i32>} : memref<8x128xf32, #tpu.memory_space<vmem>>, vector<8x128xf32>,
    %cst_286 = arith.constant 0.000000e+00 : f32
    %668 = vector.shape_cast %659 : vector<8x1xi1> to vector<8x1xi1>
    %669 = vector.broadcast %668 : vector<8x1xi1> to vector<8x128xi1>
    %670 = vector.broadcast %cst_286 : f32 to vector<8x128xf32>
    %671 = arith.select %669, %657, %670 : vector<8x128xi1>, vector<8x128xf32>
    %c40_287 = arith.constant 40 : index
    %c0_288 = arith.constant 0 : index
    %672 = vector.load %arg17[%c40_287, %c0_288] : memref<64x128xf32, #tpu.memory_space<vmem>>, vector<8x128xf32>
    tpu.vector_store %arg17[%c40_287, %c0_288], %671 {strides = array<i32>} : memref<64x128xf32, #tpu.memory_space<vmem>>, vector<8x128xf32>,
    %c0_289 = arith.constant 0 : index
    %c0_290 = arith.constant 0 : index
    %673 = vector.load %arg18[%c0_289, %c0_290] : memref<8x128xf32, #tpu.memory_space<vmem>>, vector<8x128xf32>
    %c0_291 = arith.constant 0 : index
    %c0_292 = arith.constant 0 : index
    %674 = vector.load %arg19[%c0_291, %c0_292] : memref<8x128xf32, #tpu.memory_space<vmem>>, vector<8x128xf32>
    %c48_293 = arith.constant 48 : index
    %c0_294 = arith.constant 0 : index
    %675 = vector.load %arg16[%c48_293, %c0_294] : memref<64x512xf32, #tpu.memory_space<vmem>>, vector<8x512xf32>
    %cst_295 = arith.constant dense<0.000000e+00> : vector<8x512xf32>
    %676 = tpu.matmul %673, %402, %cst_295 {dimension_numbers = #tpu.dot_dimension_numbers<[1], [0], [0], [1], [0, 0, 1, 1], [], []>} : vector<8x128xf32>, vector<128x512xf32>, vector<8x512xf32> -> vector<8x512xf32>
    %677 = arith.addf %675, %676 : vector<8x512xf32>
    %678 = vector.extract_strided_slice %677 {offsets = [0, 0], sizes = [8, 128], strides = [1, 1]} : vector<8x512xf32> to vector<8x128xf32>
    %679 = arith.negf %678 : vector<8x128xf32>
    %680 = math.exp %679 : vector<8x128xf32>
    %cst_296 = arith.constant 1.000000e+00 : f32
    %681 = vector.broadcast %cst_296 : f32 to vector<8x128xf32>
    %682 = arith.addf %681, %680 : vector<8x128xf32>
    %683 = arith.divf %681, %682 : vector<8x128xf32>
    %684 = vector.extract_strided_slice %677 {offsets = [0, 128], sizes = [8, 128], strides = [1, 1]} : vector<8x512xf32> to vector<8x128xf32>
    %685 = arith.negf %684 : vector<8x128xf32>
    %686 = math.exp %685 : vector<8x128xf32>
    %cst_297 = arith.constant 1.000000e+00 : f32
    %687 = vector.broadcast %cst_297 : f32 to vector<8x128xf32>
    %688 = arith.addf %687, %686 : vector<8x128xf32>
    %689 = arith.divf %687, %688 : vector<8x128xf32>
    %690 = vector.extract_strided_slice %677 {offsets = [0, 256], sizes = [8, 128], strides = [1, 1]} : vector<8x512xf32> to vector<8x128xf32>
    %691 = math.tanh %690 : vector<8x128xf32>
    %692 = vector.extract_strided_slice %677 {offsets = [0, 384], sizes = [8, 128], strides = [1, 1]} : vector<8x512xf32> to vector<8x128xf32>
    %693 = arith.negf %692 : vector<8x128xf32>
    %694 = math.exp %693 : vector<8x128xf32>
    %cst_298 = arith.constant 1.000000e+00 : f32
    %695 = vector.broadcast %cst_298 : f32 to vector<8x128xf32>
    %696 = arith.addf %695, %694 : vector<8x128xf32>
    %697 = arith.divf %695, %696 : vector<8x128xf32>
    %698 = arith.mulf %689, %674 : vector<8x128xf32>
    %699 = arith.mulf %683, %691 : vector<8x128xf32>
    %700 = arith.addf %698, %699 : vector<8x128xf32>
    %701 = math.tanh %700 : vector<8x128xf32>
    %702 = arith.mulf %697, %701 : vector<8x128xf32>
    %c6_i32_299 = arith.constant 6 : i32
    %703 = vector.broadcast %c6_i32_299 : i32 to vector<8x1xi32>
    %704 = arith.cmpi sgt, %0, %703 : vector<8x1xi32>
    %705 = vector.shape_cast %704 : vector<8x1xi1> to vector<8x1xi1>
    %706 = vector.broadcast %705 : vector<8x1xi1> to vector<8x128xi1>
    %707 = arith.select %706, %702, %673 : vector<8x128xi1>, vector<8x128xf32>
    %c0_300 = arith.constant 0 : index
    %c0_301 = arith.constant 0 : index
    %708 = vector.load %arg18[%c0_300, %c0_301] : memref<8x128xf32, #tpu.memory_space<vmem>>, vector<8x128xf32>
    tpu.vector_store %arg18[%c0_300, %c0_301], %707 {strides = array<i32>} : memref<8x128xf32, #tpu.memory_space<vmem>>, vector<8x128xf32>,
    %709 = vector.shape_cast %704 : vector<8x1xi1> to vector<8x1xi1>
    %710 = vector.broadcast %709 : vector<8x1xi1> to vector<8x128xi1>
    %711 = arith.select %710, %700, %674 : vector<8x128xi1>, vector<8x128xf32>
    %c0_302 = arith.constant 0 : index
    %c0_303 = arith.constant 0 : index
    %712 = vector.load %arg19[%c0_302, %c0_303] : memref<8x128xf32, #tpu.memory_space<vmem>>, vector<8x128xf32>
    tpu.vector_store %arg19[%c0_302, %c0_303], %711 {strides = array<i32>} : memref<8x128xf32, #tpu.memory_space<vmem>>, vector<8x128xf32>,
    %cst_304 = arith.constant 0.000000e+00 : f32
    %713 = vector.shape_cast %704 : vector<8x1xi1> to vector<8x1xi1>
    %714 = vector.broadcast %713 : vector<8x1xi1> to vector<8x128xi1>
    %715 = vector.broadcast %cst_304 : f32 to vector<8x128xf32>
    %716 = arith.select %714, %702, %715 : vector<8x128xi1>, vector<8x128xf32>
    %c48_305 = arith.constant 48 : index
    %c0_306 = arith.constant 0 : index
    %717 = vector.load %arg17[%c48_305, %c0_306] : memref<64x128xf32, #tpu.memory_space<vmem>>, vector<8x128xf32>
    tpu.vector_store %arg17[%c48_305, %c0_306], %716 {strides = array<i32>} : memref<64x128xf32, #tpu.memory_space<vmem>>, vector<8x128xf32>,
    %c0_307 = arith.constant 0 : index
    %c0_308 = arith.constant 0 : index
    %718 = vector.load %arg18[%c0_307, %c0_308] : memref<8x128xf32, #tpu.memory_space<vmem>>, vector<8x128xf32>
    %c0_309 = arith.constant 0 : index
    %c0_310 = arith.constant 0 : index
    %719 = vector.load %arg19[%c0_309, %c0_310] : memref<8x128xf32, #tpu.memory_space<vmem>>, vector<8x128xf32>
    %c56_311 = arith.constant 56 : index
    %c0_312 = arith.constant 0 : index
    %720 = vector.load %arg16[%c56_311, %c0_312] : memref<64x512xf32, #tpu.memory_space<vmem>>, vector<8x512xf32>
    %cst_313 = arith.constant dense<0.000000e+00> : vector<8x512xf32>
    %721 = tpu.matmul %718, %402, %cst_313 {dimension_numbers = #tpu.dot_dimension_numbers<[1], [0], [0], [1], [0, 0, 1, 1], [], []>} : vector<8x128xf32>, vector<128x512xf32>, vector<8x512xf32> -> vector<8x512xf32>
    %722 = arith.addf %720, %721 : vector<8x512xf32>
    %723 = vector.extract_strided_slice %722 {offsets = [0, 0], sizes = [8, 128], strides = [1, 1]} : vector<8x512xf32> to vector<8x128xf32>
    %724 = arith.negf %723 : vector<8x128xf32>
    %725 = math.exp %724 : vector<8x128xf32>
    %cst_314 = arith.constant 1.000000e+00 : f32
    %726 = vector.broadcast %cst_314 : f32 to vector<8x128xf32>
    %727 = arith.addf %726, %725 : vector<8x128xf32>
    %728 = arith.divf %726, %727 : vector<8x128xf32>
    %729 = vector.extract_strided_slice %722 {offsets = [0, 128], sizes = [8, 128], strides = [1, 1]} : vector<8x512xf32> to vector<8x128xf32>
    %730 = arith.negf %729 : vector<8x128xf32>
    %731 = math.exp %730 : vector<8x128xf32>
    %cst_315 = arith.constant 1.000000e+00 : f32
    %732 = vector.broadcast %cst_315 : f32 to vector<8x128xf32>
    %733 = arith.addf %732, %731 : vector<8x128xf32>
    %734 = arith.divf %732, %733 : vector<8x128xf32>
    %735 = vector.extract_strided_slice %722 {offsets = [0, 256], sizes = [8, 128], strides = [1, 1]} : vector<8x512xf32> to vector<8x128xf32>
    %736 = math.tanh %735 : vector<8x128xf32>
    %737 = vector.extract_strided_slice %722 {offsets = [0, 384], sizes = [8, 128], strides = [1, 1]} : vector<8x512xf32> to vector<8x128xf32>
    %738 = arith.negf %737 : vector<8x128xf32>
    %739 = math.exp %738 : vector<8x128xf32>
    %cst_316 = arith.constant 1.000000e+00 : f32
    %740 = vector.broadcast %cst_316 : f32 to vector<8x128xf32>
    %741 = arith.addf %740, %739 : vector<8x128xf32>
    %742 = arith.divf %740, %741 : vector<8x128xf32>
    %743 = arith.mulf %734, %719 : vector<8x128xf32>
    %744 = arith.mulf %728, %736 : vector<8x128xf32>
    %745 = arith.addf %743, %744 : vector<8x128xf32>
    %746 = math.tanh %745 : vector<8x128xf32>
    %747 = arith.mulf %742, %746 : vector<8x128xf32>
    %c7_i32_317 = arith.constant 7 : i32
    %748 = vector.broadcast %c7_i32_317 : i32 to vector<8x1xi32>
    %749 = arith.cmpi sgt, %0, %748 : vector<8x1xi32>
    %750 = vector.shape_cast %749 : vector<8x1xi1> to vector<8x1xi1>
    %751 = vector.broadcast %750 : vector<8x1xi1> to vector<8x128xi1>
    %752 = arith.select %751, %747, %718 : vector<8x128xi1>, vector<8x128xf32>
    %c0_318 = arith.constant 0 : index
    %c0_319 = arith.constant 0 : index
    %753 = vector.load %arg18[%c0_318, %c0_319] : memref<8x128xf32, #tpu.memory_space<vmem>>, vector<8x128xf32>
    tpu.vector_store %arg18[%c0_318, %c0_319], %752 {strides = array<i32>} : memref<8x128xf32, #tpu.memory_space<vmem>>, vector<8x128xf32>,
    %754 = vector.shape_cast %749 : vector<8x1xi1> to vector<8x1xi1>
    %755 = vector.broadcast %754 : vector<8x1xi1> to vector<8x128xi1>
    %756 = arith.select %755, %745, %719 : vector<8x128xi1>, vector<8x128xf32>
    %c0_320 = arith.constant 0 : index
    %c0_321 = arith.constant 0 : index
    %757 = vector.load %arg19[%c0_320, %c0_321] : memref<8x128xf32, #tpu.memory_space<vmem>>, vector<8x128xf32>
    tpu.vector_store %arg19[%c0_320, %c0_321], %756 {strides = array<i32>} : memref<8x128xf32, #tpu.memory_space<vmem>>, vector<8x128xf32>,
    %cst_322 = arith.constant 0.000000e+00 : f32
    %758 = vector.shape_cast %749 : vector<8x1xi1> to vector<8x1xi1>
    %759 = vector.broadcast %758 : vector<8x1xi1> to vector<8x128xi1>
    %760 = vector.broadcast %cst_322 : f32 to vector<8x128xf32>
    %761 = arith.select %759, %747, %760 : vector<8x128xi1>, vector<8x128xf32>
    %c56_323 = arith.constant 56 : index
    %c0_324 = arith.constant 0 : index
    %762 = vector.load %arg17[%c56_323, %c0_324] : memref<64x128xf32, #tpu.memory_space<vmem>>, vector<8x128xf32>
    tpu.vector_store %arg17[%c56_323, %c0_324], %761 {strides = array<i32>} : memref<64x128xf32, #tpu.memory_space<vmem>>, vector<8x128xf32>,
    %c0_325 = arith.constant 0 : index
    %c0_326 = arith.constant 0 : index
    %763 = vector.load %arg18[%c0_325, %c0_326] : memref<8x128xf32, #tpu.memory_space<vmem>>, vector<8x128xf32>
    %c1_327 = arith.constant 1 : index
    %c0_328 = arith.constant 0 : index
    %c0_329 = arith.constant 0 : index
    %764 = vector.load %arg14[%c1_327, %c0_328, %c0_329] : memref<2x8x128xf32, #tpu.memory_space<vmem>>, vector<1x8x128xf32>
    %765 = vector.shape_cast %764 : vector<1x8x128xf32> to vector<8x128xf32>
    %766 = vector.shape_cast %763 : vector<8x128xf32> to vector<1x8x128xf32>
    tpu.vector_store %arg14[%c1_327, %c0_328, %c0_329], %766 {strides = array<i32>} : memref<2x8x128xf32, #tpu.memory_space<vmem>>, vector<1x8x128xf32>,
    %c0_330 = arith.constant 0 : index
    %c0_331 = arith.constant 0 : index
    %767 = vector.load %arg19[%c0_330, %c0_331] : memref<8x128xf32, #tpu.memory_space<vmem>>, vector<8x128xf32>
    %c1_332 = arith.constant 1 : index
    %c0_333 = arith.constant 0 : index
    %c0_334 = arith.constant 0 : index
    %768 = vector.load %arg15[%c1_332, %c0_333, %c0_334] : memref<2x8x128xf32, #tpu.memory_space<vmem>>, vector<1x8x128xf32>
    %769 = vector.shape_cast %768 : vector<1x8x128xf32> to vector<8x128xf32>
    %770 = vector.shape_cast %767 : vector<8x128xf32> to vector<1x8x128xf32>
    tpu.vector_store %arg15[%c1_332, %c0_333, %c0_334], %770 {strides = array<i32>} : memref<2x8x128xf32, #tpu.memory_space<vmem>>, vector<1x8x128xf32>,
    %c0_335 = arith.constant 0 : index
    %c0_336 = arith.constant 0 : index
    %771 = vector.load %arg17[%c0_335, %c0_336] : memref<64x128xf32, #tpu.memory_space<vmem>>, vector<64x128xf32>
    %c0_337 = arith.constant 0 : index
    %c0_338 = arith.constant 0 : index
    %772 = vector.load %arg9[%c0_337, %c0_338] : memref<128x128xf32, #tpu.memory_space<vmem>>, vector<128x128xf32>
    %cst_339 = arith.constant dense<0.000000e+00> : vector<64x128xf32>
    %773 = tpu.matmul %771, %772, %cst_339 {dimension_numbers = #tpu.dot_dimension_numbers<[1], [0], [0], [1], [0, 0, 1, 1], [], []>} : vector<64x128xf32>, vector<128x128xf32>, vector<64x128xf32> -> vector<64x128xf32>
    %c0_340 = arith.constant 0 : index
    %c0_341 = arith.constant 0 : index
    %774 = vector.load %arg10[%c0_340, %c0_341] : memref<1x128xf32, #tpu.memory_space<vmem>>, vector<1x128xf32>
    %775 = vector.broadcast %774 : vector<1x128xf32> to vector<64x128xf32>
    %776 = arith.addf %773, %775 : vector<64x128xf32>
    %777 = vector.extract_strided_slice %776 {offsets = [0, 0], sizes = [8, 128], strides = [1, 1]} : vector<64x128xf32> to vector<8x128xf32>
    %c0_342 = arith.constant 0 : index
    %c0_343 = arith.constant 0 : index
    %c0_344 = arith.constant 0 : index
    %778 = vector.load %arg13[%c0_342, %c0_343, %c0_344] : memref<8x8x128xf32, #tpu.memory_space<vmem>>, vector<1x8x128xf32>
    %779 = vector.shape_cast %778 : vector<1x8x128xf32> to vector<8x128xf32>
    %780 = vector.shape_cast %777 : vector<8x128xf32> to vector<1x8x128xf32>
    tpu.vector_store %arg13[%c0_342, %c0_343, %c0_344], %780 {strides = array<i32>} : memref<8x8x128xf32, #tpu.memory_space<vmem>>, vector<1x8x128xf32>,
    %781 = vector.extract_strided_slice %776 {offsets = [8, 0], sizes = [8, 128], strides = [1, 1]} : vector<64x128xf32> to vector<8x128xf32>
    %c1_345 = arith.constant 1 : index
    %c0_346 = arith.constant 0 : index
    %c0_347 = arith.constant 0 : index
    %782 = vector.load %arg13[%c1_345, %c0_346, %c0_347] : memref<8x8x128xf32, #tpu.memory_space<vmem>>, vector<1x8x128xf32>
    %783 = vector.shape_cast %782 : vector<1x8x128xf32> to vector<8x128xf32>
    %784 = vector.shape_cast %781 : vector<8x128xf32> to vector<1x8x128xf32>
    tpu.vector_store %arg13[%c1_345, %c0_346, %c0_347], %784 {strides = array<i32>} : memref<8x8x128xf32, #tpu.memory_space<vmem>>, vector<1x8x128xf32>,
    %785 = vector.extract_strided_slice %776 {offsets = [16, 0], sizes = [8, 128], strides = [1, 1]} : vector<64x128xf32> to vector<8x128xf32>
    %c2 = arith.constant 2 : index
    %c0_348 = arith.constant 0 : index
    %c0_349 = arith.constant 0 : index
    %786 = vector.load %arg13[%c2, %c0_348, %c0_349] : memref<8x8x128xf32, #tpu.memory_space<vmem>>, vector<1x8x128xf32>
    %787 = vector.shape_cast %786 : vector<1x8x128xf32> to vector<8x128xf32>
    %788 = vector.shape_cast %785 : vector<8x128xf32> to vector<1x8x128xf32>
    tpu.vector_store %arg13[%c2, %c0_348, %c0_349], %788 {strides = array<i32>} : memref<8x8x128xf32, #tpu.memory_space<vmem>>, vector<1x8x128xf32>,
    %789 = vector.extract_strided_slice %776 {offsets = [24, 0], sizes = [8, 128], strides = [1, 1]} : vector<64x128xf32> to vector<8x128xf32>
    %c3 = arith.constant 3 : index
    %c0_350 = arith.constant 0 : index
    %c0_351 = arith.constant 0 : index
    %790 = vector.load %arg13[%c3, %c0_350, %c0_351] : memref<8x8x128xf32, #tpu.memory_space<vmem>>, vector<1x8x128xf32>
    %791 = vector.shape_cast %790 : vector<1x8x128xf32> to vector<8x128xf32>
    %792 = vector.shape_cast %789 : vector<8x128xf32> to vector<1x8x128xf32>
    tpu.vector_store %arg13[%c3, %c0_350, %c0_351], %792 {strides = array<i32>} : memref<8x8x128xf32, #tpu.memory_space<vmem>>, vector<1x8x128xf32>,
    %793 = vector.extract_strided_slice %776 {offsets = [32, 0], sizes = [8, 128], strides = [1, 1]} : vector<64x128xf32> to vector<8x128xf32>
    %c4 = arith.constant 4 : index
    %c0_352 = arith.constant 0 : index
    %c0_353 = arith.constant 0 : index
    %794 = vector.load %arg13[%c4, %c0_352, %c0_353] : memref<8x8x128xf32, #tpu.memory_space<vmem>>, vector<1x8x128xf32>
    %795 = vector.shape_cast %794 : vector<1x8x128xf32> to vector<8x128xf32>
    %796 = vector.shape_cast %793 : vector<8x128xf32> to vector<1x8x128xf32>
    tpu.vector_store %arg13[%c4, %c0_352, %c0_353], %796 {strides = array<i32>} : memref<8x8x128xf32, #tpu.memory_space<vmem>>, vector<1x8x128xf32>,
    %797 = vector.extract_strided_slice %776 {offsets = [40, 0], sizes = [8, 128], strides = [1, 1]} : vector<64x128xf32> to vector<8x128xf32>
    %c5 = arith.constant 5 : index
    %c0_354 = arith.constant 0 : index
    %c0_355 = arith.constant 0 : index
    %798 = vector.load %arg13[%c5, %c0_354, %c0_355] : memref<8x8x128xf32, #tpu.memory_space<vmem>>, vector<1x8x128xf32>
    %799 = vector.shape_cast %798 : vector<1x8x128xf32> to vector<8x128xf32>
    %800 = vector.shape_cast %797 : vector<8x128xf32> to vector<1x8x128xf32>
    tpu.vector_store %arg13[%c5, %c0_354, %c0_355], %800 {strides = array<i32>} : memref<8x8x128xf32, #tpu.memory_space<vmem>>, vector<1x8x128xf32>,
    %801 = vector.extract_strided_slice %776 {offsets = [48, 0], sizes = [8, 128], strides = [1, 1]} : vector<64x128xf32> to vector<8x128xf32>
    %c6 = arith.constant 6 : index
    %c0_356 = arith.constant 0 : index
    %c0_357 = arith.constant 0 : index
    %802 = vector.load %arg13[%c6, %c0_356, %c0_357] : memref<8x8x128xf32, #tpu.memory_space<vmem>>, vector<1x8x128xf32>
    %803 = vector.shape_cast %802 : vector<1x8x128xf32> to vector<8x128xf32>
    %804 = vector.shape_cast %801 : vector<8x128xf32> to vector<1x8x128xf32>
    tpu.vector_store %arg13[%c6, %c0_356, %c0_357], %804 {strides = array<i32>} : memref<8x8x128xf32, #tpu.memory_space<vmem>>, vector<1x8x128xf32>,
    %805 = vector.extract_strided_slice %776 {offsets = [56, 0], sizes = [8, 128], strides = [1, 1]} : vector<64x128xf32> to vector<8x128xf32>
    %c7 = arith.constant 7 : index
    %c0_358 = arith.constant 0 : index
    %c0_359 = arith.constant 0 : index
    %806 = vector.load %arg13[%c7, %c0_358, %c0_359] : memref<8x8x128xf32, #tpu.memory_space<vmem>>, vector<1x8x128xf32>
    %807 = vector.shape_cast %806 : vector<1x8x128xf32> to vector<8x128xf32>
    %808 = vector.shape_cast %805 : vector<8x128xf32> to vector<1x8x128xf32>
    tpu.vector_store %arg13[%c7, %c0_358, %c0_359], %808 {strides = array<i32>} : memref<8x8x128xf32, #tpu.memory_space<vmem>>, vector<1x8x128xf32>,
    return
  }
  func.func @transform_0(%arg0: i32) -> (i32, i32, i32) {
    %c0_i32 = arith.constant 0 : i32
    %c0_i32_0 = arith.constant 0 : i32
    %c0_i32_1 = arith.constant 0 : i32
    return %c0_i32, %arg0, %c0_i32_0 : i32, i32, i32
  }
  func.func @transform_1(%arg0: i32) -> (i32, i32) {
    %c0_i32 = arith.constant 0 : i32
    %c0_i32_0 = arith.constant 0 : i32
    return %arg0, %c0_i32 : i32, i32
  }
  func.func @transform_2(%arg0: i32) -> (i32, i32) {
    %c0_i32 = arith.constant 0 : i32
    %c0_i32_0 = arith.constant 0 : i32
    %c0_i32_1 = arith.constant 0 : i32
    return %c0_i32, %c0_i32_0 : i32, i32
  }
  func.func @transform_3(%arg0: i32) -> (i32, i32) {
    %c0_i32 = arith.constant 0 : i32
    %c0_i32_0 = arith.constant 0 : i32
    %c0_i32_1 = arith.constant 0 : i32
    return %c0_i32, %c0_i32_0 : i32, i32
  }
  func.func @transform_4(%arg0: i32) -> (i32, i32) {
    %c0_i32 = arith.constant 0 : i32
    %c0_i32_0 = arith.constant 0 : i32
    %c0_i32_1 = arith.constant 0 : i32
    return %c0_i32, %c0_i32_0 : i32, i32
  }
  func.func @transform_5(%arg0: i32) -> (i32, i32) {
    %c0_i32 = arith.constant 0 : i32
    %c0_i32_0 = arith.constant 0 : i32
    %c0_i32_1 = arith.constant 0 : i32
    return %c0_i32, %c0_i32_0 : i32, i32
  }
  func.func @transform_6(%arg0: i32) -> (i32, i32) {
    %c0_i32 = arith.constant 0 : i32
    %c0_i32_0 = arith.constant 0 : i32
    %c0_i32_1 = arith.constant 0 : i32
    return %c0_i32, %c0_i32_0 : i32, i32
  }
  func.func @transform_7(%arg0: i32) -> (i32, i32) {
    %c0_i32 = arith.constant 0 : i32
    %c0_i32_0 = arith.constant 0 : i32
    %c0_i32_1 = arith.constant 0 : i32
    return %c0_i32, %c0_i32_0 : i32, i32
  }
  func.func @transform_8(%arg0: i32) -> (i32, i32) {
    %c0_i32 = arith.constant 0 : i32
    %c0_i32_0 = arith.constant 0 : i32
    %c0_i32_1 = arith.constant 0 : i32
    return %c0_i32, %c0_i32_0 : i32, i32
  }
  func.func @transform_9(%arg0: i32) -> (i32, i32) {
    %c0_i32 = arith.constant 0 : i32
    %c0_i32_0 = arith.constant 0 : i32
    %c0_i32_1 = arith.constant 0 : i32
    return %c0_i32, %c0_i32_0 : i32, i32
  }
  func.func @transform_10(%arg0: i32) -> (i32, i32, i32) {
    %c0_i32 = arith.constant 0 : i32
    %c0_i32_0 = arith.constant 0 : i32
    %c0_i32_1 = arith.constant 0 : i32
    return %c0_i32, %arg0, %c0_i32_0 : i32, i32, i32
  }
  func.func @transform_11(%arg0: i32) -> (i32, i32, i32) {
    %c0_i32 = arith.constant 0 : i32
    %c0_i32_0 = arith.constant 0 : i32
    %c0_i32_1 = arith.constant 0 : i32
    return %c0_i32, %arg0, %c0_i32_0 : i32, i32, i32
  }
  func.func @transform_12(%arg0: i32) -> (i32, i32, i32) {
    %c0_i32 = arith.constant 0 : i32
    %c0_i32_0 = arith.constant 0 : i32
    %c0_i32_1 = arith.constant 0 : i32
    return %c0_i32, %arg0, %c0_i32_0 : i32, i32, i32
  }
  func.func @transform_13(%arg0: i32) -> (i32, i32, i32) {
    %c0_i32 = arith.constant 0 : i32
    %c0_i32_0 = arith.constant 0 : i32
    %c0_i32_1 = arith.constant 0 : i32
    return %c0_i32, %arg0, %c0_i32_0 : i32, i32, i32
  }
  func.func @transform_14(%arg0: i32) -> (i32, i32, i32) {
    %c0_i32 = arith.constant 0 : i32
    %c0_i32_0 = arith.constant 0 : i32
    %c0_i32_1 = arith.constant 0 : i32
    return %c0_i32, %arg0, %c0_i32_0 : i32, i32, i32
  }
}

</mosaic_0001>

<llo_original>
// kernel: _generator_forward.1
$region0: #{_generator_forward.1}
  #allocation0 [shape = 'u32[]', space=smem, size = 0x4, offset = 0x4, fixed_abs, tag = 'smem constant byte address 0x4 - core index']
  #allocation1 [shape = 'u32[72,128]{1,0:T(1,128)}', space=vmem, size = 0x9000, scoped, tag = 'internal scratch']
  #allocation2 [shape = 'f32[64,512]{1,0:T(8,128)}', space=vmem, size = 0x20000, scoped, tag = 'scratch operand']
  #allocation3 [shape = 'f32[64,128]{1,0:T(8,128)}', space=vmem, size = 0x8000, scoped, tag = 'scratch operand']
  #allocation4 [shape = 'f32[8,128]{1,0:T(8,128)}', space=vmem, size = 0x1000, scoped, tag = 'scratch operand']
  #allocation5 [shape = 'f32[8,128]{1,0:T(8,128)}', space=vmem, size = 0x1000, scoped, tag = 'scratch operand']
  %s0 = inlined_call_operand.vmem [shape: s32[8,8,1], index: 0, kind: input, shape index: {}]
  %s1 = inlined_call_operand.vmem [shape: s32[8,1], index: 1, kind: input, shape index: {}]
  %s2 = inlined_call_operand.vmem [shape: f32[128,512], index: 2, kind: input, shape index: {}]
  %s3 = inlined_call_operand.vmem [shape: f32[128,512], index: 3, kind: input, shape index: {}]
  %s4 = inlined_call_operand.vmem [shape: f32[1,512], index: 4, kind: input, shape index: {}]
  %s5 = inlined_call_operand.vmem [shape: f32[128,512], index: 5, kind: input, shape index: {}]
  %s6 = inlined_call_operand.vmem [shape: f32[128,512], index: 6, kind: input, shape index: {}]
  %s7 = inlined_call_operand.vmem [shape: f32[1,512], index: 7, kind: input, shape index: {}]
  %s8 = inlined_call_operand.vmem [shape: f32[128,128], index: 8, kind: input, shape index: {}]
  %s9 = inlined_call_operand.vmem [shape: f32[1,128], index: 9, kind: input, shape index: {}]
  %s10 = inlined_call_operand.vmem [shape: f32[2,8,128], index: 10, kind: input, shape index: {}, may-alias: {10,11}]
  %s11 = inlined_call_operand.vmem [shape: f32[2,8,128], index: 11, kind: input, shape index: {}, may-alias: {10,11}]
  %s12 = inlined_call_operand.vmem [shape: f32[8,8,128], index: 12, kind: output, shape index: {0}]
  %s13 = inlined_call_operand.vmem [shape: f32[2,8,128], index: 13, kind: output, shape index: {1}]
  %s14 = inlined_call_operand.vmem [shape: f32[2,8,128], index: 14, kind: output, shape index: {2}]
  %15 = xla_tuple %s12, %s13, %s14
  %s16 = sld [smem:[#allocation0]]
  $region74: #{_generator_forward.1} parent=0
    _
  %s18 = ssub.s32 1, %s16
  %s19 = scalar_select 0, %s18, %s16
  // Predicated region
  $region2: #{_generator_forward.1} parent=0 // pred_check
    _
  $region3: #{_generator_forward.1} parent=0 // pred_check_branch
    %21 = sbr.rel (0) target = $region5
  $region4: #{_generator_forward.1} parent=0 // pred_region
    _
  $region5: #{_generator_forward.1} parent=0 // pred_fallthru
    _
  // Predicated region
  $region6: #{_generator_forward.1} parent=0 // pred_check
    _
  $region7: #{_generator_forward.1} parent=0 // pred_check_branch
    %23 = sbr.rel (0) target = $region9
  $region8: #{_generator_forward.1} parent=0 // pred_region
    _
  $region9: #{_generator_forward.1} parent=0 // pred_fallthru
    _
  // Predicated region
  $region10: #{_generator_forward.1} parent=0 // pred_check
    _
  $region11: #{_generator_forward.1} parent=0 // pred_check_branch
    %25 = sbr.rel (0) target = $region13
  $region12: #{_generator_forward.1} parent=0 // pred_region
    _
  $region13: #{_generator_forward.1} parent=0 // pred_fallthru
    _
  // Predicated region
  $region14: #{_generator_forward.1} parent=0 // pred_check
    _
  $region15: #{_generator_forward.1} parent=0 // pred_check_branch
    %27 = sbr.rel (0) target = $region17
  $region16: #{_generator_forward.1} parent=0 // pred_region
    _
  $region17: #{_generator_forward.1} parent=0 // pred_fallthru
    _
  // Predicated region
  $region18: #{_generator_forward.1} parent=0 // pred_check
    _
  $region19: #{_generator_forward.1} parent=0 // pred_check_branch
    %29 = sbr.rel (0) target = $region21
  $region20: #{_generator_forward.1} parent=0 // pred_region
    _
  $region21: #{_generator_forward.1} parent=0 // pred_fallthru
    _
  // Predicated region
  $region22: #{_generator_forward.1} parent=0 // pred_check
    _
  $region23: #{_generator_forward.1} parent=0 // pred_check_branch
    %31 = sbr.rel (0) target = $region25
  $region24: #{_generator_forward.1} parent=0 // pred_region
    _
  $region25: #{_generator_forward.1} parent=0 // pred_fallthru
    _
  // Predicated region
  $region26: #{_generator_forward.1} parent=0 // pred_check
    _
  $region27: #{_generator_forward.1} parent=0 // pred_check_branch
    %33 = sbr.rel (0) target = $region29
  $region28: #{_generator_forward.1} parent=0 // pred_region
    _
  $region29: #{_generator_forward.1} parent=0 // pred_fallthru
    _
  // Predicated region
  $region30: #{_generator_forward.1} parent=0 // pred_check
    _
  $region31: #{_generator_forward.1} parent=0 // pred_check_branch
    %35 = sbr.rel (0) target = $region33
  $region32: #{_generator_forward.1} parent=0 // pred_region
    _
  $region33: #{_generator_forward.1} parent=0 // pred_fallthru
    _
  // Predicated region
  $region34: #{_generator_forward.1} parent=0 // pred_check
    _
  $region35: #{_generator_forward.1} parent=0 // pred_check_branch
    %37 = sbr.rel (0) target = $region37
  $region36: #{_generator_forward.1} parent=0 // pred_region
    _
  $region37: #{_generator_forward.1} parent=0 // pred_fallthru
    _
  // Predicated region
  $region38: #{_generator_forward.1} parent=0 // pred_check
    _
  $region39: #{_generator_forward.1} parent=0 // pred_check_branch
    %39 = sbr.rel (0) target = $region41
  $region40: #{_generator_forward.1} parent=0 // pred_region
    _
  $region41: #{_generator_forward.1} parent=0 // pred_fallthru
    _
  // Predicated region
  $region42: #{_generator_forward.1} parent=0 // pred_check
    _
  $region43: #{_generator_forward.1} parent=0 // pred_check_branch
    %41 = sbr.rel (0) target = $region45
  $region44: #{_generator_forward.1} parent=0 // pred_region
    _
  $region45: #{_generator_forward.1} parent=0 // pred_fallthru
    _
  // Predicated region
  $region46: #{_generator_forward.1} parent=0 // pred_check
    _
  $region47: #{_generator_forward.1} parent=0 // pred_check_branch
    %43 = sbr.rel (0) target = $region49
  $region48: #{_generator_forward.1} parent=0 // pred_region
    _
  $region49: #{_generator_forward.1} parent=0 // pred_fallthru
    _
  %v44 = vld [vmem:[%s1] sm:$0xff]
  %v45 = vld [vmem:[%s0] sm:$0xff]
  %v46 = vld [vmem:[%s0 + $0x8] sm:$0xff]
  %v47 = vld [vmem:[%s0 + $0x10] sm:$0xff]
  %v48 = vld [vmem:[%s0 + $0x18] sm:$0xff]
  %v49 = vld [vmem:[%s0 + $0x20] sm:$0xff]
  %v50 = vld [vmem:[%s0 + $0x28] sm:$0xff]
  %v51 = vld [vmem:[%s0 + $0x30] sm:$0xff]
  %v52 = vld [vmem:[%s0 + $0x38] sm:$0xff]
  %v53 = vlaneseq
  %v54 = vand.u32 %v53, 127
  %55 = vset.pattern.permute.xlu0 0
  %56 = vperm.xlu0 %55, %v45
  %v57 = vpop.permute.xlu0 %56
  %58 = vset.pattern.permute.xlu0 0
  %59 = vperm.xlu0 %58, %v46
  %v60 = vpop.permute.xlu0 %59
  %61 = vset.pattern.permute.xlu0 0
  %62 = vperm.xlu0 %61, %v47
  %v63 = vpop.permute.xlu0 %62
  %64 = vset.pattern.permute.xlu0 0
  %65 = vperm.xlu0 %64, %v48
  %v66 = vpop.permute.xlu0 %65
  %67 = vset.pattern.permute.xlu0 0
  %68 = vperm.xlu0 %67, %v49
  %v69 = vpop.permute.xlu0 %68
  %70 = vset.pattern.permute.xlu0 0
  %71 = vperm.xlu0 %70, %v50
  %v72 = vpop.permute.xlu0 %71
  %73 = vset.pattern.permute.xlu0 0
  %74 = vperm.xlu0 %73, %v51
  %v75 = vpop.permute.xlu0 %74
  %76 = vset.pattern.permute.xlu0 0
  %77 = vperm.xlu0 %76, %v52
  %v78 = vpop.permute.xlu0 %77
  %vm79 = vcmp.eq.s32.totalorder %v57, %v54
  %vm80 = vcmp.eq.s32.totalorder %v60, %v54
  %vm81 = vcmp.eq.s32.totalorder %v63, %v54
  %vm82 = vcmp.eq.s32.totalorder %v66, %v54
  %vm83 = vcmp.eq.s32.totalorder %v69, %v54
  %vm84 = vcmp.eq.s32.totalorder %v72, %v54
  %vm85 = vcmp.eq.s32.totalorder %v75, %v54
  %vm86 = vcmp.eq.s32.totalorder %v78, %v54
  %v87 = vsel %vm79, 1, 0
  %v88 = vsel %vm80, 1, 0
  %v89 = vsel %vm81, 1, 0
  %v90 = vsel %vm82, 1, 0
  %v91 = vsel %vm83, 1, 0
  %v92 = vsel %vm84, 1, 0
  %v93 = vsel %vm85, 1, 0
  %v94 = vsel %vm86, 1, 0
  %v95 = vcvt.s32.f32 %v87
  %v96 = vcvt.s32.f32 %v88
  %v97 = vcvt.s32.f32 %v89
  %v98 = vcvt.s32.f32 %v90
  %v99 = vcvt.s32.f32 %v91
  %v100 = vcvt.s32.f32 %v92
  %v101 = vcvt.s32.f32 %v93
  %v102 = vcvt.s32.f32 %v94
  %v103 = vld [vmem:[%s2] sm:$0xff]
  %v104 = vld [vmem:[%s2 + $0x8] sm:$0xff]
  %v105 = vld [vmem:[%s2 + $0x10] sm:$0xff]
  %v106 = vld [vmem:[%s2 + $0x18] sm:$0xff]
  %v107 = vld [vmem:[%s2 + $0x20] sm:$0xff]
  %v108 = vld [vmem:[%s2 + $0x28] sm:$0xff]
  %v109 = vld [vmem:[%s2 + $0x30] sm:$0xff]
  %v110 = vld [vmem:[%s2 + $0x38] sm:$0xff]
  %v111 = vld [vmem:[%s2 + $0x40] sm:$0xff]
  %v112 = vld [vmem:[%s2 + $0x48] sm:$0xff]
  %v113 = vld [vmem:[%s2 + $0x50] sm:$0xff]
  %v114 = vld [vmem:[%s2 + $0x58] sm:$0xff]
  %v115 = vld [vmem:[%s2 + $0x60] sm:$0xff]
  %v116 = vld [vmem:[%s2 + $0x68] sm:$0xff]
  %v117 = vld [vmem:[%s2 + $0x70] sm:$0xff]
  %v118 = vld [vmem:[%s2 + $0x78] sm:$0xff]
  %v119 = vld [vmem:[%s2 + $0x80] sm:$0xff]
  %v120 = vld [vmem:[%s2 + $0x88] sm:$0xff]
  %v121 = vld [vmem:[%s2 + $0x90] sm:$0xff]
  %v122 = vld [vmem:[%s2 + $0x98] sm:$0xff]
  %v123 = vld [vmem:[%s2 + $0xa0] sm:$0xff]
  %v124 = vld [vmem:[%s2 + $0xa8] sm:$0xff]
  %v125 = vld [vmem:[%s2 + $0xb0] sm:$0xff]
  %v126 = vld [vmem:[%s2 + $0xb8] sm:$0xff]
  %v127 = vld [vmem:[%s2 + $0xc0] sm:$0xff]
  %v128 = vld [vmem:[%s2 + $0xc8] sm:$0xff]
  %v129 = vld [vmem:[%s2 + $0xd0] sm:$0xff]
  %v130 = vld [vmem:[%s2 + $0xd8] sm:$0xff]
  %v131 = vld [vmem:[%s2 + $0xe0] sm:$0xff]
  %v132 = vld [vmem:[%s2 + $0xe8] sm:$0xff]
  %v133 = vld [vmem:[%s2 + $0xf0] sm:$0xff]
  %v134 = vld [vmem:[%s2 + $0xf8] sm:$0xff]
  %v135 = vld [vmem:[%s2 + $0x100] sm:$0xff]
  %v136 = vld [vmem:[%s2 + $0x108] sm:$0xff]
  %v137 = vld [vmem:[%s2 + $0x110] sm:$0xff]
  %v138 = vld [vmem:[%s2 + $0x118] sm:$0xff]
  %v139 = vld [vmem:[%s2 + $0x120] sm:$0xff]
  %v140 = vld [vmem:[%s2 + $0x128] sm:$0xff]
  %v141 = vld [vmem:[%s2 + $0x130] sm:$0xff]
  %v142 = vld [vmem:[%s2 + $0x138] sm:$0xff]
  %v143 = vld [vmem:[%s2 + $0x140] sm:$0xff]
  %v144 = vld [vmem:[%s2 + $0x148] sm:$0xff]
  %v145 = vld [vmem:[%s2 + $0x150] sm:$0xff]
  %v146 = vld [vmem:[%s2 + $0x158] sm:$0xff]
  %v147 = vld [vmem:[%s2 + $0x160] sm:$0xff]
  %v148 = vld [vmem:[%s2 + $0x168] sm:$0xff]
  %v149 = vld [vmem:[%s2 + $0x170] sm:$0xff]
  %v150 = vld [vmem:[%s2 + $0x178] sm:$0xff]
  %v151 = vld [vmem:[%s2 + $0x180] sm:$0xff]
  %v152 = vld [vmem:[%s2 + $0x188] sm:$0xff]
  %v153 = vld [vmem:[%s2 + $0x190] sm:$0xff]
  %v154 = vld [vmem:[%s2 + $0x198] sm:$0xff]
  %v155 = vld [vmem:[%s2 + $0x1a0] sm:$0xff]
  %v156 = vld [vmem:[%s2 + $0x1a8] sm:$0xff]
  %v157 = vld [vmem:[%s2 + $0x1b0] sm:$0xff]
  %v158 = vld [vmem:[%s2 + $0x1b8] sm:$0xff]
  %v159 = vld [vmem:[%s2 + $0x1c0] sm:$0xff]
  %v160 = vld [vmem:[%s2 + $0x1c8] sm:$0xff]
  %v161 = vld [vmem:[%s2 + $0x1d0] sm:$0xff]
  %v162 = vld [vmem:[%s2 + $0x1d8] sm:$0xff]
  %v163 = vld [vmem:[%s2 + $0x1e0] sm:$0xff]
  %v164 = vld [vmem:[%s2 + $0x1e8] sm:$0xff]
  %v165 = vld [vmem:[%s2 + $0x1f0] sm:$0xff]
  %v166 = vld [vmem:[%s2 + $0x1f8] sm:$0xff]
  %v167 = vld [vmem:[%s4] sm:$0xf]
  %v169 = vperm.slane %v167, 0
  %v170 = vperm.slane %v167, 1
  %v171 = vperm.slane %v167, 2
  %v172 = vperm.slane %v167, 3
  %177 = vmatpush.msra.mxu0 %v163
  %178 = vmatpush.msra.mxu0 %v159
  %179 = vmatpush.msra.mxu0 %v155
  %180 = vmatpush.msra.mxu0 %v151
  %181 = vmatpush.msra.mxu0 %v147
  %182 = vmatpush.msra.mxu0 %v143
  %183 = vmatpush.msra.mxu0 %v139
  %184 = vmatpush.msra.mxu0 %v135
  %185 = vmatpush.msra.mxu0 %v131
  %186 = vmatpush.msra.mxu0 %v127
  %187 = vmatpush.msra.mxu0 %v123
  %188 = vmatpush.msra.mxu0 %v119
  %189 = vmatpush.msra.mxu0 %v115
  %190 = vmatpush.msra.mxu0 %v111
  %191 = vmatpush.msra.mxu0 %v107
  %192 = vmatpush.msra.mxu0 %v103
  %193 = vmatmul.f32.gmra.mxu0 %v95
  %v194 = vpop.f32.mrf.mxu0
  %v195 = vadd.f32 %v169, %v194
  %196 = vmatmul.f32.gmra.mxu0 %v96
  %v197 = vpop.f32.mrf.mxu0
  %v198 = vadd.f32 %v169, %v197
  %199 = vmatmul.f32.gmra.mxu0 %v97
  %v200 = vpop.f32.mrf.mxu0
  %v201 = vadd.f32 %v169, %v200
  %202 = vmatmul.f32.gmra.mxu0 %v98
  %v203 = vpop.f32.mrf.mxu0
  %v204 = vadd.f32 %v169, %v203
  %205 = vmatmul.f32.gmra.mxu0 %v99
  %v206 = vpop.f32.mrf.mxu0
  %v207 = vadd.f32 %v169, %v206
  %208 = vmatmul.f32.gmra.mxu0 %v100
  %v209 = vpop.f32.mrf.mxu0
  %v210 = vadd.f32 %v169, %v209
  %211 = vmatmul.f32.gmra.mxu0 %v101
  %v212 = vpop.f32.mrf.mxu0
  %v213 = vadd.f32 %v169, %v212
  %214 = vmatmul.f32.gmra.mxu0 %v102
  %v215 = vpop.f32.mrf.mxu0
  %v216 = vadd.f32 %v169, %v215
  %217 = vdwg.mxu0
  %218 = vmatpush.msra.mxu0 %v164
  %219 = vmatpush.msra.mxu0 %v160
  %220 = vmatpush.msra.mxu0 %v156
  %221 = vmatpush.msra.mxu0 %v152
  %222 = vmatpush.msra.mxu0 %v148
  %223 = vmatpush.msra.mxu0 %v144
  %224 = vmatpush.msra.mxu0 %v140
  %225 = vmatpush.msra.mxu0 %v136
  %226 = vmatpush.msra.mxu0 %v132
  %227 = vmatpush.msra.mxu0 %v128
  %228 = vmatpush.msra.mxu0 %v124
  %229 = vmatpush.msra.mxu0 %v120
  %230 = vmatpush.msra.mxu0 %v116
  %231 = vmatpush.msra.mxu0 %v112
  %232 = vmatpush.msra.mxu0 %v108
  %233 = vmatpush.msra.mxu0 %v104
  %234 = vmatmul.f32.gmra.mxu0 %v95
  %v235 = vpop.f32.mrf.mxu0
  %v236 = vadd.f32 %v170, %v235
  %237 = vmatmul.f32.gmra.mxu0 %v96
  %v238 = vpop.f32.mrf.mxu0
  %v239 = vadd.f32 %v170, %v238
  %240 = vmatmul.f32.gmra.mxu0 %v97
  %v241 = vpop.f32.mrf.mxu0
  %v242 = vadd.f32 %v170, %v241
  %243 = vmatmul.f32.gmra.mxu0 %v98
  %v244 = vpop.f32.mrf.mxu0
  %v245 = vadd.f32 %v170, %v244
  %246 = vmatmul.f32.gmra.mxu0 %v99
  %v247 = vpop.f32.mrf.mxu0
  %v248 = vadd.f32 %v170, %v247
  %249 = vmatmul.f32.gmra.mxu0 %v100
  %v250 = vpop.f32.mrf.mxu0
  %v251 = vadd.f32 %v170, %v250
  %252 = vmatmul.f32.gmra.mxu0 %v101
  %v253 = vpop.f32.mrf.mxu0
  %v254 = vadd.f32 %v170, %v253
  %255 = vmatmul.f32.gmra.mxu0 %v102
  %v256 = vpop.f32.mrf.mxu0
  %v257 = vadd.f32 %v170, %v256
  %258 = vdwg.mxu0
  %259 = vmatpush.msra.mxu0 %v165
  %260 = vmatpush.msra.mxu0 %v161
  %261 = vmatpush.msra.mxu0 %v157
  %262 = vmatpush.msra.mxu0 %v153
  %263 = vmatpush.msra.mxu0 %v149
  %264 = vmatpush.msra.mxu0 %v145
  %265 = vmatpush.msra.mxu0 %v141
  %266 = vmatpush.msra.mxu0 %v137
  %267 = vmatpush.msra.mxu0 %v133
  %268 = vmatpush.msra.mxu0 %v129
  %269 = vmatpush.msra.mxu0 %v125
  %270 = vmatpush.msra.mxu0 %v121
  %271 = vmatpush.msra.mxu0 %v117
  %272 = vmatpush.msra.mxu0 %v113
  %273 = vmatpush.msra.mxu0 %v109
  %274 = vmatpush.msra.mxu0 %v105
  %275 = vmatmul.f32.gmra.mxu0 %v95
  %v276 = vpop.f32.mrf.mxu0
  %v277 = vadd.f32 %v171, %v276
  %278 = vmatmul.f32.gmra.mxu0 %v96
  %v279 = vpop.f32.mrf.mxu0
  %v280 = vadd.f32 %v171, %v279
  %281 = vmatmul.f32.gmra.mxu0 %v97
  %v282 = vpop.f32.mrf.mxu0
  %v283 = vadd.f32 %v171, %v282
  %284 = vmatmul.f32.gmra.mxu0 %v98
  %v285 = vpop.f32.mrf.mxu0
  %v286 = vadd.f32 %v171, %v285
  %287 = vmatmul.f32.gmra.mxu0 %v99
  %v288 = vpop.f32.mrf.mxu0
  %v289 = vadd.f32 %v171, %v288
  %290 = vmatmul.f32.gmra.mxu0 %v100
  %v291 = vpop.f32.mrf.mxu0
  %v292 = vadd.f32 %v171, %v291
  %293 = vmatmul.f32.gmra.mxu0 %v101
  %v294 = vpop.f32.mrf.mxu0
  %v295 = vadd.f32 %v171, %v294
  %296 = vmatmul.f32.gmra.mxu0 %v102
  %v297 = vpop.f32.mrf.mxu0
  %v298 = vadd.f32 %v171, %v297
  %299 = vdwg.mxu0
  %300 = vmatpush.msra.mxu0 %v166
  %301 = vmatpush.msra.mxu0 %v162
  %302 = vmatpush.msra.mxu0 %v158
  %303 = vmatpush.msra.mxu0 %v154
  %304 = vmatpush.msra.mxu0 %v150
  %305 = vmatpush.msra.mxu0 %v146
  %306 = vmatpush.msra.mxu0 %v142
  %307 = vmatpush.msra.mxu0 %v138
  %308 = vmatpush.msra.mxu0 %v134
  %309 = vmatpush.msra.mxu0 %v130
  %310 = vmatpush.msra.mxu0 %v126
  %311 = vmatpush.msra.mxu0 %v122
  %312 = vmatpush.msra.mxu0 %v118
  %313 = vmatpush.msra.mxu0 %v114
  %314 = vmatpush.msra.mxu0 %v110
  %315 = vmatpush.msra.mxu0 %v106
  %316 = vmatmul.f32.gmra.mxu0 %v95
  %v317 = vpop.f32.mrf.mxu0
  %v318 = vadd.f32 %v172, %v317
  %319 = vmatmul.f32.gmra.mxu0 %v96
  %v320 = vpop.f32.mrf.mxu0
  %v321 = vadd.f32 %v172, %v320
  %322 = vmatmul.f32.gmra.mxu0 %v97
  %v323 = vpop.f32.mrf.mxu0
  %v324 = vadd.f32 %v172, %v323
  %325 = vmatmul.f32.gmra.mxu0 %v98
  %v326 = vpop.f32.mrf.mxu0
  %v327 = vadd.f32 %v172, %v326
  %328 = vmatmul.f32.gmra.mxu0 %v99
  %v329 = vpop.f32.mrf.mxu0
  %v330 = vadd.f32 %v172, %v329
  %331 = vmatmul.f32.gmra.mxu0 %v100
  %v332 = vpop.f32.mrf.mxu0
  %v333 = vadd.f32 %v172, %v332
  %334 = vmatmul.f32.gmra.mxu0 %v101
  %v335 = vpop.f32.mrf.mxu0
  %v336 = vadd.f32 %v172, %v335
  %337 = vmatmul.f32.gmra.mxu0 %v102
  %v338 = vpop.f32.mrf.mxu0
  %v339 = vadd.f32 %v172, %v338
  %340 = vdwg.mxu0
  %341 = vst [vmem:[#allocation2] sm:$0xff] %v195
  %342 = vst [vmem:[#allocation2 + $0x8] sm:$0xff] %v236
  %343 = vst [vmem:[#allocation2 + $0x10] sm:$0xff] %v277
  %344 = vst [vmem:[#allocation2 + $0x18] sm:$0xff] %v318
  %345 = vst [vmem:[#allocation2 + $0x20] sm:$0xff] %v198
  %346 = vst [vmem:[#allocation2 + $0x28] sm:$0xff] %v239
  %347 = vst [vmem:[#allocation2 + $0x30] sm:$0xff] %v280
  %348 = vst [vmem:[#allocation2 + $0x38] sm:$0xff] %v321
  %349 = vst [vmem:[#allocation2 + $0x40] sm:$0xff] %v201
  %350 = vst [vmem:[#allocation2 + $0x48] sm:$0xff] %v242
  %351 = vst [vmem:[#allocation2 + $0x50] sm:$0xff] %v283
  %352 = vst [vmem:[#allocation2 + $0x58] sm:$0xff] %v324
  %353 = vst [vmem:[#allocation2 + $0x60] sm:$0xff] %v204
  %354 = vst [vmem:[#allocation2 + $0x68] sm:$0xff] %v245
  %355 = vst [vmem:[#allocation2 + $0x70] sm:$0xff] %v286
  %356 = vst [vmem:[#allocation2 + $0x78] sm:$0xff] %v327
  %357 = vst [vmem:[#allocation2 + $0x80] sm:$0xff] %v207
  %358 = vst [vmem:[#allocation2 + $0x88] sm:$0xff] %v248
  %359 = vst [vmem:[#allocation2 + $0x90] sm:$0xff] %v289
  %360 = vst [vmem:[#allocation2 + $0x98] sm:$0xff] %v330
  %361 = vst [vmem:[#allocation2 + $0xa0] sm:$0xff] %v210
  %362 = vst [vmem:[#allocation2 + $0xa8] sm:$0xff] %v251
  %363 = vst [vmem:[#allocation2 + $0xb0] sm:$0xff] %v292
  %364 = vst [vmem:[#allocation2 + $0xb8] sm:$0xff] %v333
  %365 = vst [vmem:[#allocation2 + $0xc0] sm:$0xff] %v213
  %366 = vst [vmem:[#allocation2 + $0xc8] sm:$0xff] %v254
  %367 = vst [vmem:[#allocation2 + $0xd0] sm:$0xff] %v295
  %368 = vst [vmem:[#allocation2 + $0xd8] sm:$0xff] %v336
  %369 = vst [vmem:[#allocation2 + $0xe0] sm:$0xff] %v216
  %370 = vst [vmem:[#allocation2 + $0xe8] sm:$0xff] %v257
  %371 = vst [vmem:[#allocation2 + $0xf0] sm:$0xff] %v298
  %372 = vst [vmem:[#allocation2 + $0xf8] sm:$0xff] %v339
  %v373 = vld [vmem:[%s10] sm:$0xff]
  %374 = vst [vmem:[#allocation4] sm:$0xff] %v373
  %v375 = vld [vmem:[%s11] sm:$0xff]
  %376 = vst [vmem:[#allocation5] sm:$0xff] %v375
  %v377 = vld [vmem:[%s3] sm:$0xff]
  %v378 = vld [vmem:[%s3 + $0x8] sm:$0xff]
  %v379 = vld [vmem:[%s3 + $0x10] sm:$0xff]
  %v380 = vld [vmem:[%s3 + $0x18] sm:$0xff]
  %v381 = vld [vmem:[%s3 + $0x20] sm:$0xff]
  %v382 = vld [vmem:[%s3 + $0x28] sm:$0xff]
  %v383 = vld [vmem:[%s3 + $0x30] sm:$0xff]
  %v384 = vld [vmem:[%s3 + $0x38] sm:$0xff]
  %v385 = vld [vmem:[%s3 + $0x40] sm:$0xff]
  %v386 = vld [vmem:[%s3 + $0x48] sm:$0xff]
  %v387 = vld [vmem:[%s3 + $0x50] sm:$0xff]
  %v388 = vld [vmem:[%s3 + $0x58] sm:$0xff]
  %v389 = vld [vmem:[%s3 + $0x60] sm:$0xff]
  %v390 = vld [vmem:[%s3 + $0x68] sm:$0xff]
  %v391 = vld [vmem:[%s3 + $0x70] sm:$0xff]
  %v392 = vld [vmem:[%s3 + $0x78] sm:$0xff]
  %v393 = vld [vmem:[%s3 + $0x80] sm:$0xff]
  %v394 = vld [vmem:[%s3 + $0x88] sm:$0xff]
  %v395 = vld [vmem:[%s3 + $0x90] sm:$0xff]
  %v396 = vld [vmem:[%s3 + $0x98] sm:$0xff]
  %v397 = vld [vmem:[%s3 + $0xa0] sm:$0xff]
  %v398 = vld [vmem:[%s3 + $0xa8] sm:$0xff]
  %v399 = vld [vmem:[%s3 + $0xb0] sm:$0xff]
  %v400 = vld [vmem:[%s3 + $0xb8] sm:$0xff]
  %v401 = vld [vmem:[%s3 + $0xc0] sm:$0xff]
  %v402 = vld [vmem:[%s3 + $0xc8] sm:$0xff]
  %v403 = vld [vmem:[%s3 + $0xd0] sm:$0xff]
  %v404 = vld [vmem:[%s3 + $0xd8] sm:$0xff]
  %v405 = vld [vmem:[%s3 + $0xe0] sm:$0xff]
  %v406 = vld [vmem:[%s3 + $0xe8] sm:$0xff]
  %v407 = vld [vmem:[%s3 + $0xf0] sm:$0xff]
  %v408 = vld [vmem:[%s3 + $0xf8] sm:$0xff]
  %v409 = vld [vmem:[%s3 + $0x100] sm:$0xff]
  %v410 = vld [vmem:[%s3 + $0x108] sm:$0xff]
  %v411 = vld [vmem:[%s3 + $0x110] sm:$0xff]
  %v412 = vld [vmem:[%s3 + $0x118] sm:$0xff]
  %v413 = vld [vmem:[%s3 + $0x120] sm:$0xff]
  %v414 = vld [vmem:[%s3 + $0x128] sm:$0xff]
  %v415 = vld [vmem:[%s3 + $0x130] sm:$0xff]
  %v416 = vld [vmem:[%s3 + $0x138] sm:$0xff]
  %v417 = vld [vmem:[%s3 + $0x140] sm:$0xff]
  %v418 = vld [vmem:[%s3 + $0x148] sm:$0xff]
  %v419 = vld [vmem:[%s3 + $0x150] sm:$0xff]
  %v420 = vld [vmem:[%s3 + $0x158] sm:$0xff]
  %v421 = vld [vmem:[%s3 + $0x160] sm:$0xff]
  %v422 = vld [vmem:[%s3 + $0x168] sm:$0xff]
  %v423 = vld [vmem:[%s3 + $0x170] sm:$0xff]
  %v424 = vld [vmem:[%s3 + $0x178] sm:$0xff]
  %v425 = vld [vmem:[%s3 + $0x180] sm:$0xff]
  %v426 = vld [vmem:[%s3 + $0x188] sm:$0xff]
  %v427 = vld [vmem:[%s3 + $0x190] sm:$0xff]
  %v428 = vld [vmem:[%s3 + $0x198] sm:$0xff]
  %v429 = vld [vmem:[%s3 + $0x1a0] sm:$0xff]
  %v430 = vld [vmem:[%s3 + $0x1a8] sm:$0xff]
  %v431 = vld [vmem:[%s3 + $0x1b0] sm:$0xff]
  %v432 = vld [vmem:[%s3 + $0x1b8] sm:$0xff]
  %v433 = vld [vmem:[%s3 + $0x1c0] sm:$0xff]
  %v434 = vld [vmem:[%s3 + $0x1c8] sm:$0xff]
  %v435 = vld [vmem:[%s3 + $0x1d0] sm:$0xff]
  %v436 = vld [vmem:[%s3 + $0x1d8] sm:$0xff]
  %v437 = vld [vmem:[%s3 + $0x1e0] sm:$0xff]
  %v438 = vld [vmem:[%s3 + $0x1e8] sm:$0xff]
  %v439 = vld [vmem:[%s3 + $0x1f0] sm:$0xff]
  %v440 = vld [vmem:[%s3 + $0x1f8] sm:$0xff]
  %v441 = vld [vmem:[#allocation4] sm:$0xff]
  %v442 = vld [vmem:[#allocation5] sm:$0xff]
  %v443 = vld [vmem:[#allocation2] sm:$0xff]
  %v444 = vld [vmem:[#allocation2 + $0x8] sm:$0xff]
  %v445 = vld [vmem:[#allocation2 + $0x10] sm:$0xff]
  %v446 = vld [vmem:[#allocation2 + $0x18] sm:$0xff]
  %447 = vmatpush.msra.mxu0 %v437
  %448 = vmatpush.msra.mxu0 %v433
  %449 = vmatpush.msra.mxu0 %v429
  %450 = vmatpush.msra.mxu0 %v425
  %451 = vmatpush.msra.mxu0 %v421
  %452 = vmatpush.msra.mxu0 %v417
  %453 = vmatpush.msra.mxu0 %v413
  %454 = vmatpush.msra.mxu0 %v409
  %455 = vmatpush.msra.mxu0 %v405
  %456 = vmatpush.msra.mxu0 %v401
  %457 = vmatpush.msra.mxu0 %v397
  %458 = vmatpush.msra.mxu0 %v393
  %459 = vmatpush.msra.mxu0 %v389
  %460 = vmatpush.msra.mxu0 %v385
  %461 = vmatpush.msra.mxu0 %v381
  %462 = vmatpush.msra.mxu0 %v377
  %463 = vmatmul.f32.gmra.mxu0 %v441
  %v464 = vpop.f32.mrf.mxu0
  %v465 = vadd.f32 0.0, %v464
  %466 = vdwg.mxu0
  %467 = vmatpush.msra.mxu0 %v438
  %468 = vmatpush.msra.mxu0 %v434
  %469 = vmatpush.msra.mxu0 %v430
  %470 = vmatpush.msra.mxu0 %v426
  %471 = vmatpush.msra.mxu0 %v422
  %472 = vmatpush.msra.mxu0 %v418
  %473 = vmatpush.msra.mxu0 %v414
  %474 = vmatpush.msra.mxu0 %v410
  %475 = vmatpush.msra.mxu0 %v406
  %476 = vmatpush.msra.mxu0 %v402
  %477 = vmatpush.msra.mxu0 %v398
  %478 = vmatpush.msra.mxu0 %v394
  %479 = vmatpush.msra.mxu0 %v390
  %480 = vmatpush.msra.mxu0 %v386
  %481 = vmatpush.msra.mxu0 %v382
  %482 = vmatpush.msra.mxu0 %v378
  %483 = vmatmul.f32.gmra.mxu0 %v441
  %v484 = vpop.f32.mrf.mxu0
  %v485 = vadd.f32 0.0, %v484
  %486 = vdwg.mxu0
  %487 = vmatpush.msra.mxu0 %v439
  %488 = vmatpush.msra.mxu0 %v435
  %489 = vmatpush.msra.mxu0 %v431
  %490 = vmatpush.msra.mxu0 %v427
  %491 = vmatpush.msra.mxu0 %v423
  %492 = vmatpush.msra.mxu0 %v419
  %493 = vmatpush.msra.mxu0 %v415
  %494 = vmatpush.msra.mxu0 %v411
  %495 = vmatpush.msra.mxu0 %v407
  %496 = vmatpush.msra.mxu0 %v403
  %497 = vmatpush.msra.mxu0 %v399
  %498 = vmatpush.msra.mxu0 %v395
  %499 = vmatpush.msra.mxu0 %v391
  %500 = vmatpush.msra.mxu0 %v387
  %501 = vmatpush.msra.mxu0 %v383
  %502 = vmatpush.msra.mxu0 %v379
  %503 = vmatmul.f32.gmra.mxu0 %v441
  %v504 = vpop.f32.mrf.mxu0
  %v505 = vadd.f32 0.0, %v504
  %506 = vdwg.mxu0
  %507 = vmatpush.msra.mxu0 %v440
  %508 = vmatpush.msra.mxu0 %v436
  %509 = vmatpush.msra.mxu0 %v432
  %510 = vmatpush.msra.mxu0 %v428
  %511 = vmatpush.msra.mxu0 %v424
  %512 = vmatpush.msra.mxu0 %v420
  %513 = vmatpush.msra.mxu0 %v416
  %514 = vmatpush.msra.mxu0 %v412
  %515 = vmatpush.msra.mxu0 %v408
  %516 = vmatpush.msra.mxu0 %v404
  %517 = vmatpush.msra.mxu0 %v400
  %518 = vmatpush.msra.mxu0 %v396
  %519 = vmatpush.msra.mxu0 %v392
  %520 = vmatpush.msra.mxu0 %v388
  %521 = vmatpush.msra.mxu0 %v384
  %522 = vmatpush.msra.mxu0 %v380
  %523 = vmatmul.f32.gmra.mxu0 %v441
  %v524 = vpop.f32.mrf.mxu0
  %v525 = vadd.f32 0.0, %v524
  %526 = vdwg.mxu0
  %v527 = vadd.f32 %v443, %v465
  %v528 = vadd.f32 %v444, %v485
  %v529 = vadd.f32 %v445, %v505
  %v530 = vadd.f32 %v446, %v525
  %v531 = vxor.u32 %v527, 2147483648
  %v532 = vmul.f32 %v531, 1.442695
  %v533 = vpow.pop %v532
  %v534 = vadd.f32 %v533, 1.0
  %v535 = vrcp.pop %v534
  %v536 = vmul.f32 %v534, %v535
  %v537 = vsub.f32 1.0, %v536
  %v538 = vmul.f32 %v535, %v537
  %v539 = vadd.f32 %v535, %v538
  %vm540 = vweird.f32 %v534
  %vm541 = vweird.f32 %v535
  %vm542 = vmor %vm540, %vm541
  %v543 = vsel %vm542, %v535, %v539
  %v544 = vand.u32 2147483647, %v534
  %vm545 = vcmp.eq.f32.partialorder %v544, 8.507059e+37
  %v546 = vand.u32 %v534, 2147483648
  %v547 = vor.u32 1.1754944e-38, %v546
  %v548 = vsel %vm545, %v547, %v543
  %v549 = vmul.f32 1.0, %v548
  %v550 = vxor.u32 %v528, 2147483648
  %v551 = vmul.f32 %v550, 1.442695
  %v552 = vpow.pop %v551
  %v553 = vadd.f32 %v552, 1.0
  %v554 = vrcp.pop %v553
  %v555 = vmul.f32 %v553, %v554
  %v556 = vsub.f32 1.0, %v555
  %v557 = vmul.f32 %v554, %v556
  %v558 = vadd.f32 %v554, %v557
  %vm559 = vweird.f32 %v553
  %vm560 = vweird.f32 %v554
  %vm561 = vmor %vm559, %vm560
  %v562 = vsel %vm561, %v554, %v558
  %v563 = vand.u32 2147483647, %v553
  %vm564 = vcmp.eq.f32.partialorder %v563, 8.507059e+37
  %v565 = vand.u32 %v553, 2147483648
  %v566 = vor.u32 1.1754944e-38, %v565
  %v567 = vsel %vm564, %v566, %v562
  %v568 = vmul.f32 1.0, %v567
  %v569 = vtanh.pop %v529
  %v570 = vxor.u32 %v530, 2147483648
  %v571 = vmul.f32 %v570, 1.442695
  %v572 = vpow.pop %v571
  %v573 = vadd.f32 %v572, 1.0
  %v574 = vrcp.pop %v573
  %v575 = vmul.f32 %v573, %v574
  %v576 = vsub.f32 1.0, %v575
  %v577 = vmul.f32 %v574, %v576
  %v578 = vadd.f32 %v574, %v577
  %vm579 = vweird.f32 %v573
  %vm580 = vweird.f32 %v574
  %vm581 = vmor %vm579, %vm580
  %v582 = vsel %vm581, %v574, %v578
  %v583 = vand.u32 2147483647, %v573
  %vm584 = vcmp.eq.f32.partialorder %v583, 8.507059e+37
  %v585 = vand.u32 %v573, 2147483648
  %v586 = vor.u32 1.1754944e-38, %v585
  %v587 = vsel %vm584, %v586, %v582
  %v588 = vmul.f32 1.0, %v587
  %v589 = vmul.f32 %v568, %v442
  %v590 = vmul.f32 %v549, %v569
  %v591 = vadd.f32 %v589, %v590
  %v592 = vtanh.pop %v591
  %v593 = vmul.f32 %v588, %v592
  %vm594 = vcmp.gt.s32.totalorder %v44, 0
  %v595 = vsel %vm594, 1, 0
  %596 = vset.pattern.permute.xlu0 0
  %597 = vperm.xlu0 %596, %v595
  %v598 = vpop.permute.xlu0 %597
  %vm599 = vcmp.eq.s32.totalorder %v598, 1
  %v600 = vsel %vm599, %v593, %v441
  %601 = vst [vmem:[#allocation4] sm:$0xff] %v600
  %v602 = vsel %vm599, %v591, %v442
  %603 = vst [vmem:[#allocation5] sm:$0xff] %v602
  %v604 = vsel %vm599, %v593, 0.0
  %605 = vst [vmem:[#allocation3] sm:$0xff] %v604
  %v606 = vld [vmem:[#allocation4] sm:$0xff]
  %v607 = vld [vmem:[#allocation5] sm:$0xff]
  %v608 = vld [vmem:[#allocation2 + $0x20] sm:$0xff]
  %v609 = vld [vmem:[#allocation2 + $0x28] sm:$0xff]
  %v610 = vld [vmem:[#allocation2 + $0x30] sm:$0xff]
  %v611 = vld [vmem:[#allocation2 + $0x38] sm:$0xff]
  %612 = vmatpush.msra.mxu0 %v437
  %613 = vmatpush.msra.mxu0 %v433
  %614 = vmatpush.msra.mxu0 %v429
  %615 = vmatpush.msra.mxu0 %v425
  %616 = vmatpush.msra.mxu0 %v421
  %617 = vmatpush.msra.mxu0 %v417
  %618 = vmatpush.msra.mxu0 %v413
  %619 = vmatpush.msra.mxu0 %v409
  %620 = vmatpush.msra.mxu0 %v405
  %621 = vmatpush.msra.mxu0 %v401
  %622 = vmatpush.msra.mxu0 %v397
  %623 = vmatpush.msra.mxu0 %v393
  %624 = vmatpush.msra.mxu0 %v389
  %625 = vmatpush.msra.mxu0 %v385
  %626 = vmatpush.msra.mxu0 %v381
  %627 = vmatpush.msra.mxu0 %v377
  %628 = vmatmul.f32.gmra.mxu0 %v606
  %v629 = vpop.f32.mrf.mxu0
  %v630 = vadd.f32 0.0, %v629
  %631 = vdwg.mxu0
  %632 = vmatpush.msra.mxu0 %v438
  %633 = vmatpush.msra.mxu0 %v434
  %634 = vmatpush.msra.mxu0 %v430
  %635 = vmatpush.msra.mxu0 %v426
  %636 = vmatpush.msra.mxu0 %v422
  %637 = vmatpush.msra.mxu0 %v418
  %638 = vmatpush.msra.mxu0 %v414
  %639 = vmatpush.msra.mxu0 %v410
  %640 = vmatpush.msra.mxu0 %v406
  %641 = vmatpush.msra.mxu0 %v402
  %642 = vmatpush.msra.mxu0 %v398
  %643 = vmatpush.msra.mxu0 %v394
  %644 = vmatpush.msra.mxu0 %v390
  %645 = vmatpush.msra.mxu0 %v386
  %646 = vmatpush.msra.mxu0 %v382
  %647 = vmatpush.msra.mxu0 %v378
  %648 = vmatmul.f32.gmra.mxu0 %v606
  %v649 = vpop.f32.mrf.mxu0
  %v650 = vadd.f32 0.0, %v649
  %651 = vdwg.mxu0
  %652 = vmatpush.msra.mxu0 %v439
  %653 = vmatpush.msra.mxu0 %v435
  %654 = vmatpush.msra.mxu0 %v431
  %655 = vmatpush.msra.mxu0 %v427
  %656 = vmatpush.msra.mxu0 %v423
  %657 = vmatpush.msra.mxu0 %v419
  %658 = vmatpush.msra.mxu0 %v415
  %659 = vmatpush.msra.mxu0 %v411
  %660 = vmatpush.msra.mxu0 %v407
  %661 = vmatpush.msra.mxu0 %v403
  %662 = vmatpush.msra.mxu0 %v399
  %663 = vmatpush.msra.mxu0 %v395
  %664 = vmatpush.msra.mxu0 %v391
  %665 = vmatpush.msra.mxu0 %v387
  %666 = vmatpush.msra.mxu0 %v383
  %667 = vmatpush.msra.mxu0 %v379
  %668 = vmatmul.f32.gmra.mxu0 %v606
  %v669 = vpop.f32.mrf.mxu0
  %v670 = vadd.f32 0.0, %v669
  %671 = vdwg.mxu0
  %672 = vmatpush.msra.mxu0 %v440
  %673 = vmatpush.msra.mxu0 %v436
  %674 = vmatpush.msra.mxu0 %v432
  %675 = vmatpush.msra.mxu0 %v428
  %676 = vmatpush.msra.mxu0 %v424
  %677 = vmatpush.msra.mxu0 %v420
  %678 = vmatpush.msra.mxu0 %v416
  %679 = vmatpush.msra.mxu0 %v412
  %680 = vmatpush.msra.mxu0 %v408
  %681 = vmatpush.msra.mxu0 %v404
  %682 = vmatpush.msra.mxu0 %v400
  %683 = vmatpush.msra.mxu0 %v396
  %684 = vmatpush.msra.mxu0 %v392
  %685 = vmatpush.msra.mxu0 %v388
  %686 = vmatpush.msra.mxu0 %v384
  %687 = vmatpush.msra.mxu0 %v380
  %688 = vmatmul.f32.gmra.mxu0 %v606
  %v689 = vpop.f32.mrf.mxu0
  %v690 = vadd.f32 0.0, %v689
  %691 = vdwg.mxu0
  %v692 = vadd.f32 %v608, %v630
  %v693 = vadd.f32 %v609, %v650
  %v694 = vadd.f32 %v610, %v670
  %v695 = vadd.f32 %v611, %v690
  %v696 = vxor.u32 %v692, 2147483648
  %v697 = vmul.f32 %v696, 1.442695
  %v698 = vpow.pop %v697
  %v699 = vadd.f32 %v698, 1.0
  %v700 = vrcp.pop %v699
  %v701 = vmul.f32 %v699, %v700
  %v702 = vsub.f32 1.0, %v701
  %v703 = vmul.f32 %v700, %v702
  %v704 = vadd.f32 %v700, %v703
  %vm705 = vweird.f32 %v699
  %vm706 = vweird.f32 %v700
  %vm707 = vmor %vm705, %vm706
  %v708 = vsel %vm707, %v700, %v704
  %v709 = vand.u32 2147483647, %v699
  %vm710 = vcmp.eq.f32.partialorder %v709, 8.507059e+37
  %v711 = vand.u32 %v699, 2147483648
  %v712 = vor.u32 1.1754944e-38, %v711
  %v713 = vsel %vm710, %v712, %v708
  %v714 = vmul.f32 1.0, %v713
  %v715 = vxor.u32 %v693, 2147483648
  %v716 = vmul.f32 %v715, 1.442695
  %v717 = vpow.pop %v716
  %v718 = vadd.f32 %v717, 1.0
  %v719 = vrcp.pop %v718
  %v720 = vmul.f32 %v718, %v719
  %v721 = vsub.f32 1.0, %v720
  %v722 = vmul.f32 %v719, %v721
  %v723 = vadd.f32 %v719, %v722
  %vm724 = vweird.f32 %v718
  %vm725 = vweird.f32 %v719
  %vm726 = vmor %vm724, %vm725
  %v727 = vsel %vm726, %v719, %v723
  %v728 = vand.u32 2147483647, %v718
  %vm729 = vcmp.eq.f32.partialorder %v728, 8.507059e+37
  %v730 = vand.u32 %v718, 2147483648
  %v731 = vor.u32 1.1754944e-38, %v730
  %v732 = vsel %vm729, %v731, %v727
  %v733 = vmul.f32 1.0, %v732
  %v734 = vtanh.pop %v694
  %v735 = vxor.u32 %v695, 2147483648
  %v736 = vmul.f32 %v735, 1.442695
  %v737 = vpow.pop %v736
  %v738 = vadd.f32 %v737, 1.0
  %v739 = vrcp.pop %v738
  %v740 = vmul.f32 %v738, %v739
  %v741 = vsub.f32 1.0, %v740
  %v742 = vmul.f32 %v739, %v741
  %v743 = vadd.f32 %v739, %v742
  %vm744 = vweird.f32 %v738
  %vm745 = vweird.f32 %v739
  %vm746 = vmor %vm744, %vm745
  %v747 = vsel %vm746, %v739, %v743
  %v748 = vand.u32 2147483647, %v738
  %vm749 = vcmp.eq.f32.partialorder %v748, 8.507059e+37
  %v750 = vand.u32 %v738, 2147483648
  %v751 = vor.u32 1.1754944e-38, %v750
  %v752 = vsel %vm749, %v751, %v747
  %v753 = vmul.f32 1.0, %v752
  %v754 = vmul.f32 %v733, %v607
  %v755 = vmul.f32 %v714, %v734
  %v756 = vadd.f32 %v754, %v755
  %v757 = vtanh.pop %v756
  %v758 = vmul.f32 %v753, %v757
  %vm759 = vcmp.gt.s32.totalorder %v44, 1
  %v760 = vsel %vm759, 1, 0
  %761 = vset.pattern.permute.xlu0 0
  %762 = vperm.xlu0 %761, %v760
  %v763 = vpop.permute.xlu0 %762
  %vm764 = vcmp.eq.s32.totalorder %v763, 1
  %v765 = vsel %vm764, %v758, %v606
  %766 = vst [vmem:[#allocation4] sm:$0xff] %v765
  %v767 = vsel %vm764, %v756, %v607
  %768 = vst [vmem:[#allocation5] sm:$0xff] %v767
  %v769 = vsel %vm764, %v758, 0.0
  %770 = vst [vmem:[#allocation3 + $0x8] sm:$0xff] %v769
  %v771 = vld [vmem:[#allocation4] sm:$0xff]
  %v772 = vld [vmem:[#allocation5] sm:$0xff]
  %v773 = vld [vmem:[#allocation2 + $0x40] sm:$0xff]
  %v774 = vld [vmem:[#allocation2 + $0x48] sm:$0xff]
  %v775 = vld [vmem:[#allocation2 + $0x50] sm:$0xff]
  %v776 = vld [vmem:[#allocation2 + $0x58] sm:$0xff]
  %777 = vmatpush.msra.mxu0 %v437
  %778 = vmatpush.msra.mxu0 %v433
  %779 = vmatpush.msra.mxu0 %v429
  %780 = vmatpush.msra.mxu0 %v425
  %781 = vmatpush.msra.mxu0 %v421
  %782 = vmatpush.msra.mxu0 %v417
  %783 = vmatpush.msra.mxu0 %v413
  %784 = vmatpush.msra.mxu0 %v409
  %785 = vmatpush.msra.mxu0 %v405
  %786 = vmatpush.msra.mxu0 %v401
  %787 = vmatpush.msra.mxu0 %v397
  %788 = vmatpush.msra.mxu0 %v393
  %789 = vmatpush.msra.mxu0 %v389
  %790 = vmatpush.msra.mxu0 %v385
  %791 = vmatpush.msra.mxu0 %v381
  %792 = vmatpush.msra.mxu0 %v377
  %793 = vmatmul.f32.gmra.mxu0 %v771
  %v794 = vpop.f32.mrf.mxu0
  %v795 = vadd.f32 0.0, %v794
  %796 = vdwg.mxu0
  %797 = vmatpush.msra.mxu0 %v438
  %798 = vmatpush.msra.mxu0 %v434
  %799 = vmatpush.msra.mxu0 %v430
  %800 = vmatpush.msra.mxu0 %v426
  %801 = vmatpush.msra.mxu0 %v422
  %802 = vmatpush.msra.mxu0 %v418
  %803 = vmatpush.msra.mxu0 %v414
  %804 = vmatpush.msra.mxu0 %v410
  %805 = vmatpush.msra.mxu0 %v406
  %806 = vmatpush.msra.mxu0 %v402
  %807 = vmatpush.msra.mxu0 %v398
  %808 = vmatpush.msra.mxu0 %v394
  %809 = vmatpush.msra.mxu0 %v390
  %810 = vmatpush.msra.mxu0 %v386
  %811 = vmatpush.msra.mxu0 %v382
  %812 = vmatpush.msra.mxu0 %v378
  %813 = vmatmul.f32.gmra.mxu0 %v771
  %v814 = vpop.f32.mrf.mxu0
  %v815 = vadd.f32 0.0, %v814
  %816 = vdwg.mxu0
  %817 = vmatpush.msra.mxu0 %v439
  %818 = vmatpush.msra.mxu0 %v435
  %819 = vmatpush.msra.mxu0 %v431
  %820 = vmatpush.msra.mxu0 %v427
  %821 = vmatpush.msra.mxu0 %v423
  %822 = vmatpush.msra.mxu0 %v419
  %823 = vmatpush.msra.mxu0 %v415
  %824 = vmatpush.msra.mxu0 %v411
  %825 = vmatpush.msra.mxu0 %v407
  %826 = vmatpush.msra.mxu0 %v403
  %827 = vmatpush.msra.mxu0 %v399
  %828 = vmatpush.msra.mxu0 %v395
  %829 = vmatpush.msra.mxu0 %v391
  %830 = vmatpush.msra.mxu0 %v387
  %831 = vmatpush.msra.mxu0 %v383
  %832 = vmatpush.msra.mxu0 %v379
  %833 = vmatmul.f32.gmra.mxu0 %v771
  %v834 = vpop.f32.mrf.mxu0
  %v835 = vadd.f32 0.0, %v834
  %836 = vdwg.mxu0
  %837 = vmatpush.msra.mxu0 %v440
  %838 = vmatpush.msra.mxu0 %v436
  %839 = vmatpush.msra.mxu0 %v432
  %840 = vmatpush.msra.mxu0 %v428
  %841 = vmatpush.msra.mxu0 %v424
  %842 = vmatpush.msra.mxu0 %v420
  %843 = vmatpush.msra.mxu0 %v416
  %844 = vmatpush.msra.mxu0 %v412
  %845 = vmatpush.msra.mxu0 %v408
  %846 = vmatpush.msra.mxu0 %v404
  %847 = vmatpush.msra.mxu0 %v400
  %848 = vmatpush.msra.mxu0 %v396
  %849 = vmatpush.msra.mxu0 %v392
  %850 = vmatpush.msra.mxu0 %v388
  %851 = vmatpush.msra.mxu0 %v384
  %852 = vmatpush.msra.mxu0 %v380
  %853 = vmatmul.f32.gmra.mxu0 %v771
  %v854 = vpop.f32.mrf.mxu0
  %v855 = vadd.f32 0.0, %v854
  %856 = vdwg.mxu0
  %v857 = vadd.f32 %v773, %v795
  %v858 = vadd.f32 %v774, %v815
  %v859 = vadd.f32 %v775, %v835
  %v860 = vadd.f32 %v776, %v855
  %v861 = vxor.u32 %v857, 2147483648
  %v862 = vmul.f32 %v861, 1.442695
  %v863 = vpow.pop %v862
  %v864 = vadd.f32 %v863, 1.0
  %v865 = vrcp.pop %v864
  %v866 = vmul.f32 %v864, %v865
  %v867 = vsub.f32 1.0, %v866
  %v868 = vmul.f32 %v865, %v867
  %v869 = vadd.f32 %v865, %v868
  %vm870 = vweird.f32 %v864
  %vm871 = vweird.f32 %v865
  %vm872 = vmor %vm870, %vm871
  %v873 = vsel %vm872, %v865, %v869
  %v874 = vand.u32 2147483647, %v864
  %vm875 = vcmp.eq.f32.partialorder %v874, 8.507059e+37
  %v876 = vand.u32 %v864, 2147483648
  %v877 = vor.u32 1.1754944e-38, %v876
  %v878 = vsel %vm875, %v877, %v873
  %v879 = vmul.f32 1.0, %v878
  %v880 = vxor.u32 %v858, 2147483648
  %v881 = vmul.f32 %v880, 1.442695
  %v882 = vpow.pop %v881
  %v883 = vadd.f32 %v882, 1.0
  %v884 = vrcp.pop %v883
  %v885 = vmul.f32 %v883, %v884
  %v886 = vsub.f32 1.0, %v885
  %v887 = vmul.f32 %v884, %v886
  %v888 = vadd.f32 %v884, %v887
  %vm889 = vweird.f32 %v883
  %vm890 = vweird.f32 %v884
  %vm891 = vmor %vm889, %vm890
  %v892 = vsel %vm891, %v884, %v888
  %v893 = vand.u32 2147483647, %v883
  %vm894 = vcmp.eq.f32.partialorder %v893, 8.507059e+37
  %v895 = vand.u32 %v883, 2147483648
  %v896 = vor.u32 1.1754944e-38, %v895
  %v897 = vsel %vm894, %v896, %v892
  %v898 = vmul.f32 1.0, %v897
  %v899 = vtanh.pop %v859
  %v900 = vxor.u32 %v860, 2147483648
  %v901 = vmul.f32 %v900, 1.442695
  %v902 = vpow.pop %v901
  %v903 = vadd.f32 %v902, 1.0
  %v904 = vrcp.pop %v903
  %v905 = vmul.f32 %v903, %v904
  %v906 = vsub.f32 1.0, %v905
  %v907 = vmul.f32 %v904, %v906
  %v908 = vadd.f32 %v904, %v907
  %vm909 = vweird.f32 %v903
  %vm910 = vweird.f32 %v904
  %vm911 = vmor %vm909, %vm910
  %v912 = vsel %vm911, %v904, %v908
  %v913 = vand.u32 2147483647, %v903
  %vm914 = vcmp.eq.f32.partialorder %v913, 8.507059e+37
  %v915 = vand.u32 %v903, 2147483648
  %v916 = vor.u32 1.1754944e-38, %v915
  %v917 = vsel %vm914, %v916, %v912
  %v918 = vmul.f32 1.0, %v917
  %v919 = vmul.f32 %v898, %v772
  %v920 = vmul.f32 %v879, %v899
  %v921 = vadd.f32 %v919, %v920
  %v922 = vtanh.pop %v921
  %v923 = vmul.f32 %v918, %v922
  %vm924 = vcmp.gt.s32.totalorder %v44, 2
  %v925 = vsel %vm924, 1, 0
  %926 = vset.pattern.permute.xlu0 0
  %927 = vperm.xlu0 %926, %v925
  %v928 = vpop.permute.xlu0 %927
  %vm929 = vcmp.eq.s32.totalorder %v928, 1
  %v930 = vsel %vm929, %v923, %v771
  %931 = vst [vmem:[#allocation4] sm:$0xff] %v930
  %v932 = vsel %vm929, %v921, %v772
  %933 = vst [vmem:[#allocation5] sm:$0xff] %v932
  %v934 = vsel %vm929, %v923, 0.0
  %935 = vst [vmem:[#allocation3 + $0x10] sm:$0xff] %v934
  %v936 = vld [vmem:[#allocation4] sm:$0xff]
  %v937 = vld [vmem:[#allocation5] sm:$0xff]
  %v938 = vld [vmem:[#allocation2 + $0x60] sm:$0xff]
  %v939 = vld [vmem:[#allocation2 + $0x68] sm:$0xff]
  %v940 = vld [vmem:[#allocation2 + $0x70] sm:$0xff]
  %v941 = vld [vmem:[#allocation2 + $0x78] sm:$0xff]
  %942 = vmatpush.msra.mxu0 %v437
  %943 = vmatpush.msra.mxu0 %v433
  %944 = vmatpush.msra.mxu0 %v429
  %945 = vmatpush.msra.mxu0 %v425
  %946 = vmatpush.msra.mxu0 %v421
  %947 = vmatpush.msra.mxu0 %v417
  %948 = vmatpush.msra.mxu0 %v413
  %949 = vmatpush.msra.mxu0 %v409
  %950 = vmatpush.msra.mxu0 %v405
  %951 = vmatpush.msra.mxu0 %v401
  %952 = vmatpush.msra.mxu0 %v397
  %953 = vmatpush.msra.mxu0 %v393
  %954 = vmatpush.msra.mxu0 %v389
  %955 = vmatpush.msra.mxu0 %v385
  %956 = vmatpush.msra.mxu0 %v381
  %957 = vmatpush.msra.mxu0 %v377
  %958 = vmatmul.f32.gmra.mxu0 %v936
  %v959 = vpop.f32.mrf.mxu0
  %v960 = vadd.f32 0.0, %v959
  %961 = vdwg.mxu0
  %962 = vmatpush.msra.mxu0 %v438
  %963 = vmatpush.msra.mxu0 %v434
  %964 = vmatpush.msra.mxu0 %v430
  %965 = vmatpush.msra.mxu0 %v426
  %966 = vmatpush.msra.mxu0 %v422
  %967 = vmatpush.msra.mxu0 %v418
  %968 = vmatpush.msra.mxu0 %v414
  %969 = vmatpush.msra.mxu0 %v410
  %970 = vmatpush.msra.mxu0 %v406
  %971 = vmatpush.msra.mxu0 %v402
  %972 = vmatpush.msra.mxu0 %v398
  %973 = vmatpush.msra.mxu0 %v394
  %974 = vmatpush.msra.mxu0 %v390
  %975 = vmatpush.msra.mxu0 %v386
  %976 = vmatpush.msra.mxu0 %v382
  %977 = vmatpush.msra.mxu0 %v378
  %978 = vmatmul.f32.gmra.mxu0 %v936
  %v979 = vpop.f32.mrf.mxu0
  %v980 = vadd.f32 0.0, %v979
  %981 = vdwg.mxu0
  %982 = vmatpush.msra.mxu0 %v439
  %983 = vmatpush.msra.mxu0 %v435
  %984 = vmatpush.msra.mxu0 %v431
  %985 = vmatpush.msra.mxu0 %v427
  %986 = vmatpush.msra.mxu0 %v423
  %987 = vmatpush.msra.mxu0 %v419
  %988 = vmatpush.msra.mxu0 %v415
  %989 = vmatpush.msra.mxu0 %v411
  %990 = vmatpush.msra.mxu0 %v407
  %991 = vmatpush.msra.mxu0 %v403
  %992 = vmatpush.msra.mxu0 %v399
  %993 = vmatpush.msra.mxu0 %v395
  %994 = vmatpush.msra.mxu0 %v391
  %995 = vmatpush.msra.mxu0 %v387
  %996 = vmatpush.msra.mxu0 %v383
  %997 = vmatpush.msra.mxu0 %v379
  %998 = vmatmul.f32.gmra.mxu0 %v936
  %v999 = vpop.f32.mrf.mxu0
  %v1000 = vadd.f32 0.0, %v999
  %1001 = vdwg.mxu0
  %1002 = vmatpush.msra.mxu0 %v440
  %1003 = vmatpush.msra.mxu0 %v436
  %1004 = vmatpush.msra.mxu0 %v432
  %1005 = vmatpush.msra.mxu0 %v428
  %1006 = vmatpush.msra.mxu0 %v424
  %1007 = vmatpush.msra.mxu0 %v420
  %1008 = vmatpush.msra.mxu0 %v416
  %1009 = vmatpush.msra.mxu0 %v412
  %1010 = vmatpush.msra.mxu0 %v408
  %1011 = vmatpush.msra.mxu0 %v404
  %1012 = vmatpush.msra.mxu0 %v400
  %1013 = vmatpush.msra.mxu0 %v396
  %1014 = vmatpush.msra.mxu0 %v392
  %1015 = vmatpush.msra.mxu0 %v388
  %1016 = vmatpush.msra.mxu0 %v384
  %1017 = vmatpush.msra.mxu0 %v380
  %1018 = vmatmul.f32.gmra.mxu0 %v936
  %v1019 = vpop.f32.mrf.mxu0
  %v1020 = vadd.f32 0.0, %v1019
  %1021 = vdwg.mxu0
  %v1022 = vadd.f32 %v938, %v960
  %v1023 = vadd.f32 %v939, %v980
  %v1024 = vadd.f32 %v940, %v1000
  %v1025 = vadd.f32 %v941, %v1020
  %v1026 = vxor.u32 %v1022, 2147483648
  %v1027 = vmul.f32 %v1026, 1.442695
  %v1028 = vpow.pop %v1027
  %v1029 = vadd.f32 %v1028, 1.0
  %v1030 = vrcp.pop %v1029
  %v1031 = vmul.f32 %v1029, %v1030
  %v1032 = vsub.f32 1.0, %v1031
  %v1033 = vmul.f32 %v1030, %v1032
  %v1034 = vadd.f32 %v1030, %v1033
  %vm1035 = vweird.f32 %v1029
  %vm1036 = vweird.f32 %v1030
  %vm1037 = vmor %vm1035, %vm1036
  %v1038 = vsel %vm1037, %v1030, %v1034
  %v1039 = vand.u32 2147483647, %v1029
  %vm1040 = vcmp.eq.f32.partialorder %v1039, 8.507059e+37
  %v1041 = vand.u32 %v1029, 2147483648
  %v1042 = vor.u32 1.1754944e-38, %v1041
  %v1043 = vsel %vm1040, %v1042, %v1038
  %v1044 = vmul.f32 1.0, %v1043
  %v1045 = vxor.u32 %v1023, 2147483648
  %v1046 = vmul.f32 %v1045, 1.442695
  %v1047 = vpow.pop %v1046
  %v1048 = vadd.f32 %v1047, 1.0
  %v1049 = vrcp.pop %v1048
  %v1050 = vmul.f32 %v1048, %v1049
  %v1051 = vsub.f32 1.0, %v1050
  %v1052 = vmul.f32 %v1049, %v1051
  %v1053 = vadd.f32 %v1049, %v1052
  %vm1054 = vweird.f32 %v1048
  %vm1055 = vweird.f32 %v1049
  %vm1056 = vmor %vm1054, %vm1055
  %v1057 = vsel %vm1056, %v1049, %v1053
  %v1058 = vand.u32 2147483647, %v1048
  %vm1059 = vcmp.eq.f32.partialorder %v1058, 8.507059e+37
  %v1060 = vand.u32 %v1048, 2147483648
  %v1061 = vor.u32 1.1754944e-38, %v1060
  %v1062 = vsel %vm1059, %v1061, %v1057
  %v1063 = vmul.f32 1.0, %v1062
  %v1064 = vtanh.pop %v1024
  %v1065 = vxor.u32 %v1025, 2147483648
  %v1066 = vmul.f32 %v1065, 1.442695
  %v1067 = vpow.pop %v1066
  %v1068 = vadd.f32 %v1067, 1.0
  %v1069 = vrcp.pop %v1068
  %v1070 = vmul.f32 %v1068, %v1069
  %v1071 = vsub.f32 1.0, %v1070
  %v1072 = vmul.f32 %v1069, %v1071
  %v1073 = vadd.f32 %v1069, %v1072
  %vm1074 = vweird.f32 %v1068
  %vm1075 = vweird.f32 %v1069
  %vm1076 = vmor %vm1074, %vm1075
  %v1077 = vsel %vm1076, %v1069, %v1073
  %v1078 = vand.u32 2147483647, %v1068
  %vm1079 = vcmp.eq.f32.partialorder %v1078, 8.507059e+37
  %v1080 = vand.u32 %v1068, 2147483648
  %v1081 = vor.u32 1.1754944e-38, %v1080
  %v1082 = vsel %vm1079, %v1081, %v1077
  %v1083 = vmul.f32 1.0, %v1082
  %v1084 = vmul.f32 %v1063, %v937
  %v1085 = vmul.f32 %v1044, %v1064
  %v1086 = vadd.f32 %v1084, %v1085
  %v1087 = vtanh.pop %v1086
  %v1088 = vmul.f32 %v1083, %v1087
  %vm1089 = vcmp.gt.s32.totalorder %v44, 3
  %v1090 = vsel %vm1089, 1, 0
  %1091 = vset.pattern.permute.xlu0 0
  %1092 = vperm.xlu0 %1091, %v1090
  %v1093 = vpop.permute.xlu0 %1092
  %vm1094 = vcmp.eq.s32.totalorder %v1093, 1
  %v1095 = vsel %vm1094, %v1088, %v936
  %1096 = vst [vmem:[#allocation4] sm:$0xff] %v1095
  %v1097 = vsel %vm1094, %v1086, %v937
  %1098 = vst [vmem:[#allocation5] sm:$0xff] %v1097
  %v1099 = vsel %vm1094, %v1088, 0.0
  %1100 = vst [vmem:[#allocation3 + $0x18] sm:$0xff] %v1099
  %v1101 = vld [vmem:[#allocation4] sm:$0xff]
  %v1102 = vld [vmem:[#allocation5] sm:$0xff]
  %v1103 = vld [vmem:[#allocation2 + $0x80] sm:$0xff]
  %v1104 = vld [vmem:[#allocation2 + $0x88] sm:$0xff]
  %v1105 = vld [vmem:[#allocation2 + $0x90] sm:$0xff]
  %v1106 = vld [vmem:[#allocation2 + $0x98] sm:$0xff]
  %1107 = vmatpush.msra.mxu0 %v437
  %1108 = vmatpush.msra.mxu0 %v433
  %1109 = vmatpush.msra.mxu0 %v429
  %1110 = vmatpush.msra.mxu0 %v425
  %1111 = vmatpush.msra.mxu0 %v421
  %1112 = vmatpush.msra.mxu0 %v417
  %1113 = vmatpush.msra.mxu0 %v413
  %1114 = vmatpush.msra.mxu0 %v409
  %1115 = vmatpush.msra.mxu0 %v405
  %1116 = vmatpush.msra.mxu0 %v401
  %1117 = vmatpush.msra.mxu0 %v397
  %1118 = vmatpush.msra.mxu0 %v393
  %1119 = vmatpush.msra.mxu0 %v389
  %1120 = vmatpush.msra.mxu0 %v385
  %1121 = vmatpush.msra.mxu0 %v381
  %1122 = vmatpush.msra.mxu0 %v377
  %1123 = vmatmul.f32.gmra.mxu0 %v1101
  %v1124 = vpop.f32.mrf.mxu0
  %v1125 = vadd.f32 0.0, %v1124
  %1126 = vdwg.mxu0
  %1127 = vmatpush.msra.mxu0 %v438
  %1128 = vmatpush.msra.mxu0 %v434
  %1129 = vmatpush.msra.mxu0 %v430
  %1130 = vmatpush.msra.mxu0 %v426
  %1131 = vmatpush.msra.mxu0 %v422
  %1132 = vmatpush.msra.mxu0 %v418
  %1133 = vmatpush.msra.mxu0 %v414
  %1134 = vmatpush.msra.mxu0 %v410
  %1135 = vmatpush.msra.mxu0 %v406
  %1136 = vmatpush.msra.mxu0 %v402
  %1137 = vmatpush.msra.mxu0 %v398
  %1138 = vmatpush.msra.mxu0 %v394
  %1139 = vmatpush.msra.mxu0 %v390
  %1140 = vmatpush.msra.mxu0 %v386
  %1141 = vmatpush.msra.mxu0 %v382
  %1142 = vmatpush.msra.mxu0 %v378
  %1143 = vmatmul.f32.gmra.mxu0 %v1101
  %v1144 = vpop.f32.mrf.mxu0
  %v1145 = vadd.f32 0.0, %v1144
  %1146 = vdwg.mxu0
  %1147 = vmatpush.msra.mxu0 %v439
  %1148 = vmatpush.msra.mxu0 %v435
  %1149 = vmatpush.msra.mxu0 %v431
  %1150 = vmatpush.msra.mxu0 %v427
  %1151 = vmatpush.msra.mxu0 %v423
  %1152 = vmatpush.msra.mxu0 %v419
  %1153 = vmatpush.msra.mxu0 %v415
  %1154 = vmatpush.msra.mxu0 %v411
  %1155 = vmatpush.msra.mxu0 %v407
  %1156 = vmatpush.msra.mxu0 %v403
  %1157 = vmatpush.msra.mxu0 %v399
  %1158 = vmatpush.msra.mxu0 %v395
  %1159 = vmatpush.msra.mxu0 %v391
  %1160 = vmatpush.msra.mxu0 %v387
  %1161 = vmatpush.msra.mxu0 %v383
  %1162 = vmatpush.msra.mxu0 %v379
  %1163 = vmatmul.f32.gmra.mxu0 %v1101
  %v1164 = vpop.f32.mrf.mxu0
  %v1165 = vadd.f32 0.0, %v1164
  %1166 = vdwg.mxu0
  %1167 = vmatpush.msra.mxu0 %v440
  %1168 = vmatpush.msra.mxu0 %v436
  %1169 = vmatpush.msra.mxu0 %v432
  %1170 = vmatpush.msra.mxu0 %v428
  %1171 = vmatpush.msra.mxu0 %v424
  %1172 = vmatpush.msra.mxu0 %v420
  %1173 = vmatpush.msra.mxu0 %v416
  %1174 = vmatpush.msra.mxu0 %v412
  %1175 = vmatpush.msra.mxu0 %v408
  %1176 = vmatpush.msra.mxu0 %v404
  %1177 = vmatpush.msra.mxu0 %v400
  %1178 = vmatpush.msra.mxu0 %v396
  %1179 = vmatpush.msra.mxu0 %v392
  %1180 = vmatpush.msra.mxu0 %v388
  %1181 = vmatpush.msra.mxu0 %v384
  %1182 = vmatpush.msra.mxu0 %v380
  %1183 = vmatmul.f32.gmra.mxu0 %v1101
  %v1184 = vpop.f32.mrf.mxu0
  %v1185 = vadd.f32 0.0, %v1184
  %1186 = vdwg.mxu0
  %v1187 = vadd.f32 %v1103, %v1125
  %v1188 = vadd.f32 %v1104, %v1145
  %v1189 = vadd.f32 %v1105, %v1165
  %v1190 = vadd.f32 %v1106, %v1185
  %v1191 = vxor.u32 %v1187, 2147483648
  %v1192 = vmul.f32 %v1191, 1.442695
  %v1193 = vpow.pop %v1192
  %v1194 = vadd.f32 %v1193, 1.0
  %v1195 = vrcp.pop %v1194
  %v1196 = vmul.f32 %v1194, %v1195
  %v1197 = vsub.f32 1.0, %v1196
  %v1198 = vmul.f32 %v1195, %v1197
  %v1199 = vadd.f32 %v1195, %v1198
  %vm1200 = vweird.f32 %v1194
  %vm1201 = vweird.f32 %v1195
  %vm1202 = vmor %vm1200, %vm1201
  %v1203 = vsel %vm1202, %v1195, %v1199
  %v1204 = vand.u32 2147483647, %v1194
  %vm1205 = vcmp.eq.f32.partialorder %v1204, 8.507059e+37
  %v1206 = vand.u32 %v1194, 2147483648
  %v1207 = vor.u32 1.1754944e-38, %v1206
  %v1208 = vsel %vm1205, %v1207, %v1203
  %v1209 = vmul.f32 1.0, %v1208
  %v1210 = vxor.u32 %v1188, 2147483648
  %v1211 = vmul.f32 %v1210, 1.442695
  %v1212 = vpow.pop %v1211
  %v1213 = vadd.f32 %v1212, 1.0
  %v1214 = vrcp.pop %v1213
  %v1215 = vmul.f32 %v1213, %v1214
  %v1216 = vsub.f32 1.0, %v1215
  %v1217 = vmul.f32 %v1214, %v1216
  %v1218 = vadd.f32 %v1214, %v1217
  %vm1219 = vweird.f32 %v1213
  %vm1220 = vweird.f32 %v1214
  %vm1221 = vmor %vm1219, %vm1220
  %v1222 = vsel %vm1221, %v1214, %v1218
  %v1223 = vand.u32 2147483647, %v1213
  %vm1224 = vcmp.eq.f32.partialorder %v1223, 8.507059e+37
  %v1225 = vand.u32 %v1213, 2147483648
  %v1226 = vor.u32 1.1754944e-38, %v1225
  %v1227 = vsel %vm1224, %v1226, %v1222
  %v1228 = vmul.f32 1.0, %v1227
  %v1229 = vtanh.pop %v1189
  %v1230 = vxor.u32 %v1190, 2147483648
  %v1231 = vmul.f32 %v1230, 1.442695
  %v1232 = vpow.pop %v1231
  %v1233 = vadd.f32 %v1232, 1.0
  %v1234 = vrcp.pop %v1233
  %v1235 = vmul.f32 %v1233, %v1234
  %v1236 = vsub.f32 1.0, %v1235
  %v1237 = vmul.f32 %v1234, %v1236
  %v1238 = vadd.f32 %v1234, %v1237
  %vm1239 = vweird.f32 %v1233
  %vm1240 = vweird.f32 %v1234
  %vm1241 = vmor %vm1239, %vm1240
  %v1242 = vsel %vm1241, %v1234, %v1238
  %v1243 = vand.u32 2147483647, %v1233
  %vm1244 = vcmp.eq.f32.partialorder %v1243, 8.507059e+37
  %v1245 = vand.u32 %v1233, 2147483648
  %v1246 = vor.u32 1.1754944e-38, %v1245
  %v1247 = vsel %vm1244, %v1246, %v1242
  %v1248 = vmul.f32 1.0, %v1247
  %v1249 = vmul.f32 %v1228, %v1102
  %v1250 = vmul.f32 %v1209, %v1229
  %v1251 = vadd.f32 %v1249, %v1250
  %v1252 = vtanh.pop %v1251
  %v1253 = vmul.f32 %v1248, %v1252
  %vm1254 = vcmp.gt.s32.totalorder %v44, 4
  %v1255 = vsel %vm1254, 1, 0
  %1256 = vset.pattern.permute.xlu0 0
  %1257 = vperm.xlu0 %1256, %v1255
  %v1258 = vpop.permute.xlu0 %1257
  %vm1259 = vcmp.eq.s32.totalorder %v1258, 1
  %v1260 = vsel %vm1259, %v1253, %v1101
  %1261 = vst [vmem:[#allocation4] sm:$0xff] %v1260
  %v1262 = vsel %vm1259, %v1251, %v1102
  %1263 = vst [vmem:[#allocation5] sm:$0xff] %v1262
  %v1264 = vsel %vm1259, %v1253, 0.0
  %1265 = vst [vmem:[#allocation3 + $0x20] sm:$0xff] %v1264
  %v1266 = vld [vmem:[#allocation4] sm:$0xff]
  %v1267 = vld [vmem:[#allocation5] sm:$0xff]
  %v1268 = vld [vmem:[#allocation2 + $0xa0] sm:$0xff]
  %v1269 = vld [vmem:[#allocation2 + $0xa8] sm:$0xff]
  %v1270 = vld [vmem:[#allocation2 + $0xb0] sm:$0xff]
  %v1271 = vld [vmem:[#allocation2 + $0xb8] sm:$0xff]
  %1272 = vmatpush.msra.mxu0 %v437
  %1273 = vmatpush.msra.mxu0 %v433
  %1274 = vmatpush.msra.mxu0 %v429
  %1275 = vmatpush.msra.mxu0 %v425
  %1276 = vmatpush.msra.mxu0 %v421
  %1277 = vmatpush.msra.mxu0 %v417
  %1278 = vmatpush.msra.mxu0 %v413
  %1279 = vmatpush.msra.mxu0 %v409
  %1280 = vmatpush.msra.mxu0 %v405
  %1281 = vmatpush.msra.mxu0 %v401
  %1282 = vmatpush.msra.mxu0 %v397
  %1283 = vmatpush.msra.mxu0 %v393
  %1284 = vmatpush.msra.mxu0 %v389
  %1285 = vmatpush.msra.mxu0 %v385
  %1286 = vmatpush.msra.mxu0 %v381
  %1287 = vmatpush.msra.mxu0 %v377
  %1288 = vmatmul.f32.gmra.mxu0 %v1266
  %v1289 = vpop.f32.mrf.mxu0
  %v1290 = vadd.f32 0.0, %v1289
  %1291 = vdwg.mxu0
  %1292 = vmatpush.msra.mxu0 %v438
  %1293 = vmatpush.msra.mxu0 %v434
  %1294 = vmatpush.msra.mxu0 %v430
  %1295 = vmatpush.msra.mxu0 %v426
  %1296 = vmatpush.msra.mxu0 %v422
  %1297 = vmatpush.msra.mxu0 %v418
  %1298 = vmatpush.msra.mxu0 %v414
  %1299 = vmatpush.msra.mxu0 %v410
  %1300 = vmatpush.msra.mxu0 %v406
  %1301 = vmatpush.msra.mxu0 %v402
  %1302 = vmatpush.msra.mxu0 %v398
  %1303 = vmatpush.msra.mxu0 %v394
  %1304 = vmatpush.msra.mxu0 %v390
  %1305 = vmatpush.msra.mxu0 %v386
  %1306 = vmatpush.msra.mxu0 %v382
  %1307 = vmatpush.msra.mxu0 %v378
  %1308 = vmatmul.f32.gmra.mxu0 %v1266
  %v1309 = vpop.f32.mrf.mxu0
  %v1310 = vadd.f32 0.0, %v1309
  %1311 = vdwg.mxu0
  %1312 = vmatpush.msra.mxu0 %v439
  %1313 = vmatpush.msra.mxu0 %v435
  %1314 = vmatpush.msra.mxu0 %v431
  %1315 = vmatpush.msra.mxu0 %v427
  %1316 = vmatpush.msra.mxu0 %v423
  %1317 = vmatpush.msra.mxu0 %v419
  %1318 = vmatpush.msra.mxu0 %v415
  %1319 = vmatpush.msra.mxu0 %v411
  %1320 = vmatpush.msra.mxu0 %v407
  %1321 = vmatpush.msra.mxu0 %v403
  %1322 = vmatpush.msra.mxu0 %v399
  %1323 = vmatpush.msra.mxu0 %v395
  %1324 = vmatpush.msra.mxu0 %v391
  %1325 = vmatpush.msra.mxu0 %v387
  %1326 = vmatpush.msra.mxu0 %v383
  %1327 = vmatpush.msra.mxu0 %v379
  %1328 = vmatmul.f32.gmra.mxu0 %v1266
  %v1329 = vpop.f32.mrf.mxu0
  %v1330 = vadd.f32 0.0, %v1329
  %1331 = vdwg.mxu0
  %1332 = vmatpush.msra.mxu0 %v440
  %1333 = vmatpush.msra.mxu0 %v436
  %1334 = vmatpush.msra.mxu0 %v432
  %1335 = vmatpush.msra.mxu0 %v428
  %1336 = vmatpush.msra.mxu0 %v424
  %1337 = vmatpush.msra.mxu0 %v420
  %1338 = vmatpush.msra.mxu0 %v416
  %1339 = vmatpush.msra.mxu0 %v412
  %1340 = vmatpush.msra.mxu0 %v408
  %1341 = vmatpush.msra.mxu0 %v404
  %1342 = vmatpush.msra.mxu0 %v400
  %1343 = vmatpush.msra.mxu0 %v396
  %1344 = vmatpush.msra.mxu0 %v392
  %1345 = vmatpush.msra.mxu0 %v388
  %1346 = vmatpush.msra.mxu0 %v384
  %1347 = vmatpush.msra.mxu0 %v380
  %1348 = vmatmul.f32.gmra.mxu0 %v1266
  %v1349 = vpop.f32.mrf.mxu0
  %v1350 = vadd.f32 0.0, %v1349
  %1351 = vdwg.mxu0
  %v1352 = vadd.f32 %v1268, %v1290
  %v1353 = vadd.f32 %v1269, %v1310
  %v1354 = vadd.f32 %v1270, %v1330
  %v1355 = vadd.f32 %v1271, %v1350
  %v1356 = vxor.u32 %v1352, 2147483648
  %v1357 = vmul.f32 %v1356, 1.442695
  %v1358 = vpow.pop %v1357
  %v1359 = vadd.f32 %v1358, 1.0
  %v1360 = vrcp.pop %v1359
  %v1361 = vmul.f32 %v1359, %v1360
  %v1362 = vsub.f32 1.0, %v1361
  %v1363 = vmul.f32 %v1360, %v1362
  %v1364 = vadd.f32 %v1360, %v1363
  %vm1365 = vweird.f32 %v1359
  %vm1366 = vweird.f32 %v1360
  %vm1367 = vmor %vm1365, %vm1366
  %v1368 = vsel %vm1367, %v1360, %v1364
  %v1369 = vand.u32 2147483647, %v1359
  %vm1370 = vcmp.eq.f32.partialorder %v1369, 8.507059e+37
  %v1371 = vand.u32 %v1359, 2147483648
  %v1372 = vor.u32 1.1754944e-38, %v1371
  %v1373 = vsel %vm1370, %v1372, %v1368
  %v1374 = vmul.f32 1.0, %v1373
  %v1375 = vxor.u32 %v1353, 2147483648
  %v1376 = vmul.f32 %v1375, 1.442695
  %v1377 = vpow.pop %v1376
  %v1378 = vadd.f32 %v1377, 1.0
  %v1379 = vrcp.pop %v1378
  %v1380 = vmul.f32 %v1378, %v1379
  %v1381 = vsub.f32 1.0, %v1380
  %v1382 = vmul.f32 %v1379, %v1381
  %v1383 = vadd.f32 %v1379, %v1382
  %vm1384 = vweird.f32 %v1378
  %vm1385 = vweird.f32 %v1379
  %vm1386 = vmor %vm1384, %vm1385
  %v1387 = vsel %vm1386, %v1379, %v1383
  %v1388 = vand.u32 2147483647, %v1378
  %vm1389 = vcmp.eq.f32.partialorder %v1388, 8.507059e+37
  %v1390 = vand.u32 %v1378, 2147483648
  %v1391 = vor.u32 1.1754944e-38, %v1390
  %v1392 = vsel %vm1389, %v1391, %v1387
  %v1393 = vmul.f32 1.0, %v1392
  %v1394 = vtanh.pop %v1354
  %v1395 = vxor.u32 %v1355, 2147483648
  %v1396 = vmul.f32 %v1395, 1.442695
  %v1397 = vpow.pop %v1396
  %v1398 = vadd.f32 %v1397, 1.0
  %v1399 = vrcp.pop %v1398
  %v1400 = vmul.f32 %v1398, %v1399
  %v1401 = vsub.f32 1.0, %v1400
  %v1402 = vmul.f32 %v1399, %v1401
  %v1403 = vadd.f32 %v1399, %v1402
  %vm1404 = vweird.f32 %v1398
  %vm1405 = vweird.f32 %v1399
  %vm1406 = vmor %vm1404, %vm1405
  %v1407 = vsel %vm1406, %v1399, %v1403
  %v1408 = vand.u32 2147483647, %v1398
  %vm1409 = vcmp.eq.f32.partialorder %v1408, 8.507059e+37
  %v1410 = vand.u32 %v1398, 2147483648
  %v1411 = vor.u32 1.1754944e-38, %v1410
  %v1412 = vsel %vm1409, %v1411, %v1407
  %v1413 = vmul.f32 1.0, %v1412
  %v1414 = vmul.f32 %v1393, %v1267
  %v1415 = vmul.f32 %v1374, %v1394
  %v1416 = vadd.f32 %v1414, %v1415
  %v1417 = vtanh.pop %v1416
  %v1418 = vmul.f32 %v1413, %v1417
  %vm1419 = vcmp.gt.s32.totalorder %v44, 5
  %v1420 = vsel %vm1419, 1, 0
  %1421 = vset.pattern.permute.xlu0 0
  %1422 = vperm.xlu0 %1421, %v1420
  %v1423 = vpop.permute.xlu0 %1422
  %vm1424 = vcmp.eq.s32.totalorder %v1423, 1
  %v1425 = vsel %vm1424, %v1418, %v1266
  %1426 = vst [vmem:[#allocation4] sm:$0xff] %v1425
  %v1427 = vsel %vm1424, %v1416, %v1267
  %1428 = vst [vmem:[#allocation5] sm:$0xff] %v1427
  %v1429 = vsel %vm1424, %v1418, 0.0
  %1430 = vst [vmem:[#allocation3 + $0x28] sm:$0xff] %v1429
  %v1431 = vld [vmem:[#allocation4] sm:$0xff]
  %v1432 = vld [vmem:[#allocation5] sm:$0xff]
  %v1433 = vld [vmem:[#allocation2 + $0xc0] sm:$0xff]
  %v1434 = vld [vmem:[#allocation2 + $0xc8] sm:$0xff]
  %v1435 = vld [vmem:[#allocation2 + $0xd0] sm:$0xff]
  %v1436 = vld [vmem:[#allocation2 + $0xd8] sm:$0xff]
  %1437 = vmatpush.msra.mxu0 %v437
  %1438 = vmatpush.msra.mxu0 %v433
  %1439 = vmatpush.msra.mxu0 %v429
  %1440 = vmatpush.msra.mxu0 %v425
  %1441 = vmatpush.msra.mxu0 %v421
  %1442 = vmatpush.msra.mxu0 %v417
  %1443 = vmatpush.msra.mxu0 %v413
  %1444 = vmatpush.msra.mxu0 %v409
  %1445 = vmatpush.msra.mxu0 %v405
  %1446 = vmatpush.msra.mxu0 %v401
  %1447 = vmatpush.msra.mxu0 %v397
  %1448 = vmatpush.msra.mxu0 %v393
  %1449 = vmatpush.msra.mxu0 %v389
  %1450 = vmatpush.msra.mxu0 %v385
  %1451 = vmatpush.msra.mxu0 %v381
  %1452 = vmatpush.msra.mxu0 %v377
  %1453 = vmatmul.f32.gmra.mxu0 %v1431
  %v1454 = vpop.f32.mrf.mxu0
  %v1455 = vadd.f32 0.0, %v1454
  %1456 = vdwg.mxu0
  %1457 = vmatpush.msra.mxu0 %v438
  %1458 = vmatpush.msra.mxu0 %v434
  %1459 = vmatpush.msra.mxu0 %v430
  %1460 = vmatpush.msra.mxu0 %v426
  %1461 = vmatpush.msra.mxu0 %v422
  %1462 = vmatpush.msra.mxu0 %v418
  %1463 = vmatpush.msra.mxu0 %v414
  %1464 = vmatpush.msra.mxu0 %v410
  %1465 = vmatpush.msra.mxu0 %v406
  %1466 = vmatpush.msra.mxu0 %v402
  %1467 = vmatpush.msra.mxu0 %v398
  %1468 = vmatpush.msra.mxu0 %v394
  %1469 = vmatpush.msra.mxu0 %v390
  %1470 = vmatpush.msra.mxu0 %v386
  %1471 = vmatpush.msra.mxu0 %v382
  %1472 = vmatpush.msra.mxu0 %v378
  %1473 = vmatmul.f32.gmra.mxu0 %v1431
  %v1474 = vpop.f32.mrf.mxu0
  %v1475 = vadd.f32 0.0, %v1474
  %1476 = vdwg.mxu0
  %1477 = vmatpush.msra.mxu0 %v439
  %1478 = vmatpush.msra.mxu0 %v435
  %1479 = vmatpush.msra.mxu0 %v431
  %1480 = vmatpush.msra.mxu0 %v427
  %1481 = vmatpush.msra.mxu0 %v423
  %1482 = vmatpush.msra.mxu0 %v419
  %1483 = vmatpush.msra.mxu0 %v415
  %1484 = vmatpush.msra.mxu0 %v411
  %1485 = vmatpush.msra.mxu0 %v407
  %1486 = vmatpush.msra.mxu0 %v403
  %1487 = vmatpush.msra.mxu0 %v399
  %1488 = vmatpush.msra.mxu0 %v395
  %1489 = vmatpush.msra.mxu0 %v391
  %1490 = vmatpush.msra.mxu0 %v387
  %1491 = vmatpush.msra.mxu0 %v383
  %1492 = vmatpush.msra.mxu0 %v379
  %1493 = vmatmul.f32.gmra.mxu0 %v1431
  %v1494 = vpop.f32.mrf.mxu0
  %v1495 = vadd.f32 0.0, %v1494
  %1496 = vdwg.mxu0
  %1497 = vmatpush.msra.mxu0 %v440
  %1498 = vmatpush.msra.mxu0 %v436
  %1499 = vmatpush.msra.mxu0 %v432
  %1500 = vmatpush.msra.mxu0 %v428
  %1501 = vmatpush.msra.mxu0 %v424
  %1502 = vmatpush.msra.mxu0 %v420
  %1503 = vmatpush.msra.mxu0 %v416
  %1504 = vmatpush.msra.mxu0 %v412
  %1505 = vmatpush.msra.mxu0 %v408
  %1506 = vmatpush.msra.mxu0 %v404
  %1507 = vmatpush.msra.mxu0 %v400
  %1508 = vmatpush.msra.mxu0 %v396
  %1509 = vmatpush.msra.mxu0 %v392
  %1510 = vmatpush.msra.mxu0 %v388
  %1511 = vmatpush.msra.mxu0 %v384
  %1512 = vmatpush.msra.mxu0 %v380
  %1513 = vmatmul.f32.gmra.mxu0 %v1431
  %v1514 = vpop.f32.mrf.mxu0
  %v1515 = vadd.f32 0.0, %v1514
  %1516 = vdwg.mxu0
  %v1517 = vadd.f32 %v1433, %v1455
  %v1518 = vadd.f32 %v1434, %v1475
  %v1519 = vadd.f32 %v1435, %v1495
  %v1520 = vadd.f32 %v1436, %v1515
  %v1521 = vxor.u32 %v1517, 2147483648
  %v1522 = vmul.f32 %v1521, 1.442695
  %v1523 = vpow.pop %v1522
  %v1524 = vadd.f32 %v1523, 1.0
  %v1525 = vrcp.pop %v1524
  %v1526 = vmul.f32 %v1524, %v1525
  %v1527 = vsub.f32 1.0, %v1526
  %v1528 = vmul.f32 %v1525, %v1527
  %v1529 = vadd.f32 %v1525, %v1528
  %vm1530 = vweird.f32 %v1524
  %vm1531 = vweird.f32 %v1525
  %vm1532 = vmor %vm1530, %vm1531
  %v1533 = vsel %vm1532, %v1525, %v1529
  %v1534 = vand.u32 2147483647, %v1524
  %vm1535 = vcmp.eq.f32.partialorder %v1534, 8.507059e+37
  %v1536 = vand.u32 %v1524, 2147483648
  %v1537 = vor.u32 1.1754944e-38, %v1536
  %v1538 = vsel %vm1535, %v1537, %v1533
  %v1539 = vmul.f32 1.0, %v1538
  %v1540 = vxor.u32 %v1518, 2147483648
  %v1541 = vmul.f32 %v1540, 1.442695
  %v1542 = vpow.pop %v1541
  %v1543 = vadd.f32 %v1542, 1.0
  %v1544 = vrcp.pop %v1543
  %v1545 = vmul.f32 %v1543, %v1544
  %v1546 = vsub.f32 1.0, %v1545
  %v1547 = vmul.f32 %v1544, %v1546
  %v1548 = vadd.f32 %v1544, %v1547
  %vm1549 = vweird.f32 %v1543
  %vm1550 = vweird.f32 %v1544
  %vm1551 = vmor %vm1549, %vm1550
  %v1552 = vsel %vm1551, %v1544, %v1548
  %v1553 = vand.u32 2147483647, %v1543
  %vm1554 = vcmp.eq.f32.partialorder %v1553, 8.507059e+37
  %v1555 = vand.u32 %v1543, 2147483648
  %v1556 = vor.u32 1.1754944e-38, %v1555
  %v1557 = vsel %vm1554, %v1556, %v1552
  %v1558 = vmul.f32 1.0, %v1557
  %v1559 = vtanh.pop %v1519
  %v1560 = vxor.u32 %v1520, 2147483648
  %v1561 = vmul.f32 %v1560, 1.442695
  %v1562 = vpow.pop %v1561
  %v1563 = vadd.f32 %v1562, 1.0
  %v1564 = vrcp.pop %v1563
  %v1565 = vmul.f32 %v1563, %v1564
  %v1566 = vsub.f32 1.0, %v1565
  %v1567 = vmul.f32 %v1564, %v1566
  %v1568 = vadd.f32 %v1564, %v1567
  %vm1569 = vweird.f32 %v1563
  %vm1570 = vweird.f32 %v1564
  %vm1571 = vmor %vm1569, %vm1570
  %v1572 = vsel %vm1571, %v1564, %v1568
  %v1573 = vand.u32 2147483647, %v1563
  %vm1574 = vcmp.eq.f32.partialorder %v1573, 8.507059e+37
  %v1575 = vand.u32 %v1563, 2147483648
  %v1576 = vor.u32 1.1754944e-38, %v1575
  %v1577 = vsel %vm1574, %v1576, %v1572
  %v1578 = vmul.f32 1.0, %v1577
  %v1579 = vmul.f32 %v1558, %v1432
  %v1580 = vmul.f32 %v1539, %v1559
  %v1581 = vadd.f32 %v1579, %v1580
  %v1582 = vtanh.pop %v1581
  %v1583 = vmul.f32 %v1578, %v1582
  %vm1584 = vcmp.gt.s32.totalorder %v44, 6
  %v1585 = vsel %vm1584, 1, 0
  %1586 = vset.pattern.permute.xlu0 0
  %1587 = vperm.xlu0 %1586, %v1585
  %v1588 = vpop.permute.xlu0 %1587
  %vm1589 = vcmp.eq.s32.totalorder %v1588, 1
  %v1590 = vsel %vm1589, %v1583, %v1431
  %1591 = vst [vmem:[#allocation4] sm:$0xff] %v1590
  %v1592 = vsel %vm1589, %v1581, %v1432
  %1593 = vst [vmem:[#allocation5] sm:$0xff] %v1592
  %v1594 = vsel %vm1589, %v1583, 0.0
  %1595 = vst [vmem:[#allocation3 + $0x30] sm:$0xff] %v1594
  %v1596 = vld [vmem:[#allocation4] sm:$0xff]
  %v1597 = vld [vmem:[#allocation5] sm:$0xff]
  %v1598 = vld [vmem:[#allocation2 + $0xe0] sm:$0xff]
  %v1599 = vld [vmem:[#allocation2 + $0xe8] sm:$0xff]
  %v1600 = vld [vmem:[#allocation2 + $0xf0] sm:$0xff]
  %v1601 = vld [vmem:[#allocation2 + $0xf8] sm:$0xff]
  %1602 = vmatpush.msra.mxu0 %v437
  %1603 = vmatpush.msra.mxu0 %v433
  %1604 = vmatpush.msra.mxu0 %v429
  %1605 = vmatpush.msra.mxu0 %v425
  %1606 = vmatpush.msra.mxu0 %v421
  %1607 = vmatpush.msra.mxu0 %v417
  %1608 = vmatpush.msra.mxu0 %v413
  %1609 = vmatpush.msra.mxu0 %v409
  %1610 = vmatpush.msra.mxu0 %v405
  %1611 = vmatpush.msra.mxu0 %v401
  %1612 = vmatpush.msra.mxu0 %v397
  %1613 = vmatpush.msra.mxu0 %v393
  %1614 = vmatpush.msra.mxu0 %v389
  %1615 = vmatpush.msra.mxu0 %v385
  %1616 = vmatpush.msra.mxu0 %v381
  %1617 = vmatpush.msra.mxu0 %v377
  %1618 = vmatmul.f32.gmra.mxu0 %v1596
  %v1619 = vpop.f32.mrf.mxu0
  %v1620 = vadd.f32 0.0, %v1619
  %1621 = vdwg.mxu0
  %1622 = vmatpush.msra.mxu0 %v438
  %1623 = vmatpush.msra.mxu0 %v434
  %1624 = vmatpush.msra.mxu0 %v430
  %1625 = vmatpush.msra.mxu0 %v426
  %1626 = vmatpush.msra.mxu0 %v422
  %1627 = vmatpush.msra.mxu0 %v418
  %1628 = vmatpush.msra.mxu0 %v414
  %1629 = vmatpush.msra.mxu0 %v410
  %1630 = vmatpush.msra.mxu0 %v406
  %1631 = vmatpush.msra.mxu0 %v402
  %1632 = vmatpush.msra.mxu0 %v398
  %1633 = vmatpush.msra.mxu0 %v394
  %1634 = vmatpush.msra.mxu0 %v390
  %1635 = vmatpush.msra.mxu0 %v386
  %1636 = vmatpush.msra.mxu0 %v382
  %1637 = vmatpush.msra.mxu0 %v378
  %1638 = vmatmul.f32.gmra.mxu0 %v1596
  %v1639 = vpop.f32.mrf.mxu0
  %v1640 = vadd.f32 0.0, %v1639
  %1641 = vdwg.mxu0
  %1642 = vmatpush.msra.mxu0 %v439
  %1643 = vmatpush.msra.mxu0 %v435
  %1644 = vmatpush.msra.mxu0 %v431
  %1645 = vmatpush.msra.mxu0 %v427
  %1646 = vmatpush.msra.mxu0 %v423
  %1647 = vmatpush.msra.mxu0 %v419
  %1648 = vmatpush.msra.mxu0 %v415
  %1649 = vmatpush.msra.mxu0 %v411
  %1650 = vmatpush.msra.mxu0 %v407
  %1651 = vmatpush.msra.mxu0 %v403
  %1652 = vmatpush.msra.mxu0 %v399
  %1653 = vmatpush.msra.mxu0 %v395
  %1654 = vmatpush.msra.mxu0 %v391
  %1655 = vmatpush.msra.mxu0 %v387
  %1656 = vmatpush.msra.mxu0 %v383
  %1657 = vmatpush.msra.mxu0 %v379
  %1658 = vmatmul.f32.gmra.mxu0 %v1596
  %v1659 = vpop.f32.mrf.mxu0
  %v1660 = vadd.f32 0.0, %v1659
  %1661 = vdwg.mxu0
  %1662 = vmatpush.msra.mxu0 %v440
  %1663 = vmatpush.msra.mxu0 %v436
  %1664 = vmatpush.msra.mxu0 %v432
  %1665 = vmatpush.msra.mxu0 %v428
  %1666 = vmatpush.msra.mxu0 %v424
  %1667 = vmatpush.msra.mxu0 %v420
  %1668 = vmatpush.msra.mxu0 %v416
  %1669 = vmatpush.msra.mxu0 %v412
  %1670 = vmatpush.msra.mxu0 %v408
  %1671 = vmatpush.msra.mxu0 %v404
  %1672 = vmatpush.msra.mxu0 %v400
  %1673 = vmatpush.msra.mxu0 %v396
  %1674 = vmatpush.msra.mxu0 %v392
  %1675 = vmatpush.msra.mxu0 %v388
  %1676 = vmatpush.msra.mxu0 %v384
  %1677 = vmatpush.msra.mxu0 %v380
  %1678 = vmatmul.f32.gmra.mxu0 %v1596
  %v1679 = vpop.f32.mrf.mxu0
  %v1680 = vadd.f32 0.0, %v1679
  %1681 = vdwg.mxu0
  %v1682 = vadd.f32 %v1598, %v1620
  %v1683 = vadd.f32 %v1599, %v1640
  %v1684 = vadd.f32 %v1600, %v1660
  %v1685 = vadd.f32 %v1601, %v1680
  %v1686 = vxor.u32 %v1682, 2147483648
  %v1687 = vmul.f32 %v1686, 1.442695
  %v1688 = vpow.pop %v1687
  %v1689 = vadd.f32 %v1688, 1.0
  %v1690 = vrcp.pop %v1689
  %v1691 = vmul.f32 %v1689, %v1690
  %v1692 = vsub.f32 1.0, %v1691
  %v1693 = vmul.f32 %v1690, %v1692
  %v1694 = vadd.f32 %v1690, %v1693
  %vm1695 = vweird.f32 %v1689
  %vm1696 = vweird.f32 %v1690
  %vm1697 = vmor %vm1695, %vm1696
  %v1698 = vsel %vm1697, %v1690, %v1694
  %v1699 = vand.u32 2147483647, %v1689
  %vm1700 = vcmp.eq.f32.partialorder %v1699, 8.507059e+37
  %v1701 = vand.u32 %v1689, 2147483648
  %v1702 = vor.u32 1.1754944e-38, %v1701
  %v1703 = vsel %vm1700, %v1702, %v1698
  %v1704 = vmul.f32 1.0, %v1703
  %v1705 = vxor.u32 %v1683, 2147483648
  %v1706 = vmul.f32 %v1705, 1.442695
  %v1707 = vpow.pop %v1706
  %v1708 = vadd.f32 %v1707, 1.0
  %v1709 = vrcp.pop %v1708
  %v1710 = vmul.f32 %v1708, %v1709
  %v1711 = vsub.f32 1.0, %v1710
  %v1712 = vmul.f32 %v1709, %v1711
  %v1713 = vadd.f32 %v1709, %v1712
  %vm1714 = vweird.f32 %v1708
  %vm1715 = vweird.f32 %v1709
  %vm1716 = vmor %vm1714, %vm1715
  %v1717 = vsel %vm1716, %v1709, %v1713
  %v1718 = vand.u32 2147483647, %v1708
  %vm1719 = vcmp.eq.f32.partialorder %v1718, 8.507059e+37
  %v1720 = vand.u32 %v1708, 2147483648
  %v1721 = vor.u32 1.1754944e-38, %v1720
  %v1722 = vsel %vm1719, %v1721, %v1717
  %v1723 = vmul.f32 1.0, %v1722
  %v1724 = vtanh.pop %v1684
  %v1725 = vxor.u32 %v1685, 2147483648
  %v1726 = vmul.f32 %v1725, 1.442695
  %v1727 = vpow.pop %v1726
  %v1728 = vadd.f32 %v1727, 1.0
  %v1729 = vrcp.pop %v1728
  %v1730 = vmul.f32 %v1728, %v1729
  %v1731 = vsub.f32 1.0, %v1730
  %v1732 = vmul.f32 %v1729, %v1731
  %v1733 = vadd.f32 %v1729, %v1732
  %vm1734 = vweird.f32 %v1728
  %vm1735 = vweird.f32 %v1729
  %vm1736 = vmor %vm1734, %vm1735
  %v1737 = vsel %vm1736, %v1729, %v1733
  %v1738 = vand.u32 2147483647, %v1728
  %vm1739 = vcmp.eq.f32.partialorder %v1738, 8.507059e+37
  %v1740 = vand.u32 %v1728, 2147483648
  %v1741 = vor.u32 1.1754944e-38, %v1740
  %v1742 = vsel %vm1739, %v1741, %v1737
  %v1743 = vmul.f32 1.0, %v1742
  %v1744 = vmul.f32 %v1723, %v1597
  %v1745 = vmul.f32 %v1704, %v1724
  %v1746 = vadd.f32 %v1744, %v1745
  %v1747 = vtanh.pop %v1746
  %v1748 = vmul.f32 %v1743, %v1747
  %vm1749 = vcmp.gt.s32.totalorder %v44, 7
  %v1750 = vsel %vm1749, 1, 0
  %1751 = vset.pattern.permute.xlu0 0
  %1752 = vperm.xlu0 %1751, %v1750
  %v1753 = vpop.permute.xlu0 %1752
  %vm1754 = vcmp.eq.s32.totalorder %v1753, 1
  %v1755 = vsel %vm1754, %v1748, %v1596
  %1756 = vst [vmem:[#allocation4] sm:$0xff] %v1755
  %v1757 = vsel %vm1754, %v1746, %v1597
  %1758 = vst [vmem:[#allocation5] sm:$0xff] %v1757
  %v1759 = vsel %vm1754, %v1748, 0.0
  %1760 = vst [vmem:[#allocation3 + $0x38] sm:$0xff] %v1759
  %v1761 = vld [vmem:[#allocation4] sm:$0xff]
  %1762 = vst [vmem:[%s13] sm:$0xff] %v1761
  %v1763 = vld [vmem:[#allocation5] sm:$0xff]
  %1764 = vst [vmem:[%s14] sm:$0xff] %v1763
  %v1765 = vld [vmem:[#allocation3] sm:$0xff]
  %v1766 = vld [vmem:[#allocation3 + $0x8] sm:$0xff]
  %v1767 = vld [vmem:[#allocation3 + $0x10] sm:$0xff]
  %v1768 = vld [vmem:[#allocation3 + $0x18] sm:$0xff]
  %v1769 = vld [vmem:[#allocation3 + $0x20] sm:$0xff]
  %v1770 = vld [vmem:[#allocation3 + $0x28] sm:$0xff]
  %v1771 = vld [vmem:[#allocation3 + $0x30] sm:$0xff]
  %v1772 = vld [vmem:[#allocation3 + $0x38] sm:$0xff]
  %v1773 = vld [vmem:[%s5] sm:$0xff]
  %v1774 = vld [vmem:[%s5 + $0x8] sm:$0xff]
  %v1775 = vld [vmem:[%s5 + $0x10] sm:$0xff]
  %v1776 = vld [vmem:[%s5 + $0x18] sm:$0xff]
  %v1777 = vld [vmem:[%s5 + $0x20] sm:$0xff]
  %v1778 = vld [vmem:[%s5 + $0x28] sm:$0xff]
  %v1779 = vld [vmem:[%s5 + $0x30] sm:$0xff]
  %v1780 = vld [vmem:[%s5 + $0x38] sm:$0xff]
  %v1781 = vld [vmem:[%s5 + $0x40] sm:$0xff]
  %v1782 = vld [vmem:[%s5 + $0x48] sm:$0xff]
  %v1783 = vld [vmem:[%s5 + $0x50] sm:$0xff]
  %v1784 = vld [vmem:[%s5 + $0x58] sm:$0xff]
  %v1785 = vld [vmem:[%s5 + $0x60] sm:$0xff]
  %v1786 = vld [vmem:[%s5 + $0x68] sm:$0xff]
  %v1787 = vld [vmem:[%s5 + $0x70] sm:$0xff]
  %v1788 = vld [vmem:[%s5 + $0x78] sm:$0xff]
  %v1789 = vld [vmem:[%s5 + $0x80] sm:$0xff]
  %v1790 = vld [vmem:[%s5 + $0x88] sm:$0xff]
  %v1791 = vld [vmem:[%s5 + $0x90] sm:$0xff]
  %v1792 = vld [vmem:[%s5 + $0x98] sm:$0xff]
  %v1793 = vld [vmem:[%s5 + $0xa0] sm:$0xff]
  %v1794 = vld [vmem:[%s5 + $0xa8] sm:$0xff]
  %v1795 = vld [vmem:[%s5 + $0xb0] sm:$0xff]
  %v1796 = vld [vmem:[%s5 + $0xb8] sm:$0xff]
  %v1797 = vld [vmem:[%s5 + $0xc0] sm:$0xff]
  %v1798 = vld [vmem:[%s5 + $0xc8] sm:$0xff]
  %v1799 = vld [vmem:[%s5 + $0xd0] sm:$0xff]
  %v1800 = vld [vmem:[%s5 + $0xd8] sm:$0xff]
  %v1801 = vld [vmem:[%s5 + $0xe0] sm:$0xff]
  %v1802 = vld [vmem:[%s5 + $0xe8] sm:$0xff]
  %v1803 = vld [vmem:[%s5 + $0xf0] sm:$0xff]
  %v1804 = vld [vmem:[%s5 + $0xf8] sm:$0xff]
  %v1805 = vld [vmem:[%s5 + $0x100] sm:$0xff]
  %v1806 = vld [vmem:[%s5 + $0x108] sm:$0xff]
  %v1807 = vld [vmem:[%s5 + $0x110] sm:$0xff]
  %v1808 = vld [vmem:[%s5 + $0x118] sm:$0xff]
  %v1809 = vld [vmem:[%s5 + $0x120] sm:$0xff]
  %v1810 = vld [vmem:[%s5 + $0x128] sm:$0xff]
  %v1811 = vld [vmem:[%s5 + $0x130] sm:$0xff]
  %v1812 = vld [vmem:[%s5 + $0x138] sm:$0xff]
  %v1813 = vld [vmem:[%s5 + $0x140] sm:$0xff]
  %v1814 = vld [vmem:[%s5 + $0x148] sm:$0xff]
  %v1815 = vld [vmem:[%s5 + $0x150] sm:$0xff]
  %v1816 = vld [vmem:[%s5 + $0x158] sm:$0xff]
  %v1817 = vld [vmem:[%s5 + $0x160] sm:$0xff]
  %v1818 = vld [vmem:[%s5 + $0x168] sm:$0xff]
  %v1819 = vld [vmem:[%s5 + $0x170] sm:$0xff]
  %v1820 = vld [vmem:[%s5 + $0x178] sm:$0xff]
  %v1821 = vld [vmem:[%s5 + $0x180] sm:$0xff]
  %v1822 = vld [vmem:[%s5 + $0x188] sm:$0xff]
  %v1823 = vld [vmem:[%s5 + $0x190] sm:$0xff]
  %v1824 = vld [vmem:[%s5 + $0x198] sm:$0xff]
  %v1825 = vld [vmem:[%s5 + $0x1a0] sm:$0xff]
  %v1826 = vld [vmem:[%s5 + $0x1a8] sm:$0xff]
  %v1827 = vld [vmem:[%s5 + $0x1b0] sm:$0xff]
  %v1828 = vld [vmem:[%s5 + $0x1b8] sm:$0xff]
  %v1829 = vld [vmem:[%s5 + $0x1c0] sm:$0xff]
  %v1830 = vld [vmem:[%s5 + $0x1c8] sm:$0xff]
  %v1831 = vld [vmem:[%s5 + $0x1d0] sm:$0xff]
  %v1832 = vld [vmem:[%s5 + $0x1d8] sm:$0xff]
  %v1833 = vld [vmem:[%s5 + $0x1e0] sm:$0xff]
  %v1834 = vld [vmem:[%s5 + $0x1e8] sm:$0xff]
  %v1835 = vld [vmem:[%s5 + $0x1f0] sm:$0xff]
  %v1836 = vld [vmem:[%s5 + $0x1f8] sm:$0xff]
  %v1837 = vld [vmem:[%s7] sm:$0xf]
  %v1839 = vperm.slane %v1837, 0
  %v1840 = vperm.slane %v1837, 1
  %v1841 = vperm.slane %v1837, 2
  %v1842 = vperm.slane %v1837, 3
  %1847 = vmatpush.msra.mxu0 %v1833
  %1848 = vmatpush.msra.mxu0 %v1829
  %1849 = vmatpush.msra.mxu0 %v1825
  %1850 = vmatpush.msra.mxu0 %v1821
  %1851 = vmatpush.msra.mxu0 %v1817
  %1852 = vmatpush.msra.mxu0 %v1813
  %1853 = vmatpush.msra.mxu0 %v1809
  %1854 = vmatpush.msra.mxu0 %v1805
  %1855 = vmatpush.msra.mxu0 %v1801
  %1856 = vmatpush.msra.mxu0 %v1797
  %1857 = vmatpush.msra.mxu0 %v1793
  %1858 = vmatpush.msra.mxu0 %v1789
  %1859 = vmatpush.msra.mxu0 %v1785
  %1860 = vmatpush.msra.mxu0 %v1781
  %1861 = vmatpush.msra.mxu0 %v1777
  %1862 = vmatpush.msra.mxu0 %v1773
  %1863 = vmatmul.f32.gmra.mxu0 %v1765
  %v1864 = vpop.f32.mrf.mxu0
  %v1865 = vadd.f32 %v1839, %v1864
  %1866 = vmatmul.f32.gmra.mxu0 %v1766
  %v1867 = vpop.f32.mrf.mxu0
  %v1868 = vadd.f32 %v1839, %v1867
  %1869 = vmatmul.f32.gmra.mxu0 %v1767
  %v1870 = vpop.f32.mrf.mxu0
  %v1871 = vadd.f32 %v1839, %v1870
  %1872 = vmatmul.f32.gmra.mxu0 %v1768
  %v1873 = vpop.f32.mrf.mxu0
  %v1874 = vadd.f32 %v1839, %v1873
  %1875 = vmatmul.f32.gmra.mxu0 %v1769
  %v1876 = vpop.f32.mrf.mxu0
  %v1877 = vadd.f32 %v1839, %v1876
  %1878 = vmatmul.f32.gmra.mxu0 %v1770
  %v1879 = vpop.f32.mrf.mxu0
  %v1880 = vadd.f32 %v1839, %v1879
  %1881 = vmatmul.f32.gmra.mxu0 %v1771
  %v1882 = vpop.f32.mrf.mxu0
  %v1883 = vadd.f32 %v1839, %v1882
  %1884 = vmatmul.f32.gmra.mxu0 %v1772
  %v1885 = vpop.f32.mrf.mxu0
  %v1886 = vadd.f32 %v1839, %v1885
  %1887 = vdwg.mxu0
  %1888 = vmatpush.msra.mxu0 %v1834
  %1889 = vmatpush.msra.mxu0 %v1830
  %1890 = vmatpush.msra.mxu0 %v1826
  %1891 = vmatpush.msra.mxu0 %v1822
  %1892 = vmatpush.msra.mxu0 %v1818
  %1893 = vmatpush.msra.mxu0 %v1814
  %1894 = vmatpush.msra.mxu0 %v1810
  %1895 = vmatpush.msra.mxu0 %v1806
  %1896 = vmatpush.msra.mxu0 %v1802
  %1897 = vmatpush.msra.mxu0 %v1798
  %1898 = vmatpush.msra.mxu0 %v1794
  %1899 = vmatpush.msra.mxu0 %v1790
  %1900 = vmatpush.msra.mxu0 %v1786
  %1901 = vmatpush.msra.mxu0 %v1782
  %1902 = vmatpush.msra.mxu0 %v1778
  %1903 = vmatpush.msra.mxu0 %v1774
  %1904 = vmatmul.f32.gmra.mxu0 %v1765
  %v1905 = vpop.f32.mrf.mxu0
  %v1906 = vadd.f32 %v1840, %v1905
  %1907 = vmatmul.f32.gmra.mxu0 %v1766
  %v1908 = vpop.f32.mrf.mxu0
  %v1909 = vadd.f32 %v1840, %v1908
  %1910 = vmatmul.f32.gmra.mxu0 %v1767
  %v1911 = vpop.f32.mrf.mxu0
  %v1912 = vadd.f32 %v1840, %v1911
  %1913 = vmatmul.f32.gmra.mxu0 %v1768
  %v1914 = vpop.f32.mrf.mxu0
  %v1915 = vadd.f32 %v1840, %v1914
  %1916 = vmatmul.f32.gmra.mxu0 %v1769
  %v1917 = vpop.f32.mrf.mxu0
  %v1918 = vadd.f32 %v1840, %v1917
  %1919 = vmatmul.f32.gmra.mxu0 %v1770
  %v1920 = vpop.f32.mrf.mxu0
  %v1921 = vadd.f32 %v1840, %v1920
  %1922 = vmatmul.f32.gmra.mxu0 %v1771
  %v1923 = vpop.f32.mrf.mxu0
  %v1924 = vadd.f32 %v1840, %v1923
  %1925 = vmatmul.f32.gmra.mxu0 %v1772
  %v1926 = vpop.f32.mrf.mxu0
  %v1927 = vadd.f32 %v1840, %v1926
  %1928 = vdwg.mxu0
  %1929 = vmatpush.msra.mxu0 %v1835
  %1930 = vmatpush.msra.mxu0 %v1831
  %1931 = vmatpush.msra.mxu0 %v1827
  %1932 = vmatpush.msra.mxu0 %v1823
  %1933 = vmatpush.msra.mxu0 %v1819
  %1934 = vmatpush.msra.mxu0 %v1815
  %1935 = vmatpush.msra.mxu0 %v1811
  %1936 = vmatpush.msra.mxu0 %v1807
  %1937 = vmatpush.msra.mxu0 %v1803
  %1938 = vmatpush.msra.mxu0 %v1799
  %1939 = vmatpush.msra.mxu0 %v1795
  %1940 = vmatpush.msra.mxu0 %v1791
  %1941 = vmatpush.msra.mxu0 %v1787
  %1942 = vmatpush.msra.mxu0 %v1783
  %1943 = vmatpush.msra.mxu0 %v1779
  %1944 = vmatpush.msra.mxu0 %v1775
  %1945 = vmatmul.f32.gmra.mxu0 %v1765
  %v1946 = vpop.f32.mrf.mxu0
  %v1947 = vadd.f32 %v1841, %v1946
  %1948 = vmatmul.f32.gmra.mxu0 %v1766
  %v1949 = vpop.f32.mrf.mxu0
  %v1950 = vadd.f32 %v1841, %v1949
  %1951 = vmatmul.f32.gmra.mxu0 %v1767
  %v1952 = vpop.f32.mrf.mxu0
  %v1953 = vadd.f32 %v1841, %v1952
  %1954 = vmatmul.f32.gmra.mxu0 %v1768
  %v1955 = vpop.f32.mrf.mxu0
  %v1956 = vadd.f32 %v1841, %v1955
  %1957 = vmatmul.f32.gmra.mxu0 %v1769
  %v1958 = vpop.f32.mrf.mxu0
  %v1959 = vadd.f32 %v1841, %v1958
  %1960 = vmatmul.f32.gmra.mxu0 %v1770
  %v1961 = vpop.f32.mrf.mxu0
  %v1962 = vadd.f32 %v1841, %v1961
  %1963 = vmatmul.f32.gmra.mxu0 %v1771
  %v1964 = vpop.f32.mrf.mxu0
  %v1965 = vadd.f32 %v1841, %v1964
  %1966 = vmatmul.f32.gmra.mxu0 %v1772
  %v1967 = vpop.f32.mrf.mxu0
  %v1968 = vadd.f32 %v1841, %v1967
  %1969 = vdwg.mxu0
  %1970 = vmatpush.msra.mxu0 %v1836
  %1971 = vmatpush.msra.mxu0 %v1832
  %1972 = vmatpush.msra.mxu0 %v1828
  %1973 = vmatpush.msra.mxu0 %v1824
  %1974 = vmatpush.msra.mxu0 %v1820
  %1975 = vmatpush.msra.mxu0 %v1816
  %1976 = vmatpush.msra.mxu0 %v1812
  %1977 = vmatpush.msra.mxu0 %v1808
  %1978 = vmatpush.msra.mxu0 %v1804
  %1979 = vmatpush.msra.mxu0 %v1800
  %1980 = vmatpush.msra.mxu0 %v1796
  %1981 = vmatpush.msra.mxu0 %v1792
  %1982 = vmatpush.msra.mxu0 %v1788
  %1983 = vmatpush.msra.mxu0 %v1784
  %1984 = vmatpush.msra.mxu0 %v1780
  %1985 = vmatpush.msra.mxu0 %v1776
  %1986 = vmatmul.f32.gmra.mxu0 %v1765
  %v1987 = vpop.f32.mrf.mxu0
  %v1988 = vadd.f32 %v1842, %v1987
  %1989 = vmatmul.f32.gmra.mxu0 %v1766
  %v1990 = vpop.f32.mrf.mxu0
  %v1991 = vadd.f32 %v1842, %v1990
  %1992 = vmatmul.f32.gmra.mxu0 %v1767
  %v1993 = vpop.f32.mrf.mxu0
  %v1994 = vadd.f32 %v1842, %v1993
  %1995 = vmatmul.f32.gmra.mxu0 %v1768
  %v1996 = vpop.f32.mrf.mxu0
  %v1997 = vadd.f32 %v1842, %v1996
  %1998 = vmatmul.f32.gmra.mxu0 %v1769
  %v1999 = vpop.f32.mrf.mxu0
  %v2000 = vadd.f32 %v1842, %v1999
  %2001 = vmatmul.f32.gmra.mxu0 %v1770
  %v2002 = vpop.f32.mrf.mxu0
  %v2003 = vadd.f32 %v1842, %v2002
  %2004 = vmatmul.f32.gmra.mxu0 %v1771
  %v2005 = vpop.f32.mrf.mxu0
  %v2006 = vadd.f32 %v1842, %v2005
  %2007 = vmatmul.f32.gmra.mxu0 %v1772
  %v2008 = vpop.f32.mrf.mxu0
  %v2009 = vadd.f32 %v1842, %v2008
  %2010 = vdwg.mxu0
  %2011 = vst [vmem:[#allocation2] sm:$0xff] %v1865
  %2012 = vst [vmem:[#allocation2 + $0x8] sm:$0xff] %v1906
  %2013 = vst [vmem:[#allocation2 + $0x10] sm:$0xff] %v1947
  %2014 = vst [vmem:[#allocation2 + $0x18] sm:$0xff] %v1988
  %2015 = vst [vmem:[#allocation2 + $0x20] sm:$0xff] %v1868
  %2016 = vst [vmem:[#allocation2 + $0x28] sm:$0xff] %v1909
  %2017 = vst [vmem:[#allocation2 + $0x30] sm:$0xff] %v1950
  %2018 = vst [vmem:[#allocation2 + $0x38] sm:$0xff] %v1991
  %2019 = vst [vmem:[#allocation2 + $0x40] sm:$0xff] %v1871
  %2020 = vst [vmem:[#allocation2 + $0x48] sm:$0xff] %v1912
  %2021 = vst [vmem:[#allocation2 + $0x50] sm:$0xff] %v1953
  %2022 = vst [vmem:[#allocation2 + $0x58] sm:$0xff] %v1994
  %2023 = vst [vmem:[#allocation2 + $0x60] sm:$0xff] %v1874
  %2024 = vst [vmem:[#allocation2 + $0x68] sm:$0xff] %v1915
  %2025 = vst [vmem:[#allocation2 + $0x70] sm:$0xff] %v1956
  %2026 = vst [vmem:[#allocation2 + $0x78] sm:$0xff] %v1997
  %2027 = vst [vmem:[#allocation2 + $0x80] sm:$0xff] %v1877
  %2028 = vst [vmem:[#allocation2 + $0x88] sm:$0xff] %v1918
  %2029 = vst [vmem:[#allocation2 + $0x90] sm:$0xff] %v1959
  %2030 = vst [vmem:[#allocation2 + $0x98] sm:$0xff] %v2000
  %2031 = vst [vmem:[#allocation2 + $0xa0] sm:$0xff] %v1880
  %2032 = vst [vmem:[#allocation2 + $0xa8] sm:$0xff] %v1921
  %2033 = vst [vmem:[#allocation2 + $0xb0] sm:$0xff] %v1962
  %2034 = vst [vmem:[#allocation2 + $0xb8] sm:$0xff] %v2003
  %2035 = vst [vmem:[#allocation2 + $0xc0] sm:$0xff] %v1883
  %2036 = vst [vmem:[#allocation2 + $0xc8] sm:$0xff] %v1924
  %2037 = vst [vmem:[#allocation2 + $0xd0] sm:$0xff] %v1965
  %2038 = vst [vmem:[#allocation2 + $0xd8] sm:$0xff] %v2006
  %2039 = vst [vmem:[#allocation2 + $0xe0] sm:$0xff] %v1886
  %2040 = vst [vmem:[#allocation2 + $0xe8] sm:$0xff] %v1927
  %2041 = vst [vmem:[#allocation2 + $0xf0] sm:$0xff] %v1968
  %2042 = vst [vmem:[#allocation2 + $0xf8] sm:$0xff] %v2009
  %s2043 = scalar_lea.vmem %s10, 8
  %v2044 = vld [vmem:[%s2043] sm:$0xff]
  %2045 = vst [vmem:[#allocation4] sm:$0xff] %v2044
  %s2046 = scalar_lea.vmem %s11, 8
  %v2047 = vld [vmem:[%s2046] sm:$0xff]
  %2048 = vst [vmem:[#allocation5] sm:$0xff] %v2047
  %v2049 = vld [vmem:[%s6] sm:$0xff]
  %v2050 = vld [vmem:[%s6 + $0x8] sm:$0xff]
  %v2051 = vld [vmem:[%s6 + $0x10] sm:$0xff]
  %v2052 = vld [vmem:[%s6 + $0x18] sm:$0xff]
  %v2053 = vld [vmem:[%s6 + $0x20] sm:$0xff]
  %v2054 = vld [vmem:[%s6 + $0x28] sm:$0xff]
  %v2055 = vld [vmem:[%s6 + $0x30] sm:$0xff]
  %v2056 = vld [vmem:[%s6 + $0x38] sm:$0xff]
  %v2057 = vld [vmem:[%s6 + $0x40] sm:$0xff]
  %v2058 = vld [vmem:[%s6 + $0x48] sm:$0xff]
  %v2059 = vld [vmem:[%s6 + $0x50] sm:$0xff]
  %v2060 = vld [vmem:[%s6 + $0x58] sm:$0xff]
  %v2061 = vld [vmem:[%s6 + $0x60] sm:$0xff]
  %v2062 = vld [vmem:[%s6 + $0x68] sm:$0xff]
  %v2063 = vld [vmem:[%s6 + $0x70] sm:$0xff]
  %v2064 = vld [vmem:[%s6 + $0x78] sm:$0xff]
  %v2065 = vld [vmem:[%s6 + $0x80] sm:$0xff]
  %v2066 = vld [vmem:[%s6 + $0x88] sm:$0xff]
  %v2067 = vld [vmem:[%s6 + $0x90] sm:$0xff]
  %v2068 = vld [vmem:[%s6 + $0x98] sm:$0xff]
  %v2069 = vld [vmem:[%s6 + $0xa0] sm:$0xff]
  %v2070 = vld [vmem:[%s6 + $0xa8] sm:$0xff]
  %v2071 = vld [vmem:[%s6 + $0xb0] sm:$0xff]
  %v2072 = vld [vmem:[%s6 + $0xb8] sm:$0xff]
  %v2073 = vld [vmem:[%s6 + $0xc0] sm:$0xff]
  %v2074 = vld [vmem:[%s6 + $0xc8] sm:$0xff]
  %v2075 = vld [vmem:[%s6 + $0xd0] sm:$0xff]
  %v2076 = vld [vmem:[%s6 + $0xd8] sm:$0xff]
  %v2077 = vld [vmem:[%s6 + $0xe0] sm:$0xff]
  %v2078 = vld [vmem:[%s6 + $0xe8] sm:$0xff]
  %v2079 = vld [vmem:[%s6 + $0xf0] sm:$0xff]
  %v2080 = vld [vmem:[%s6 + $0xf8] sm:$0xff]
  %v2081 = vld [vmem:[%s6 + $0x100] sm:$0xff]
  %v2082 = vld [vmem:[%s6 + $0x108] sm:$0xff]
  %v2083 = vld [vmem:[%s6 + $0x110] sm:$0xff]
  %v2084 = vld [vmem:[%s6 + $0x118] sm:$0xff]
  %v2085 = vld [vmem:[%s6 + $0x120] sm:$0xff]
  %v2086 = vld [vmem:[%s6 + $0x128] sm:$0xff]
  %v2087 = vld [vmem:[%s6 + $0x130] sm:$0xff]
  %v2088 = vld [vmem:[%s6 + $0x138] sm:$0xff]
  %v2089 = vld [vmem:[%s6 + $0x140] sm:$0xff]
  %v2090 = vld [vmem:[%s6 + $0x148] sm:$0xff]
  %v2091 = vld [vmem:[%s6 + $0x150] sm:$0xff]
  %v2092 = vld [vmem:[%s6 + $0x158] sm:$0xff]
  %v2093 = vld [vmem:[%s6 + $0x160] sm:$0xff]
  %v2094 = vld [vmem:[%s6 + $0x168] sm:$0xff]
  %v2095 = vld [vmem:[%s6 + $0x170] sm:$0xff]
  %v2096 = vld [vmem:[%s6 + $0x178] sm:$0xff]
  %v2097 = vld [vmem:[%s6 + $0x180] sm:$0xff]
  %v2098 = vld [vmem:[%s6 + $0x188] sm:$0xff]
  %v2099 = vld [vmem:[%s6 + $0x190] sm:$0xff]
  %v2100 = vld [vmem:[%s6 + $0x198] sm:$0xff]
  %v2101 = vld [vmem:[%s6 + $0x1a0] sm:$0xff]
  %v2102 = vld [vmem:[%s6 + $0x1a8] sm:$0xff]
  %v2103 = vld [vmem:[%s6 + $0x1b0] sm:$0xff]
  %v2104 = vld [vmem:[%s6 + $0x1b8] sm:$0xff]
  %v2105 = vld [vmem:[%s6 + $0x1c0] sm:$0xff]
  %v2106 = vld [vmem:[%s6 + $0x1c8] sm:$0xff]
  %v2107 = vld [vmem:[%s6 + $0x1d0] sm:$0xff]
  %v2108 = vld [vmem:[%s6 + $0x1d8] sm:$0xff]
  %v2109 = vld [vmem:[%s6 + $0x1e0] sm:$0xff]
  %v2110 = vld [vmem:[%s6 + $0x1e8] sm:$0xff]
  %v2111 = vld [vmem:[%s6 + $0x1f0] sm:$0xff]
  %v2112 = vld [vmem:[%s6 + $0x1f8] sm:$0xff]
  %v2113 = vld [vmem:[#allocation4] sm:$0xff]
  %v2114 = vld [vmem:[#allocation5] sm:$0xff]
  %v2115 = vld [vmem:[#allocation2] sm:$0xff]
  %v2116 = vld [vmem:[#allocation2 + $0x8] sm:$0xff]
  %v2117 = vld [vmem:[#allocation2 + $0x10] sm:$0xff]
  %v2118 = vld [vmem:[#allocation2 + $0x18] sm:$0xff]
  %2119 = vmatpush.msra.mxu0 %v2109
  %2120 = vmatpush.msra.mxu0 %v2105
  %2121 = vmatpush.msra.mxu0 %v2101
  %2122 = vmatpush.msra.mxu0 %v2097
  %2123 = vmatpush.msra.mxu0 %v2093
  %2124 = vmatpush.msra.mxu0 %v2089
  %2125 = vmatpush.msra.mxu0 %v2085
  %2126 = vmatpush.msra.mxu0 %v2081
  %2127 = vmatpush.msra.mxu0 %v2077
  %2128 = vmatpush.msra.mxu0 %v2073
  %2129 = vmatpush.msra.mxu0 %v2069
  %2130 = vmatpush.msra.mxu0 %v2065
  %2131 = vmatpush.msra.mxu0 %v2061
  %2132 = vmatpush.msra.mxu0 %v2057
  %2133 = vmatpush.msra.mxu0 %v2053
  %2134 = vmatpush.msra.mxu0 %v2049
  %2135 = vmatmul.f32.gmra.mxu0 %v2113
  %v2136 = vpop.f32.mrf.mxu0
  %v2137 = vadd.f32 0.0, %v2136
  %2138 = vdwg.mxu0
  %2139 = vmatpush.msra.mxu0 %v2110
  %2140 = vmatpush.msra.mxu0 %v2106
  %2141 = vmatpush.msra.mxu0 %v2102
  %2142 = vmatpush.msra.mxu0 %v2098
  %2143 = vmatpush.msra.mxu0 %v2094
  %2144 = vmatpush.msra.mxu0 %v2090
  %2145 = vmatpush.msra.mxu0 %v2086
  %2146 = vmatpush.msra.mxu0 %v2082
  %2147 = vmatpush.msra.mxu0 %v2078
  %2148 = vmatpush.msra.mxu0 %v2074
  %2149 = vmatpush.msra.mxu0 %v2070
  %2150 = vmatpush.msra.mxu0 %v2066
  %2151 = vmatpush.msra.mxu0 %v2062
  %2152 = vmatpush.msra.mxu0 %v2058
  %2153 = vmatpush.msra.mxu0 %v2054
  %2154 = vmatpush.msra.mxu0 %v2050
  %2155 = vmatmul.f32.gmra.mxu0 %v2113
  %v2156 = vpop.f32.mrf.mxu0
  %v2157 = vadd.f32 0.0, %v2156
  %2158 = vdwg.mxu0
  %2159 = vmatpush.msra.mxu0 %v2111
  %2160 = vmatpush.msra.mxu0 %v2107
  %2161 = vmatpush.msra.mxu0 %v2103
  %2162 = vmatpush.msra.mxu0 %v2099
  %2163 = vmatpush.msra.mxu0 %v2095
  %2164 = vmatpush.msra.mxu0 %v2091
  %2165 = vmatpush.msra.mxu0 %v2087
  %2166 = vmatpush.msra.mxu0 %v2083
  %2167 = vmatpush.msra.mxu0 %v2079
  %2168 = vmatpush.msra.mxu0 %v2075
  %2169 = vmatpush.msra.mxu0 %v2071
  %2170 = vmatpush.msra.mxu0 %v2067
  %2171 = vmatpush.msra.mxu0 %v2063
  %2172 = vmatpush.msra.mxu0 %v2059
  %2173 = vmatpush.msra.mxu0 %v2055
  %2174 = vmatpush.msra.mxu0 %v2051
  %2175 = vmatmul.f32.gmra.mxu0 %v2113
  %v2176 = vpop.f32.mrf.mxu0
  %v2177 = vadd.f32 0.0, %v2176
  %2178 = vdwg.mxu0
  %2179 = vmatpush.msra.mxu0 %v2112
  %2180 = vmatpush.msra.mxu0 %v2108
  %2181 = vmatpush.msra.mxu0 %v2104
  %2182 = vmatpush.msra.mxu0 %v2100
  %2183 = vmatpush.msra.mxu0 %v2096
  %2184 = vmatpush.msra.mxu0 %v2092
  %2185 = vmatpush.msra.mxu0 %v2088
  %2186 = vmatpush.msra.mxu0 %v2084
  %2187 = vmatpush.msra.mxu0 %v2080
  %2188 = vmatpush.msra.mxu0 %v2076
  %2189 = vmatpush.msra.mxu0 %v2072
  %2190 = vmatpush.msra.mxu0 %v2068
  %2191 = vmatpush.msra.mxu0 %v2064
  %2192 = vmatpush.msra.mxu0 %v2060
  %2193 = vmatpush.msra.mxu0 %v2056
  %2194 = vmatpush.msra.mxu0 %v2052
  %2195 = vmatmul.f32.gmra.mxu0 %v2113
  %v2196 = vpop.f32.mrf.mxu0
  %v2197 = vadd.f32 0.0, %v2196
  %2198 = vdwg.mxu0
  %v2199 = vadd.f32 %v2115, %v2137
  %v2200 = vadd.f32 %v2116, %v2157
  %v2201 = vadd.f32 %v2117, %v2177
  %v2202 = vadd.f32 %v2118, %v2197
  %v2203 = vxor.u32 %v2199, 2147483648
  %v2204 = vmul.f32 %v2203, 1.442695
  %v2205 = vpow.pop %v2204
  %v2206 = vadd.f32 %v2205, 1.0
  %v2207 = vrcp.pop %v2206
  %v2208 = vmul.f32 %v2206, %v2207
  %v2209 = vsub.f32 1.0, %v2208
  %v2210 = vmul.f32 %v2207, %v2209
  %v2211 = vadd.f32 %v2207, %v2210
  %vm2212 = vweird.f32 %v2206
  %vm2213 = vweird.f32 %v2207
  %vm2214 = vmor %vm2212, %vm2213
  %v2215 = vsel %vm2214, %v2207, %v2211
  %v2216 = vand.u32 2147483647, %v2206
  %vm2217 = vcmp.eq.f32.partialorder %v2216, 8.507059e+37
  %v2218 = vand.u32 %v2206, 2147483648
  %v2219 = vor.u32 1.1754944e-38, %v2218
  %v2220 = vsel %vm2217, %v2219, %v2215
  %v2221 = vmul.f32 1.0, %v2220
  %v2222 = vxor.u32 %v2200, 2147483648
  %v2223 = vmul.f32 %v2222, 1.442695
  %v2224 = vpow.pop %v2223
  %v2225 = vadd.f32 %v2224, 1.0
  %v2226 = vrcp.pop %v2225
  %v2227 = vmul.f32 %v2225, %v2226
  %v2228 = vsub.f32 1.0, %v2227
  %v2229 = vmul.f32 %v2226, %v2228
  %v2230 = vadd.f32 %v2226, %v2229
  %vm2231 = vweird.f32 %v2225
  %vm2232 = vweird.f32 %v2226
  %vm2233 = vmor %vm2231, %vm2232
  %v2234 = vsel %vm2233, %v2226, %v2230
  %v2235 = vand.u32 2147483647, %v2225
  %vm2236 = vcmp.eq.f32.partialorder %v2235, 8.507059e+37
  %v2237 = vand.u32 %v2225, 2147483648
  %v2238 = vor.u32 1.1754944e-38, %v2237
  %v2239 = vsel %vm2236, %v2238, %v2234
  %v2240 = vmul.f32 1.0, %v2239
  %v2241 = vtanh.pop %v2201
  %v2242 = vxor.u32 %v2202, 2147483648
  %v2243 = vmul.f32 %v2242, 1.442695
  %v2244 = vpow.pop %v2243
  %v2245 = vadd.f32 %v2244, 1.0
  %v2246 = vrcp.pop %v2245
  %v2247 = vmul.f32 %v2245, %v2246
  %v2248 = vsub.f32 1.0, %v2247
  %v2249 = vmul.f32 %v2246, %v2248
  %v2250 = vadd.f32 %v2246, %v2249
  %vm2251 = vweird.f32 %v2245
  %vm2252 = vweird.f32 %v2246
  %vm2253 = vmor %vm2251, %vm2252
  %v2254 = vsel %vm2253, %v2246, %v2250
  %v2255 = vand.u32 2147483647, %v2245
  %vm2256 = vcmp.eq.f32.partialorder %v2255, 8.507059e+37
  %v2257 = vand.u32 %v2245, 2147483648
  %v2258 = vor.u32 1.1754944e-38, %v2257
  %v2259 = vsel %vm2256, %v2258, %v2254
  %v2260 = vmul.f32 1.0, %v2259
  %v2261 = vmul.f32 %v2240, %v2114
  %v2262 = vmul.f32 %v2221, %v2241
  %v2263 = vadd.f32 %v2261, %v2262
  %v2264 = vtanh.pop %v2263
  %v2265 = vmul.f32 %v2260, %v2264
  %v2266 = vsel %vm599, %v2265, %v2113
  %2267 = vst [vmem:[#allocation4] sm:$0xff] %v2266
  %v2268 = vsel %vm599, %v2263, %v2114
  %2269 = vst [vmem:[#allocation5] sm:$0xff] %v2268
  %v2270 = vsel %vm599, %v2265, 0.0
  %2271 = vst [vmem:[#allocation3] sm:$0xff] %v2270
  %v2272 = vld [vmem:[#allocation4] sm:$0xff]
  %v2273 = vld [vmem:[#allocation5] sm:$0xff]
  %v2274 = vld [vmem:[#allocation2 + $0x20] sm:$0xff]
  %v2275 = vld [vmem:[#allocation2 + $0x28] sm:$0xff]
  %v2276 = vld [vmem:[#allocation2 + $0x30] sm:$0xff]
  %v2277 = vld [vmem:[#allocation2 + $0x38] sm:$0xff]
  %2278 = vmatpush.msra.mxu0 %v2109
  %2279 = vmatpush.msra.mxu0 %v2105
  %2280 = vmatpush.msra.mxu0 %v2101
  %2281 = vmatpush.msra.mxu0 %v2097
  %2282 = vmatpush.msra.mxu0 %v2093
  %2283 = vmatpush.msra.mxu0 %v2089
  %2284 = vmatpush.msra.mxu0 %v2085
  %2285 = vmatpush.msra.mxu0 %v2081
  %2286 = vmatpush.msra.mxu0 %v2077
  %2287 = vmatpush.msra.mxu0 %v2073
  %2288 = vmatpush.msra.mxu0 %v2069
  %2289 = vmatpush.msra.mxu0 %v2065
  %2290 = vmatpush.msra.mxu0 %v2061
  %2291 = vmatpush.msra.mxu0 %v2057
  %2292 = vmatpush.msra.mxu0 %v2053
  %2293 = vmatpush.msra.mxu0 %v2049
  %2294 = vmatmul.f32.gmra.mxu0 %v2272
  %v2295 = vpop.f32.mrf.mxu0
  %v2296 = vadd.f32 0.0, %v2295
  %2297 = vdwg.mxu0
  %2298 = vmatpush.msra.mxu0 %v2110
  %2299 = vmatpush.msra.mxu0 %v2106
  %2300 = vmatpush.msra.mxu0 %v2102
  %2301 = vmatpush.msra.mxu0 %v2098
  %2302 = vmatpush.msra.mxu0 %v2094
  %2303 = vmatpush.msra.mxu0 %v2090
  %2304 = vmatpush.msra.mxu0 %v2086
  %2305 = vmatpush.msra.mxu0 %v2082
  %2306 = vmatpush.msra.mxu0 %v2078
  %2307 = vmatpush.msra.mxu0 %v2074
  %2308 = vmatpush.msra.mxu0 %v2070
  %2309 = vmatpush.msra.mxu0 %v2066
  %2310 = vmatpush.msra.mxu0 %v2062
  %2311 = vmatpush.msra.mxu0 %v2058
  %2312 = vmatpush.msra.mxu0 %v2054
  %2313 = vmatpush.msra.mxu0 %v2050
  %2314 = vmatmul.f32.gmra.mxu0 %v2272
  %v2315 = vpop.f32.mrf.mxu0
  %v2316 = vadd.f32 0.0, %v2315
  %2317 = vdwg.mxu0
  %2318 = vmatpush.msra.mxu0 %v2111
  %2319 = vmatpush.msra.mxu0 %v2107
  %2320 = vmatpush.msra.mxu0 %v2103
  %2321 = vmatpush.msra.mxu0 %v2099
  %2322 = vmatpush.msra.mxu0 %v2095
  %2323 = vmatpush.msra.mxu0 %v2091
  %2324 = vmatpush.msra.mxu0 %v2087
  %2325 = vmatpush.msra.mxu0 %v2083
  %2326 = vmatpush.msra.mxu0 %v2079
  %2327 = vmatpush.msra.mxu0 %v2075
  %2328 = vmatpush.msra.mxu0 %v2071
  %2329 = vmatpush.msra.mxu0 %v2067
  %2330 = vmatpush.msra.mxu0 %v2063
  %2331 = vmatpush.msra.mxu0 %v2059
  %2332 = vmatpush.msra.mxu0 %v2055
  %2333 = vmatpush.msra.mxu0 %v2051
  %2334 = vmatmul.f32.gmra.mxu0 %v2272
  %v2335 = vpop.f32.mrf.mxu0
  %v2336 = vadd.f32 0.0, %v2335
  %2337 = vdwg.mxu0
  %2338 = vmatpush.msra.mxu0 %v2112
  %2339 = vmatpush.msra.mxu0 %v2108
  %2340 = vmatpush.msra.mxu0 %v2104
  %2341 = vmatpush.msra.mxu0 %v2100
  %2342 = vmatpush.msra.mxu0 %v2096
  %2343 = vmatpush.msra.mxu0 %v2092
  %2344 = vmatpush.msra.mxu0 %v2088
  %2345 = vmatpush.msra.mxu0 %v2084
  %2346 = vmatpush.msra.mxu0 %v2080
  %2347 = vmatpush.msra.mxu0 %v2076
  %2348 = vmatpush.msra.mxu0 %v2072
  %2349 = vmatpush.msra.mxu0 %v2068
  %2350 = vmatpush.msra.mxu0 %v2064
  %2351 = vmatpush.msra.mxu0 %v2060
  %2352 = vmatpush.msra.mxu0 %v2056
  %2353 = vmatpush.msra.mxu0 %v2052
  %2354 = vmatmul.f32.gmra.mxu0 %v2272
  %v2355 = vpop.f32.mrf.mxu0
  %v2356 = vadd.f32 0.0, %v2355
  %2357 = vdwg.mxu0
  %v2358 = vadd.f32 %v2274, %v2296
  %v2359 = vadd.f32 %v2275, %v2316
  %v2360 = vadd.f32 %v2276, %v2336
  %v2361 = vadd.f32 %v2277, %v2356
  %v2362 = vxor.u32 %v2358, 2147483648
  %v2363 = vmul.f32 %v2362, 1.442695
  %v2364 = vpow.pop %v2363
  %v2365 = vadd.f32 %v2364, 1.0
  %v2366 = vrcp.pop %v2365
  %v2367 = vmul.f32 %v2365, %v2366
  %v2368 = vsub.f32 1.0, %v2367
  %v2369 = vmul.f32 %v2366, %v2368
  %v2370 = vadd.f32 %v2366, %v2369
  %vm2371 = vweird.f32 %v2365
  %vm2372 = vweird.f32 %v2366
  %vm2373 = vmor %vm2371, %vm2372
  %v2374 = vsel %vm2373, %v2366, %v2370
  %v2375 = vand.u32 2147483647, %v2365
  %vm2376 = vcmp.eq.f32.partialorder %v2375, 8.507059e+37
  %v2377 = vand.u32 %v2365, 2147483648
  %v2378 = vor.u32 1.1754944e-38, %v2377
  %v2379 = vsel %vm2376, %v2378, %v2374
  %v2380 = vmul.f32 1.0, %v2379
  %v2381 = vxor.u32 %v2359, 2147483648
  %v2382 = vmul.f32 %v2381, 1.442695
  %v2383 = vpow.pop %v2382
  %v2384 = vadd.f32 %v2383, 1.0
  %v2385 = vrcp.pop %v2384
  %v2386 = vmul.f32 %v2384, %v2385
  %v2387 = vsub.f32 1.0, %v2386
  %v2388 = vmul.f32 %v2385, %v2387
  %v2389 = vadd.f32 %v2385, %v2388
  %vm2390 = vweird.f32 %v2384
  %vm2391 = vweird.f32 %v2385
  %vm2392 = vmor %vm2390, %vm2391
  %v2393 = vsel %vm2392, %v2385, %v2389
  %v2394 = vand.u32 2147483647, %v2384
  %vm2395 = vcmp.eq.f32.partialorder %v2394, 8.507059e+37
  %v2396 = vand.u32 %v2384, 2147483648
  %v2397 = vor.u32 1.1754944e-38, %v2396
  %v2398 = vsel %vm2395, %v2397, %v2393
  %v2399 = vmul.f32 1.0, %v2398
  %v2400 = vtanh.pop %v2360
  %v2401 = vxor.u32 %v2361, 2147483648
  %v2402 = vmul.f32 %v2401, 1.442695
  %v2403 = vpow.pop %v2402
  %v2404 = vadd.f32 %v2403, 1.0
  %v2405 = vrcp.pop %v2404
  %v2406 = vmul.f32 %v2404, %v2405
  %v2407 = vsub.f32 1.0, %v2406
  %v2408 = vmul.f32 %v2405, %v2407
  %v2409 = vadd.f32 %v2405, %v2408
  %vm2410 = vweird.f32 %v2404
  %vm2411 = vweird.f32 %v2405
  %vm2412 = vmor %vm2410, %vm2411
  %v2413 = vsel %vm2412, %v2405, %v2409
  %v2414 = vand.u32 2147483647, %v2404
  %vm2415 = vcmp.eq.f32.partialorder %v2414, 8.507059e+37
  %v2416 = vand.u32 %v2404, 2147483648
  %v2417 = vor.u32 1.1754944e-38, %v2416
  %v2418 = vsel %vm2415, %v2417, %v2413
  %v2419 = vmul.f32 1.0, %v2418
  %v2420 = vmul.f32 %v2399, %v2273
  %v2421 = vmul.f32 %v2380, %v2400
  %v2422 = vadd.f32 %v2420, %v2421
  %v2423 = vtanh.pop %v2422
  %v2424 = vmul.f32 %v2419, %v2423
  %v2425 = vsel %vm764, %v2424, %v2272
  %2426 = vst [vmem:[#allocation4] sm:$0xff] %v2425
  %v2427 = vsel %vm764, %v2422, %v2273
  %2428 = vst [vmem:[#allocation5] sm:$0xff] %v2427
  %v2429 = vsel %vm764, %v2424, 0.0
  %2430 = vst [vmem:[#allocation3 + $0x8] sm:$0xff] %v2429
  %v2431 = vld [vmem:[#allocation4] sm:$0xff]
  %v2432 = vld [vmem:[#allocation5] sm:$0xff]
  %v2433 = vld [vmem:[#allocation2 + $0x40] sm:$0xff]
  %v2434 = vld [vmem:[#allocation2 + $0x48] sm:$0xff]
  %v2435 = vld [vmem:[#allocation2 + $0x50] sm:$0xff]
  %v2436 = vld [vmem:[#allocation2 + $0x58] sm:$0xff]
  %2437 = vmatpush.msra.mxu0 %v2109
  %2438 = vmatpush.msra.mxu0 %v2105
  %2439 = vmatpush.msra.mxu0 %v2101
  %2440 = vmatpush.msra.mxu0 %v2097
  %2441 = vmatpush.msra.mxu0 %v2093
  %2442 = vmatpush.msra.mxu0 %v2089
  %2443 = vmatpush.msra.mxu0 %v2085
  %2444 = vmatpush.msra.mxu0 %v2081
  %2445 = vmatpush.msra.mxu0 %v2077
  %2446 = vmatpush.msra.mxu0 %v2073
  %2447 = vmatpush.msra.mxu0 %v2069
  %2448 = vmatpush.msra.mxu0 %v2065
  %2449 = vmatpush.msra.mxu0 %v2061
  %2450 = vmatpush.msra.mxu0 %v2057
  %2451 = vmatpush.msra.mxu0 %v2053
  %2452 = vmatpush.msra.mxu0 %v2049
  %2453 = vmatmul.f32.gmra.mxu0 %v2431
  %v2454 = vpop.f32.mrf.mxu0
  %v2455 = vadd.f32 0.0, %v2454
  %2456 = vdwg.mxu0
  %2457 = vmatpush.msra.mxu0 %v2110
  %2458 = vmatpush.msra.mxu0 %v2106
  %2459 = vmatpush.msra.mxu0 %v2102
  %2460 = vmatpush.msra.mxu0 %v2098
  %2461 = vmatpush.msra.mxu0 %v2094
  %2462 = vmatpush.msra.mxu0 %v2090
  %2463 = vmatpush.msra.mxu0 %v2086
  %2464 = vmatpush.msra.mxu0 %v2082
  %2465 = vmatpush.msra.mxu0 %v2078
  %2466 = vmatpush.msra.mxu0 %v2074
  %2467 = vmatpush.msra.mxu0 %v2070
  %2468 = vmatpush.msra.mxu0 %v2066
  %2469 = vmatpush.msra.mxu0 %v2062
  %2470 = vmatpush.msra.mxu0 %v2058
  %2471 = vmatpush.msra.mxu0 %v2054
  %2472 = vmatpush.msra.mxu0 %v2050
  %2473 = vmatmul.f32.gmra.mxu0 %v2431
  %v2474 = vpop.f32.mrf.mxu0
  %v2475 = vadd.f32 0.0, %v2474
  %2476 = vdwg.mxu0
  %2477 = vmatpush.msra.mxu0 %v2111
  %2478 = vmatpush.msra.mxu0 %v2107
  %2479 = vmatpush.msra.mxu0 %v2103
  %2480 = vmatpush.msra.mxu0 %v2099
  %2481 = vmatpush.msra.mxu0 %v2095
  %2482 = vmatpush.msra.mxu0 %v2091
  %2483 = vmatpush.msra.mxu0 %v2087
  %2484 = vmatpush.msra.mxu0 %v2083
  %2485 = vmatpush.msra.mxu0 %v2079
  %2486 = vmatpush.msra.mxu0 %v2075
  %2487 = vmatpush.msra.mxu0 %v2071
  %2488 = vmatpush.msra.mxu0 %v2067
  %2489 = vmatpush.msra.mxu0 %v2063
  %2490 = vmatpush.msra.mxu0 %v2059
  %2491 = vmatpush.msra.mxu0 %v2055
  %2492 = vmatpush.msra.mxu0 %v2051
  %2493 = vmatmul.f32.gmra.mxu0 %v2431
  %v2494 = vpop.f32.mrf.mxu0
  %v2495 = vadd.f32 0.0, %v2494
  %2496 = vdwg.mxu0
  %2497 = vmatpush.msra.mxu0 %v2112
  %2498 = vmatpush.msra.mxu0 %v2108
  %2499 = vmatpush.msra.mxu0 %v2104
  %2500 = vmatpush.msra.mxu0 %v2100
  %2501 = vmatpush.msra.mxu0 %v2096
  %2502 = vmatpush.msra.mxu0 %v2092
  %2503 = vmatpush.msra.mxu0 %v2088
  %2504 = vmatpush.msra.mxu0 %v2084
  %2505 = vmatpush.msra.mxu0 %v2080
  %2506 = vmatpush.msra.mxu0 %v2076
  %2507 = vmatpush.msra.mxu0 %v2072
  %2508 = vmatpush.msra.mxu0 %v2068
  %2509 = vmatpush.msra.mxu0 %v2064
  %2510 = vmatpush.msra.mxu0 %v2060
  %2511 = vmatpush.msra.mxu0 %v2056
  %2512 = vmatpush.msra.mxu0 %v2052
  %2513 = vmatmul.f32.gmra.mxu0 %v2431
  %v2514 = vpop.f32.mrf.mxu0
  %v2515 = vadd.f32 0.0, %v2514
  %2516 = vdwg.mxu0
  %v2517 = vadd.f32 %v2433, %v2455
  %v2518 = vadd.f32 %v2434, %v2475
  %v2519 = vadd.f32 %v2435, %v2495
  %v2520 = vadd.f32 %v2436, %v2515
  %v2521 = vxor.u32 %v2517, 2147483648
  %v2522 = vmul.f32 %v2521, 1.442695
  %v2523 = vpow.pop %v2522
  %v2524 = vadd.f32 %v2523, 1.0
  %v2525 = vrcp.pop %v2524
  %v2526 = vmul.f32 %v2524, %v2525
  %v2527 = vsub.f32 1.0, %v2526
  %v2528 = vmul.f32 %v2525, %v2527
  %v2529 = vadd.f32 %v2525, %v2528
  %vm2530 = vweird.f32 %v2524
  %vm2531 = vweird.f32 %v2525
  %vm2532 = vmor %vm2530, %vm2531
  %v2533 = vsel %vm2532, %v2525, %v2529
  %v2534 = vand.u32 2147483647, %v2524
  %vm2535 = vcmp.eq.f32.partialorder %v2534, 8.507059e+37
  %v2536 = vand.u32 %v2524, 2147483648
  %v2537 = vor.u32 1.1754944e-38, %v2536
  %v2538 = vsel %vm2535, %v2537, %v2533
  %v2539 = vmul.f32 1.0, %v2538
  %v2540 = vxor.u32 %v2518, 2147483648
  %v2541 = vmul.f32 %v2540, 1.442695
  %v2542 = vpow.pop %v2541
  %v2543 = vadd.f32 %v2542, 1.0
  %v2544 = vrcp.pop %v2543
  %v2545 = vmul.f32 %v2543, %v2544
  %v2546 = vsub.f32 1.0, %v2545
  %v2547 = vmul.f32 %v2544, %v2546
  %v2548 = vadd.f32 %v2544, %v2547
  %vm2549 = vweird.f32 %v2543
  %vm2550 = vweird.f32 %v2544
  %vm2551 = vmor %vm2549, %vm2550
  %v2552 = vsel %vm2551, %v2544, %v2548
  %v2553 = vand.u32 2147483647, %v2543
  %vm2554 = vcmp.eq.f32.partialorder %v2553, 8.507059e+37
  %v2555 = vand.u32 %v2543, 2147483648
  %v2556 = vor.u32 1.1754944e-38, %v2555
  %v2557 = vsel %vm2554, %v2556, %v2552
  %v2558 = vmul.f32 1.0, %v2557
  %v2559 = vtanh.pop %v2519
  %v2560 = vxor.u32 %v2520, 2147483648
  %v2561 = vmul.f32 %v2560, 1.442695
  %v2562 = vpow.pop %v2561
  %v2563 = vadd.f32 %v2562, 1.0
  %v2564 = vrcp.pop %v2563
  %v2565 = vmul.f32 %v2563, %v2564
  %v2566 = vsub.f32 1.0, %v2565
  %v2567 = vmul.f32 %v2564, %v2566
  %v2568 = vadd.f32 %v2564, %v2567
  %vm2569 = vweird.f32 %v2563
  %vm2570 = vweird.f32 %v2564
  %vm2571 = vmor %vm2569, %vm2570
  %v2572 = vsel %vm2571, %v2564, %v2568
  %v2573 = vand.u32 2147483647, %v2563
  %vm2574 = vcmp.eq.f32.partialorder %v2573, 8.507059e+37
  %v2575 = vand.u32 %v2563, 2147483648
  %v2576 = vor.u32 1.1754944e-38, %v2575
  %v2577 = vsel %vm2574, %v2576, %v2572
  %v2578 = vmul.f32 1.0, %v2577
  %v2579 = vmul.f32 %v2558, %v2432
  %v2580 = vmul.f32 %v2539, %v2559
  %v2581 = vadd.f32 %v2579, %v2580
  %v2582 = vtanh.pop %v2581
  %v2583 = vmul.f32 %v2578, %v2582
  %v2584 = vsel %vm929, %v2583, %v2431
  %2585 = vst [vmem:[#allocation4] sm:$0xff] %v2584
  %v2586 = vsel %vm929, %v2581, %v2432
  %2587 = vst [vmem:[#allocation5] sm:$0xff] %v2586
  %v2588 = vsel %vm929, %v2583, 0.0
  %2589 = vst [vmem:[#allocation3 + $0x10] sm:$0xff] %v2588
  %v2590 = vld [vmem:[#allocation4] sm:$0xff]
  %v2591 = vld [vmem:[#allocation5] sm:$0xff]
  %v2592 = vld [vmem:[#allocation2 + $0x60] sm:$0xff]
  %v2593 = vld [vmem:[#allocation2 + $0x68] sm:$0xff]
  %v2594 = vld [vmem:[#allocation2 + $0x70] sm:$0xff]
  %v2595 = vld [vmem:[#allocation2 + $0x78] sm:$0xff]
  %2596 = vmatpush.msra.mxu0 %v2109
  %2597 = vmatpush.msra.mxu0 %v2105
  %2598 = vmatpush.msra.mxu0 %v2101
  %2599 = vmatpush.msra.mxu0 %v2097
  %2600 = vmatpush.msra.mxu0 %v2093
  %2601 = vmatpush.msra.mxu0 %v2089
  %2602 = vmatpush.msra.mxu0 %v2085
  %2603 = vmatpush.msra.mxu0 %v2081
  %2604 = vmatpush.msra.mxu0 %v2077
  %2605 = vmatpush.msra.mxu0 %v2073
  %2606 = vmatpush.msra.mxu0 %v2069
  %2607 = vmatpush.msra.mxu0 %v2065
  %2608 = vmatpush.msra.mxu0 %v2061
  %2609 = vmatpush.msra.mxu0 %v2057
  %2610 = vmatpush.msra.mxu0 %v2053
  %2611 = vmatpush.msra.mxu0 %v2049
  %2612 = vmatmul.f32.gmra.mxu0 %v2590
  %v2613 = vpop.f32.mrf.mxu0
  %v2614 = vadd.f32 0.0, %v2613
  %2615 = vdwg.mxu0
  %2616 = vmatpush.msra.mxu0 %v2110
  %2617 = vmatpush.msra.mxu0 %v2106
  %2618 = vmatpush.msra.mxu0 %v2102
  %2619 = vmatpush.msra.mxu0 %v2098
  %2620 = vmatpush.msra.mxu0 %v2094
  %2621 = vmatpush.msra.mxu0 %v2090
  %2622 = vmatpush.msra.mxu0 %v2086
  %2623 = vmatpush.msra.mxu0 %v2082
  %2624 = vmatpush.msra.mxu0 %v2078
  %2625 = vmatpush.msra.mxu0 %v2074
  %2626 = vmatpush.msra.mxu0 %v2070
  %2627 = vmatpush.msra.mxu0 %v2066
  %2628 = vmatpush.msra.mxu0 %v2062
  %2629 = vmatpush.msra.mxu0 %v2058
  %2630 = vmatpush.msra.mxu0 %v2054
  %2631 = vmatpush.msra.mxu0 %v2050
  %2632 = vmatmul.f32.gmra.mxu0 %v2590
  %v2633 = vpop.f32.mrf.mxu0
  %v2634 = vadd.f32 0.0, %v2633
  %2635 = vdwg.mxu0
  %2636 = vmatpush.msra.mxu0 %v2111
  %2637 = vmatpush.msra.mxu0 %v2107
  %2638 = vmatpush.msra.mxu0 %v2103
  %2639 = vmatpush.msra.mxu0 %v2099
  %2640 = vmatpush.msra.mxu0 %v2095
  %2641 = vmatpush.msra.mxu0 %v2091
  %2642 = vmatpush.msra.mxu0 %v2087
  %2643 = vmatpush.msra.mxu0 %v2083
  %2644 = vmatpush.msra.mxu0 %v2079
  %2645 = vmatpush.msra.mxu0 %v2075
  %2646 = vmatpush.msra.mxu0 %v2071
  %2647 = vmatpush.msra.mxu0 %v2067
  %2648 = vmatpush.msra.mxu0 %v2063
  %2649 = vmatpush.msra.mxu0 %v2059
  %2650 = vmatpush.msra.mxu0 %v2055
  %2651 = vmatpush.msra.mxu0 %v2051
  %2652 = vmatmul.f32.gmra.mxu0 %v2590
  %v2653 = vpop.f32.mrf.mxu0
  %v2654 = vadd.f32 0.0, %v2653
  %2655 = vdwg.mxu0
  %2656 = vmatpush.msra.mxu0 %v2112
  %2657 = vmatpush.msra.mxu0 %v2108
  %2658 = vmatpush.msra.mxu0 %v2104
  %2659 = vmatpush.msra.mxu0 %v2100
  %2660 = vmatpush.msra.mxu0 %v2096
  %2661 = vmatpush.msra.mxu0 %v2092
  %2662 = vmatpush.msra.mxu0 %v2088
  %2663 = vmatpush.msra.mxu0 %v2084
  %2664 = vmatpush.msra.mxu0 %v2080
  %2665 = vmatpush.msra.mxu0 %v2076
  %2666 = vmatpush.msra.mxu0 %v2072
  %2667 = vmatpush.msra.mxu0 %v2068
  %2668 = vmatpush.msra.mxu0 %v2064
  %2669 = vmatpush.msra.mxu0 %v2060
  %2670 = vmatpush.msra.mxu0 %v2056
  %2671 = vmatpush.msra.mxu0 %v2052
  %2672 = vmatmul.f32.gmra.mxu0 %v2590
  %v2673 = vpop.f32.mrf.mxu0
  %v2674 = vadd.f32 0.0, %v2673
  %2675 = vdwg.mxu0
  %v2676 = vadd.f32 %v2592, %v2614
  %v2677 = vadd.f32 %v2593, %v2634
  %v2678 = vadd.f32 %v2594, %v2654
  %v2679 = vadd.f32 %v2595, %v2674
  %v2680 = vxor.u32 %v2676, 2147483648
  %v2681 = vmul.f32 %v2680, 1.442695
  %v2682 = vpow.pop %v2681
  %v2683 = vadd.f32 %v2682, 1.0
  %v2684 = vrcp.pop %v2683
  %v2685 = vmul.f32 %v2683, %v2684
  %v2686 = vsub.f32 1.0, %v2685
  %v2687 = vmul.f32 %v2684, %v2686
  %v2688 = vadd.f32 %v2684, %v2687
  %vm2689 = vweird.f32 %v2683
  %vm2690 = vweird.f32 %v2684
  %vm2691 = vmor %vm2689, %vm2690
  %v2692 = vsel %vm2691, %v2684, %v2688
  %v2693 = vand.u32 2147483647, %v2683
  %vm2694 = vcmp.eq.f32.partialorder %v2693, 8.507059e+37
  %v2695 = vand.u32 %v2683, 2147483648
  %v2696 = vor.u32 1.1754944e-38, %v2695
  %v2697 = vsel %vm2694, %v2696, %v2692
  %v2698 = vmul.f32 1.0, %v2697
  %v2699 = vxor.u32 %v2677, 2147483648
  %v2700 = vmul.f32 %v2699, 1.442695
  %v2701 = vpow.pop %v2700
  %v2702 = vadd.f32 %v2701, 1.0
  %v2703 = vrcp.pop %v2702
  %v2704 = vmul.f32 %v2702, %v2703
  %v2705 = vsub.f32 1.0, %v2704
  %v2706 = vmul.f32 %v2703, %v2705
  %v2707 = vadd.f32 %v2703, %v2706
  %vm2708 = vweird.f32 %v2702
  %vm2709 = vweird.f32 %v2703
  %vm2710 = vmor %vm2708, %vm2709
  %v2711 = vsel %vm2710, %v2703, %v2707
  %v2712 = vand.u32 2147483647, %v2702
  %vm2713 = vcmp.eq.f32.partialorder %v2712, 8.507059e+37
  %v2714 = vand.u32 %v2702, 2147483648
  %v2715 = vor.u32 1.1754944e-38, %v2714
  %v2716 = vsel %vm2713, %v2715, %v2711
  %v2717 = vmul.f32 1.0, %v2716
  %v2718 = vtanh.pop %v2678
  %v2719 = vxor.u32 %v2679, 2147483648
  %v2720 = vmul.f32 %v2719, 1.442695
  %v2721 = vpow.pop %v2720
  %v2722 = vadd.f32 %v2721, 1.0
  %v2723 = vrcp.pop %v2722
  %v2724 = vmul.f32 %v2722, %v2723
  %v2725 = vsub.f32 1.0, %v2724
  %v2726 = vmul.f32 %v2723, %v2725
  %v2727 = vadd.f32 %v2723, %v2726
  %vm2728 = vweird.f32 %v2722
  %vm2729 = vweird.f32 %v2723
  %vm2730 = vmor %vm2728, %vm2729
  %v2731 = vsel %vm2730, %v2723, %v2727
  %v2732 = vand.u32 2147483647, %v2722
  %vm2733 = vcmp.eq.f32.partialorder %v2732, 8.507059e+37
  %v2734 = vand.u32 %v2722, 2147483648
  %v2735 = vor.u32 1.1754944e-38, %v2734
  %v2736 = vsel %vm2733, %v2735, %v2731
  %v2737 = vmul.f32 1.0, %v2736
  %v2738 = vmul.f32 %v2717, %v2591
  %v2739 = vmul.f32 %v2698, %v2718
  %v2740 = vadd.f32 %v2738, %v2739
  %v2741 = vtanh.pop %v2740
  %v2742 = vmul.f32 %v2737, %v2741
  %v2743 = vsel %vm1094, %v2742, %v2590
  %2744 = vst [vmem:[#allocation4] sm:$0xff] %v2743
  %v2745 = vsel %vm1094, %v2740, %v2591
  %2746 = vst [vmem:[#allocation5] sm:$0xff] %v2745
  %v2747 = vsel %vm1094, %v2742, 0.0
  %2748 = vst [vmem:[#allocation3 + $0x18] sm:$0xff] %v2747
  %v2749 = vld [vmem:[#allocation4] sm:$0xff]
  %v2750 = vld [vmem:[#allocation5] sm:$0xff]
  %v2751 = vld [vmem:[#allocation2 + $0x80] sm:$0xff]
  %v2752 = vld [vmem:[#allocation2 + $0x88] sm:$0xff]
  %v2753 = vld [vmem:[#allocation2 + $0x90] sm:$0xff]
  %v2754 = vld [vmem:[#allocation2 + $0x98] sm:$0xff]
  %2755 = vmatpush.msra.mxu0 %v2109
  %2756 = vmatpush.msra.mxu0 %v2105
  %2757 = vmatpush.msra.mxu0 %v2101
  %2758 = vmatpush.msra.mxu0 %v2097
  %2759 = vmatpush.msra.mxu0 %v2093
  %2760 = vmatpush.msra.mxu0 %v2089
  %2761 = vmatpush.msra.mxu0 %v2085
  %2762 = vmatpush.msra.mxu0 %v2081
  %2763 = vmatpush.msra.mxu0 %v2077
  %2764 = vmatpush.msra.mxu0 %v2073
  %2765 = vmatpush.msra.mxu0 %v2069
  %2766 = vmatpush.msra.mxu0 %v2065
  %2767 = vmatpush.msra.mxu0 %v2061
  %2768 = vmatpush.msra.mxu0 %v2057
  %2769 = vmatpush.msra.mxu0 %v2053
  %2770 = vmatpush.msra.mxu0 %v2049
  %2771 = vmatmul.f32.gmra.mxu0 %v2749
  %v2772 = vpop.f32.mrf.mxu0
  %v2773 = vadd.f32 0.0, %v2772
  %2774 = vdwg.mxu0
  %2775 = vmatpush.msra.mxu0 %v2110
  %2776 = vmatpush.msra.mxu0 %v2106
  %2777 = vmatpush.msra.mxu0 %v2102
  %2778 = vmatpush.msra.mxu0 %v2098
  %2779 = vmatpush.msra.mxu0 %v2094
  %2780 = vmatpush.msra.mxu0 %v2090
  %2781 = vmatpush.msra.mxu0 %v2086
  %2782 = vmatpush.msra.mxu0 %v2082
  %2783 = vmatpush.msra.mxu0 %v2078
  %2784 = vmatpush.msra.mxu0 %v2074
  %2785 = vmatpush.msra.mxu0 %v2070
  %2786 = vmatpush.msra.mxu0 %v2066
  %2787 = vmatpush.msra.mxu0 %v2062
  %2788 = vmatpush.msra.mxu0 %v2058
  %2789 = vmatpush.msra.mxu0 %v2054
  %2790 = vmatpush.msra.mxu0 %v2050
  %2791 = vmatmul.f32.gmra.mxu0 %v2749
  %v2792 = vpop.f32.mrf.mxu0
  %v2793 = vadd.f32 0.0, %v2792
  %2794 = vdwg.mxu0
  %2795 = vmatpush.msra.mxu0 %v2111
  %2796 = vmatpush.msra.mxu0 %v2107
  %2797 = vmatpush.msra.mxu0 %v2103
  %2798 = vmatpush.msra.mxu0 %v2099
  %2799 = vmatpush.msra.mxu0 %v2095
  %2800 = vmatpush.msra.mxu0 %v2091
  %2801 = vmatpush.msra.mxu0 %v2087
  %2802 = vmatpush.msra.mxu0 %v2083
  %2803 = vmatpush.msra.mxu0 %v2079
  %2804 = vmatpush.msra.mxu0 %v2075
  %2805 = vmatpush.msra.mxu0 %v2071
  %2806 = vmatpush.msra.mxu0 %v2067
  %2807 = vmatpush.msra.mxu0 %v2063
  %2808 = vmatpush.msra.mxu0 %v2059
  %2809 = vmatpush.msra.mxu0 %v2055
  %2810 = vmatpush.msra.mxu0 %v2051
  %2811 = vmatmul.f32.gmra.mxu0 %v2749
  %v2812 = vpop.f32.mrf.mxu0
  %v2813 = vadd.f32 0.0, %v2812
  %2814 = vdwg.mxu0
  %2815 = vmatpush.msra.mxu0 %v2112
  %2816 = vmatpush.msra.mxu0 %v2108
  %2817 = vmatpush.msra.mxu0 %v2104
  %2818 = vmatpush.msra.mxu0 %v2100
  %2819 = vmatpush.msra.mxu0 %v2096
  %2820 = vmatpush.msra.mxu0 %v2092
  %2821 = vmatpush.msra.mxu0 %v2088
  %2822 = vmatpush.msra.mxu0 %v2084
  %2823 = vmatpush.msra.mxu0 %v2080
  %2824 = vmatpush.msra.mxu0 %v2076
  %2825 = vmatpush.msra.mxu0 %v2072
  %2826 = vmatpush.msra.mxu0 %v2068
  %2827 = vmatpush.msra.mxu0 %v2064
  %2828 = vmatpush.msra.mxu0 %v2060
  %2829 = vmatpush.msra.mxu0 %v2056
  %2830 = vmatpush.msra.mxu0 %v2052
  %2831 = vmatmul.f32.gmra.mxu0 %v2749
  %v2832 = vpop.f32.mrf.mxu0
  %v2833 = vadd.f32 0.0, %v2832
  %2834 = vdwg.mxu0
  %v2835 = vadd.f32 %v2751, %v2773
  %v2836 = vadd.f32 %v2752, %v2793
  %v2837 = vadd.f32 %v2753, %v2813
  %v2838 = vadd.f32 %v2754, %v2833
  %v2839 = vxor.u32 %v2835, 2147483648
  %v2840 = vmul.f32 %v2839, 1.442695
  %v2841 = vpow.pop %v2840
  %v2842 = vadd.f32 %v2841, 1.0
  %v2843 = vrcp.pop %v2842
  %v2844 = vmul.f32 %v2842, %v2843
  %v2845 = vsub.f32 1.0, %v2844
  %v2846 = vmul.f32 %v2843, %v2845
  %v2847 = vadd.f32 %v2843, %v2846
  %vm2848 = vweird.f32 %v2842
  %vm2849 = vweird.f32 %v2843
  %vm2850 = vmor %vm2848, %vm2849
  %v2851 = vsel %vm2850, %v2843, %v2847
  %v2852 = vand.u32 2147483647, %v2842
  %vm2853 = vcmp.eq.f32.partialorder %v2852, 8.507059e+37
  %v2854 = vand.u32 %v2842, 2147483648
  %v2855 = vor.u32 1.1754944e-38, %v2854
  %v2856 = vsel %vm2853, %v2855, %v2851
  %v2857 = vmul.f32 1.0, %v2856
  %v2858 = vxor.u32 %v2836, 2147483648
  %v2859 = vmul.f32 %v2858, 1.442695
  %v2860 = vpow.pop %v2859
  %v2861 = vadd.f32 %v2860, 1.0
  %v2862 = vrcp.pop %v2861
  %v2863 = vmul.f32 %v2861, %v2862
  %v2864 = vsub.f32 1.0, %v2863
  %v2865 = vmul.f32 %v2862, %v2864
  %v2866 = vadd.f32 %v2862, %v2865
  %vm2867 = vweird.f32 %v2861
  %vm2868 = vweird.f32 %v2862
  %vm2869 = vmor %vm2867, %vm2868
  %v2870 = vsel %vm2869, %v2862, %v2866
  %v2871 = vand.u32 2147483647, %v2861
  %vm2872 = vcmp.eq.f32.partialorder %v2871, 8.507059e+37
  %v2873 = vand.u32 %v2861, 2147483648
  %v2874 = vor.u32 1.1754944e-38, %v2873
  %v2875 = vsel %vm2872, %v2874, %v2870
  %v2876 = vmul.f32 1.0, %v2875
  %v2877 = vtanh.pop %v2837
  %v2878 = vxor.u32 %v2838, 2147483648
  %v2879 = vmul.f32 %v2878, 1.442695
  %v2880 = vpow.pop %v2879
  %v2881 = vadd.f32 %v2880, 1.0
  %v2882 = vrcp.pop %v2881
  %v2883 = vmul.f32 %v2881, %v2882
  %v2884 = vsub.f32 1.0, %v2883
  %v2885 = vmul.f32 %v2882, %v2884
  %v2886 = vadd.f32 %v2882, %v2885
  %vm2887 = vweird.f32 %v2881
  %vm2888 = vweird.f32 %v2882
  %vm2889 = vmor %vm2887, %vm2888
  %v2890 = vsel %vm2889, %v2882, %v2886
  %v2891 = vand.u32 2147483647, %v2881
  %vm2892 = vcmp.eq.f32.partialorder %v2891, 8.507059e+37
  %v2893 = vand.u32 %v2881, 2147483648
  %v2894 = vor.u32 1.1754944e-38, %v2893
  %v2895 = vsel %vm2892, %v2894, %v2890
  %v2896 = vmul.f32 1.0, %v2895
  %v2897 = vmul.f32 %v2876, %v2750
  %v2898 = vmul.f32 %v2857, %v2877
  %v2899 = vadd.f32 %v2897, %v2898
  %v2900 = vtanh.pop %v2899
  %v2901 = vmul.f32 %v2896, %v2900
  %v2902 = vsel %vm1259, %v2901, %v2749
  %2903 = vst [vmem:[#allocation4] sm:$0xff] %v2902
  %v2904 = vsel %vm1259, %v2899, %v2750
  %2905 = vst [vmem:[#allocation5] sm:$0xff] %v2904
  %v2906 = vsel %vm1259, %v2901, 0.0
  %2907 = vst [vmem:[#allocation3 + $0x20] sm:$0xff] %v2906
  %v2908 = vld [vmem:[#allocation4] sm:$0xff]
  %v2909 = vld [vmem:[#allocation5] sm:$0xff]
  %v2910 = vld [vmem:[#allocation2 + $0xa0] sm:$0xff]
  %v2911 = vld [vmem:[#allocation2 + $0xa8] sm:$0xff]
  %v2912 = vld [vmem:[#allocation2 + $0xb0] sm:$0xff]
  %v2913 = vld [vmem:[#allocation2 + $0xb8] sm:$0xff]
  %2914 = vmatpush.msra.mxu0 %v2109
  %2915 = vmatpush.msra.mxu0 %v2105
  %2916 = vmatpush.msra.mxu0 %v2101
  %2917 = vmatpush.msra.mxu0 %v2097
  %2918 = vmatpush.msra.mxu0 %v2093
  %2919 = vmatpush.msra.mxu0 %v2089
  %2920 = vmatpush.msra.mxu0 %v2085
  %2921 = vmatpush.msra.mxu0 %v2081
  %2922 = vmatpush.msra.mxu0 %v2077
  %2923 = vmatpush.msra.mxu0 %v2073
  %2924 = vmatpush.msra.mxu0 %v2069
  %2925 = vmatpush.msra.mxu0 %v2065
  %2926 = vmatpush.msra.mxu0 %v2061
  %2927 = vmatpush.msra.mxu0 %v2057
  %2928 = vmatpush.msra.mxu0 %v2053
  %2929 = vmatpush.msra.mxu0 %v2049
  %2930 = vmatmul.f32.gmra.mxu0 %v2908
  %v2931 = vpop.f32.mrf.mxu0
  %v2932 = vadd.f32 0.0, %v2931
  %2933 = vdwg.mxu0
  %2934 = vmatpush.msra.mxu0 %v2110
  %2935 = vmatpush.msra.mxu0 %v2106
  %2936 = vmatpush.msra.mxu0 %v2102
  %2937 = vmatpush.msra.mxu0 %v2098
  %2938 = vmatpush.msra.mxu0 %v2094
  %2939 = vmatpush.msra.mxu0 %v2090
  %2940 = vmatpush.msra.mxu0 %v2086
  %2941 = vmatpush.msra.mxu0 %v2082
  %2942 = vmatpush.msra.mxu0 %v2078
  %2943 = vmatpush.msra.mxu0 %v2074
  %2944 = vmatpush.msra.mxu0 %v2070
  %2945 = vmatpush.msra.mxu0 %v2066
  %2946 = vmatpush.msra.mxu0 %v2062
  %2947 = vmatpush.msra.mxu0 %v2058
  %2948 = vmatpush.msra.mxu0 %v2054
  %2949 = vmatpush.msra.mxu0 %v2050
  %2950 = vmatmul.f32.gmra.mxu0 %v2908
  %v2951 = vpop.f32.mrf.mxu0
  %v2952 = vadd.f32 0.0, %v2951
  %2953 = vdwg.mxu0
  %2954 = vmatpush.msra.mxu0 %v2111
  %2955 = vmatpush.msra.mxu0 %v2107
  %2956 = vmatpush.msra.mxu0 %v2103
  %2957 = vmatpush.msra.mxu0 %v2099
  %2958 = vmatpush.msra.mxu0 %v2095
  %2959 = vmatpush.msra.mxu0 %v2091
  %2960 = vmatpush.msra.mxu0 %v2087
  %2961 = vmatpush.msra.mxu0 %v2083
  %2962 = vmatpush.msra.mxu0 %v2079
  %2963 = vmatpush.msra.mxu0 %v2075
  %2964 = vmatpush.msra.mxu0 %v2071
  %2965 = vmatpush.msra.mxu0 %v2067
  %2966 = vmatpush.msra.mxu0 %v2063
  %2967 = vmatpush.msra.mxu0 %v2059
  %2968 = vmatpush.msra.mxu0 %v2055
  %2969 = vmatpush.msra.mxu0 %v2051
  %2970 = vmatmul.f32.gmra.mxu0 %v2908
  %v2971 = vpop.f32.mrf.mxu0
  %v2972 = vadd.f32 0.0, %v2971
  %2973 = vdwg.mxu0
  %2974 = vmatpush.msra.mxu0 %v2112
  %2975 = vmatpush.msra.mxu0 %v2108
  %2976 = vmatpush.msra.mxu0 %v2104
  %2977 = vmatpush.msra.mxu0 %v2100
  %2978 = vmatpush.msra.mxu0 %v2096
  %2979 = vmatpush.msra.mxu0 %v2092
  %2980 = vmatpush.msra.mxu0 %v2088
  %2981 = vmatpush.msra.mxu0 %v2084
  %2982 = vmatpush.msra.mxu0 %v2080
  %2983 = vmatpush.msra.mxu0 %v2076
  %2984 = vmatpush.msra.mxu0 %v2072
  %2985 = vmatpush.msra.mxu0 %v2068
  %2986 = vmatpush.msra.mxu0 %v2064
  %2987 = vmatpush.msra.mxu0 %v2060
  %2988 = vmatpush.msra.mxu0 %v2056
  %2989 = vmatpush.msra.mxu0 %v2052
  %2990 = vmatmul.f32.gmra.mxu0 %v2908
  %v2991 = vpop.f32.mrf.mxu0
  %v2992 = vadd.f32 0.0, %v2991
  %2993 = vdwg.mxu0
  %v2994 = vadd.f32 %v2910, %v2932
  %v2995 = vadd.f32 %v2911, %v2952
  %v2996 = vadd.f32 %v2912, %v2972
  %v2997 = vadd.f32 %v2913, %v2992
  %v2998 = vxor.u32 %v2994, 2147483648
  %v2999 = vmul.f32 %v2998, 1.442695
  %v3000 = vpow.pop %v2999
  %v3001 = vadd.f32 %v3000, 1.0
  %v3002 = vrcp.pop %v3001
  %v3003 = vmul.f32 %v3001, %v3002
  %v3004 = vsub.f32 1.0, %v3003
  %v3005 = vmul.f32 %v3002, %v3004
  %v3006 = vadd.f32 %v3002, %v3005
  %vm3007 = vweird.f32 %v3001
  %vm3008 = vweird.f32 %v3002
  %vm3009 = vmor %vm3007, %vm3008
  %v3010 = vsel %vm3009, %v3002, %v3006
  %v3011 = vand.u32 2147483647, %v3001
  %vm3012 = vcmp.eq.f32.partialorder %v3011, 8.507059e+37
  %v3013 = vand.u32 %v3001, 2147483648
  %v3014 = vor.u32 1.1754944e-38, %v3013
  %v3015 = vsel %vm3012, %v3014, %v3010
  %v3016 = vmul.f32 1.0, %v3015
  %v3017 = vxor.u32 %v2995, 2147483648
  %v3018 = vmul.f32 %v3017, 1.442695
  %v3019 = vpow.pop %v3018
  %v3020 = vadd.f32 %v3019, 1.0
  %v3021 = vrcp.pop %v3020
  %v3022 = vmul.f32 %v3020, %v3021
  %v3023 = vsub.f32 1.0, %v3022
  %v3024 = vmul.f32 %v3021, %v3023
  %v3025 = vadd.f32 %v3021, %v3024
  %vm3026 = vweird.f32 %v3020
  %vm3027 = vweird.f32 %v3021
  %vm3028 = vmor %vm3026, %vm3027
  %v3029 = vsel %vm3028, %v3021, %v3025
  %v3030 = vand.u32 2147483647, %v3020
  %vm3031 = vcmp.eq.f32.partialorder %v3030, 8.507059e+37
  %v3032 = vand.u32 %v3020, 2147483648
  %v3033 = vor.u32 1.1754944e-38, %v3032
  %v3034 = vsel %vm3031, %v3033, %v3029
  %v3035 = vmul.f32 1.0, %v3034
  %v3036 = vtanh.pop %v2996
  %v3037 = vxor.u32 %v2997, 2147483648
  %v3038 = vmul.f32 %v3037, 1.442695
  %v3039 = vpow.pop %v3038
  %v3040 = vadd.f32 %v3039, 1.0
  %v3041 = vrcp.pop %v3040
  %v3042 = vmul.f32 %v3040, %v3041
  %v3043 = vsub.f32 1.0, %v3042
  %v3044 = vmul.f32 %v3041, %v3043
  %v3045 = vadd.f32 %v3041, %v3044
  %vm3046 = vweird.f32 %v3040
  %vm3047 = vweird.f32 %v3041
  %vm3048 = vmor %vm3046, %vm3047
  %v3049 = vsel %vm3048, %v3041, %v3045
  %v3050 = vand.u32 2147483647, %v3040
  %vm3051 = vcmp.eq.f32.partialorder %v3050, 8.507059e+37
  %v3052 = vand.u32 %v3040, 2147483648
  %v3053 = vor.u32 1.1754944e-38, %v3052
  %v3054 = vsel %vm3051, %v3053, %v3049
  %v3055 = vmul.f32 1.0, %v3054
  %v3056 = vmul.f32 %v3035, %v2909
  %v3057 = vmul.f32 %v3016, %v3036
  %v3058 = vadd.f32 %v3056, %v3057
  %v3059 = vtanh.pop %v3058
  %v3060 = vmul.f32 %v3055, %v3059
  %v3061 = vsel %vm1424, %v3060, %v2908
  %3062 = vst [vmem:[#allocation4] sm:$0xff] %v3061
  %v3063 = vsel %vm1424, %v3058, %v2909
  %3064 = vst [vmem:[#allocation5] sm:$0xff] %v3063
  %v3065 = vsel %vm1424, %v3060, 0.0
  %3066 = vst [vmem:[#allocation3 + $0x28] sm:$0xff] %v3065
  %v3067 = vld [vmem:[#allocation4] sm:$0xff]
  %v3068 = vld [vmem:[#allocation5] sm:$0xff]
  %v3069 = vld [vmem:[#allocation2 + $0xc0] sm:$0xff]
  %v3070 = vld [vmem:[#allocation2 + $0xc8] sm:$0xff]
  %v3071 = vld [vmem:[#allocation2 + $0xd0] sm:$0xff]
  %v3072 = vld [vmem:[#allocation2 + $0xd8] sm:$0xff]
  %3073 = vmatpush.msra.mxu0 %v2109
  %3074 = vmatpush.msra.mxu0 %v2105
  %3075 = vmatpush.msra.mxu0 %v2101
  %3076 = vmatpush.msra.mxu0 %v2097
  %3077 = vmatpush.msra.mxu0 %v2093
  %3078 = vmatpush.msra.mxu0 %v2089
  %3079 = vmatpush.msra.mxu0 %v2085
  %3080 = vmatpush.msra.mxu0 %v2081
  %3081 = vmatpush.msra.mxu0 %v2077
  %3082 = vmatpush.msra.mxu0 %v2073
  %3083 = vmatpush.msra.mxu0 %v2069
  %3084 = vmatpush.msra.mxu0 %v2065
  %3085 = vmatpush.msra.mxu0 %v2061
  %3086 = vmatpush.msra.mxu0 %v2057
  %3087 = vmatpush.msra.mxu0 %v2053
  %3088 = vmatpush.msra.mxu0 %v2049
  %3089 = vmatmul.f32.gmra.mxu0 %v3067
  %v3090 = vpop.f32.mrf.mxu0
  %v3091 = vadd.f32 0.0, %v3090
  %3092 = vdwg.mxu0
  %3093 = vmatpush.msra.mxu0 %v2110
  %3094 = vmatpush.msra.mxu0 %v2106
  %3095 = vmatpush.msra.mxu0 %v2102
  %3096 = vmatpush.msra.mxu0 %v2098
  %3097 = vmatpush.msra.mxu0 %v2094
  %3098 = vmatpush.msra.mxu0 %v2090
  %3099 = vmatpush.msra.mxu0 %v2086
  %3100 = vmatpush.msra.mxu0 %v2082
  %3101 = vmatpush.msra.mxu0 %v2078
  %3102 = vmatpush.msra.mxu0 %v2074
  %3103 = vmatpush.msra.mxu0 %v2070
  %3104 = vmatpush.msra.mxu0 %v2066
  %3105 = vmatpush.msra.mxu0 %v2062
  %3106 = vmatpush.msra.mxu0 %v2058
  %3107 = vmatpush.msra.mxu0 %v2054
  %3108 = vmatpush.msra.mxu0 %v2050
  %3109 = vmatmul.f32.gmra.mxu0 %v3067
  %v3110 = vpop.f32.mrf.mxu0
  %v3111 = vadd.f32 0.0, %v3110
  %3112 = vdwg.mxu0
  %3113 = vmatpush.msra.mxu0 %v2111
  %3114 = vmatpush.msra.mxu0 %v2107
  %3115 = vmatpush.msra.mxu0 %v2103
  %3116 = vmatpush.msra.mxu0 %v2099
  %3117 = vmatpush.msra.mxu0 %v2095
  %3118 = vmatpush.msra.mxu0 %v2091
  %3119 = vmatpush.msra.mxu0 %v2087
  %3120 = vmatpush.msra.mxu0 %v2083
  %3121 = vmatpush.msra.mxu0 %v2079
  %3122 = vmatpush.msra.mxu0 %v2075
  %3123 = vmatpush.msra.mxu0 %v2071
  %3124 = vmatpush.msra.mxu0 %v2067
  %3125 = vmatpush.msra.mxu0 %v2063
  %3126 = vmatpush.msra.mxu0 %v2059
  %3127 = vmatpush.msra.mxu0 %v2055
  %3128 = vmatpush.msra.mxu0 %v2051
  %3129 = vmatmul.f32.gmra.mxu0 %v3067
  %v3130 = vpop.f32.mrf.mxu0
  %v3131 = vadd.f32 0.0, %v3130
  %3132 = vdwg.mxu0
  %3133 = vmatpush.msra.mxu0 %v2112
  %3134 = vmatpush.msra.mxu0 %v2108
  %3135 = vmatpush.msra.mxu0 %v2104
  %3136 = vmatpush.msra.mxu0 %v2100
  %3137 = vmatpush.msra.mxu0 %v2096
  %3138 = vmatpush.msra.mxu0 %v2092
  %3139 = vmatpush.msra.mxu0 %v2088
  %3140 = vmatpush.msra.mxu0 %v2084
  %3141 = vmatpush.msra.mxu0 %v2080
  %3142 = vmatpush.msra.mxu0 %v2076
  %3143 = vmatpush.msra.mxu0 %v2072
  %3144 = vmatpush.msra.mxu0 %v2068
  %3145 = vmatpush.msra.mxu0 %v2064
  %3146 = vmatpush.msra.mxu0 %v2060
  %3147 = vmatpush.msra.mxu0 %v2056
  %3148 = vmatpush.msra.mxu0 %v2052
  %3149 = vmatmul.f32.gmra.mxu0 %v3067
  %v3150 = vpop.f32.mrf.mxu0
  %v3151 = vadd.f32 0.0, %v3150
  %3152 = vdwg.mxu0
  %v3153 = vadd.f32 %v3069, %v3091
  %v3154 = vadd.f32 %v3070, %v3111
  %v3155 = vadd.f32 %v3071, %v3131
  %v3156 = vadd.f32 %v3072, %v3151
  %v3157 = vxor.u32 %v3153, 2147483648
  %v3158 = vmul.f32 %v3157, 1.442695
  %v3159 = vpow.pop %v3158
  %v3160 = vadd.f32 %v3159, 1.0
  %v3161 = vrcp.pop %v3160
  %v3162 = vmul.f32 %v3160, %v3161
  %v3163 = vsub.f32 1.0, %v3162
  %v3164 = vmul.f32 %v3161, %v3163
  %v3165 = vadd.f32 %v3161, %v3164
  %vm3166 = vweird.f32 %v3160
  %vm3167 = vweird.f32 %v3161
  %vm3168 = vmor %vm3166, %vm3167
  %v3169 = vsel %vm3168, %v3161, %v3165
  %v3170 = vand.u32 2147483647, %v3160
  %vm3171 = vcmp.eq.f32.partialorder %v3170, 8.507059e+37
  %v3172 = vand.u32 %v3160, 2147483648
  %v3173 = vor.u32 1.1754944e-38, %v3172
  %v3174 = vsel %vm3171, %v3173, %v3169
  %v3175 = vmul.f32 1.0, %v3174
  %v3176 = vxor.u32 %v3154, 2147483648
  %v3177 = vmul.f32 %v3176, 1.442695
  %v3178 = vpow.pop %v3177
  %v3179 = vadd.f32 %v3178, 1.0
  %v3180 = vrcp.pop %v3179
  %v3181 = vmul.f32 %v3179, %v3180
  %v3182 = vsub.f32 1.0, %v3181
  %v3183 = vmul.f32 %v3180, %v3182
  %v3184 = vadd.f32 %v3180, %v3183
  %vm3185 = vweird.f32 %v3179
  %vm3186 = vweird.f32 %v3180
  %vm3187 = vmor %vm3185, %vm3186
  %v3188 = vsel %vm3187, %v3180, %v3184
  %v3189 = vand.u32 2147483647, %v3179
  %vm3190 = vcmp.eq.f32.partialorder %v3189, 8.507059e+37
  %v3191 = vand.u32 %v3179, 2147483648
  %v3192 = vor.u32 1.1754944e-38, %v3191
  %v3193 = vsel %vm3190, %v3192, %v3188
  %v3194 = vmul.f32 1.0, %v3193
  %v3195 = vtanh.pop %v3155
  %v3196 = vxor.u32 %v3156, 2147483648
  %v3197 = vmul.f32 %v3196, 1.442695
  %v3198 = vpow.pop %v3197
  %v3199 = vadd.f32 %v3198, 1.0
  %v3200 = vrcp.pop %v3199
  %v3201 = vmul.f32 %v3199, %v3200
  %v3202 = vsub.f32 1.0, %v3201
  %v3203 = vmul.f32 %v3200, %v3202
  %v3204 = vadd.f32 %v3200, %v3203
  %vm3205 = vweird.f32 %v3199
  %vm3206 = vweird.f32 %v3200
  %vm3207 = vmor %vm3205, %vm3206
  %v3208 = vsel %vm3207, %v3200, %v3204
  %v3209 = vand.u32 2147483647, %v3199
  %vm3210 = vcmp.eq.f32.partialorder %v3209, 8.507059e+37
  %v3211 = vand.u32 %v3199, 2147483648
  %v3212 = vor.u32 1.1754944e-38, %v3211
  %v3213 = vsel %vm3210, %v3212, %v3208
  %v3214 = vmul.f32 1.0, %v3213
  %v3215 = vmul.f32 %v3194, %v3068
  %v3216 = vmul.f32 %v3175, %v3195
  %v3217 = vadd.f32 %v3215, %v3216
  %v3218 = vtanh.pop %v3217
  %v3219 = vmul.f32 %v3214, %v3218
  %v3220 = vsel %vm1589, %v3219, %v3067
  %3221 = vst [vmem:[#allocation4] sm:$0xff] %v3220
  %v3222 = vsel %vm1589, %v3217, %v3068
  %3223 = vst [vmem:[#allocation5] sm:$0xff] %v3222
  %v3224 = vsel %vm1589, %v3219, 0.0
  %3225 = vst [vmem:[#allocation3 + $0x30] sm:$0xff] %v3224
  %v3226 = vld [vmem:[#allocation4] sm:$0xff]
  %v3227 = vld [vmem:[#allocation5] sm:$0xff]
  %v3228 = vld [vmem:[#allocation2 + $0xe0] sm:$0xff]
  %v3229 = vld [vmem:[#allocation2 + $0xe8] sm:$0xff]
  %v3230 = vld [vmem:[#allocation2 + $0xf0] sm:$0xff]
  %v3231 = vld [vmem:[#allocation2 + $0xf8] sm:$0xff]
  %3232 = vmatpush.msra.mxu0 %v2109
  %3233 = vmatpush.msra.mxu0 %v2105
  %3234 = vmatpush.msra.mxu0 %v2101
  %3235 = vmatpush.msra.mxu0 %v2097
  %3236 = vmatpush.msra.mxu0 %v2093
  %3237 = vmatpush.msra.mxu0 %v2089
  %3238 = vmatpush.msra.mxu0 %v2085
  %3239 = vmatpush.msra.mxu0 %v2081
  %3240 = vmatpush.msra.mxu0 %v2077
  %3241 = vmatpush.msra.mxu0 %v2073
  %3242 = vmatpush.msra.mxu0 %v2069
  %3243 = vmatpush.msra.mxu0 %v2065
  %3244 = vmatpush.msra.mxu0 %v2061
  %3245 = vmatpush.msra.mxu0 %v2057
  %3246 = vmatpush.msra.mxu0 %v2053
  %3247 = vmatpush.msra.mxu0 %v2049
  %3248 = vmatmul.f32.gmra.mxu0 %v3226
  %v3249 = vpop.f32.mrf.mxu0
  %v3250 = vadd.f32 0.0, %v3249
  %3251 = vdwg.mxu0
  %3252 = vmatpush.msra.mxu0 %v2110
  %3253 = vmatpush.msra.mxu0 %v2106
  %3254 = vmatpush.msra.mxu0 %v2102
  %3255 = vmatpush.msra.mxu0 %v2098
  %3256 = vmatpush.msra.mxu0 %v2094
  %3257 = vmatpush.msra.mxu0 %v2090
  %3258 = vmatpush.msra.mxu0 %v2086
  %3259 = vmatpush.msra.mxu0 %v2082
  %3260 = vmatpush.msra.mxu0 %v2078
  %3261 = vmatpush.msra.mxu0 %v2074
  %3262 = vmatpush.msra.mxu0 %v2070
  %3263 = vmatpush.msra.mxu0 %v2066
  %3264 = vmatpush.msra.mxu0 %v2062
  %3265 = vmatpush.msra.mxu0 %v2058
  %3266 = vmatpush.msra.mxu0 %v2054
  %3267 = vmatpush.msra.mxu0 %v2050
  %3268 = vmatmul.f32.gmra.mxu0 %v3226
  %v3269 = vpop.f32.mrf.mxu0
  %v3270 = vadd.f32 0.0, %v3269
  %3271 = vdwg.mxu0
  %3272 = vmatpush.msra.mxu0 %v2111
  %3273 = vmatpush.msra.mxu0 %v2107
  %3274 = vmatpush.msra.mxu0 %v2103
  %3275 = vmatpush.msra.mxu0 %v2099
  %3276 = vmatpush.msra.mxu0 %v2095
  %3277 = vmatpush.msra.mxu0 %v2091
  %3278 = vmatpush.msra.mxu0 %v2087
  %3279 = vmatpush.msra.mxu0 %v2083
  %3280 = vmatpush.msra.mxu0 %v2079
  %3281 = vmatpush.msra.mxu0 %v2075
  %3282 = vmatpush.msra.mxu0 %v2071
  %3283 = vmatpush.msra.mxu0 %v2067
  %3284 = vmatpush.msra.mxu0 %v2063
  %3285 = vmatpush.msra.mxu0 %v2059
  %3286 = vmatpush.msra.mxu0 %v2055
  %3287 = vmatpush.msra.mxu0 %v2051
  %3288 = vmatmul.f32.gmra.mxu0 %v3226
  %v3289 = vpop.f32.mrf.mxu0
  %v3290 = vadd.f32 0.0, %v3289
  %3291 = vdwg.mxu0
  %3292 = vmatpush.msra.mxu0 %v2112
  %3293 = vmatpush.msra.mxu0 %v2108
  %3294 = vmatpush.msra.mxu0 %v2104
  %3295 = vmatpush.msra.mxu0 %v2100
  %3296 = vmatpush.msra.mxu0 %v2096
  %3297 = vmatpush.msra.mxu0 %v2092
  %3298 = vmatpush.msra.mxu0 %v2088
  %3299 = vmatpush.msra.mxu0 %v2084
  %3300 = vmatpush.msra.mxu0 %v2080
  %3301 = vmatpush.msra.mxu0 %v2076
  %3302 = vmatpush.msra.mxu0 %v2072
  %3303 = vmatpush.msra.mxu0 %v2068
  %3304 = vmatpush.msra.mxu0 %v2064
  %3305 = vmatpush.msra.mxu0 %v2060
  %3306 = vmatpush.msra.mxu0 %v2056
  %3307 = vmatpush.msra.mxu0 %v2052
  %3308 = vmatmul.f32.gmra.mxu0 %v3226
  %v3309 = vpop.f32.mrf.mxu0
  %v3310 = vadd.f32 0.0, %v3309
  %3311 = vdwg.mxu0
  %v3312 = vadd.f32 %v3228, %v3250
  %v3313 = vadd.f32 %v3229, %v3270
  %v3314 = vadd.f32 %v3230, %v3290
  %v3315 = vadd.f32 %v3231, %v3310
  %v3316 = vxor.u32 %v3312, 2147483648
  %v3317 = vmul.f32 %v3316, 1.442695
  %v3318 = vpow.pop %v3317
  %v3319 = vadd.f32 %v3318, 1.0
  %v3320 = vrcp.pop %v3319
  %v3321 = vmul.f32 %v3319, %v3320
  %v3322 = vsub.f32 1.0, %v3321
  %v3323 = vmul.f32 %v3320, %v3322
  %v3324 = vadd.f32 %v3320, %v3323
  %vm3325 = vweird.f32 %v3319
  %vm3326 = vweird.f32 %v3320
  %vm3327 = vmor %vm3325, %vm3326
  %v3328 = vsel %vm3327, %v3320, %v3324
  %v3329 = vand.u32 2147483647, %v3319
  %vm3330 = vcmp.eq.f32.partialorder %v3329, 8.507059e+37
  %v3331 = vand.u32 %v3319, 2147483648
  %v3332 = vor.u32 1.1754944e-38, %v3331
  %v3333 = vsel %vm3330, %v3332, %v3328
  %v3334 = vmul.f32 1.0, %v3333
  %v3335 = vxor.u32 %v3313, 2147483648
  %v3336 = vmul.f32 %v3335, 1.442695
  %v3337 = vpow.pop %v3336
  %v3338 = vadd.f32 %v3337, 1.0
  %v3339 = vrcp.pop %v3338
  %v3340 = vmul.f32 %v3338, %v3339
  %v3341 = vsub.f32 1.0, %v3340
  %v3342 = vmul.f32 %v3339, %v3341
  %v3343 = vadd.f32 %v3339, %v3342
  %vm3344 = vweird.f32 %v3338
  %vm3345 = vweird.f32 %v3339
  %vm3346 = vmor %vm3344, %vm3345
  %v3347 = vsel %vm3346, %v3339, %v3343
  %v3348 = vand.u32 2147483647, %v3338
  %vm3349 = vcmp.eq.f32.partialorder %v3348, 8.507059e+37
  %v3350 = vand.u32 %v3338, 2147483648
  %v3351 = vor.u32 1.1754944e-38, %v3350
  %v3352 = vsel %vm3349, %v3351, %v3347
  %v3353 = vmul.f32 1.0, %v3352
  %v3354 = vtanh.pop %v3314
  %v3355 = vxor.u32 %v3315, 2147483648
  %v3356 = vmul.f32 %v3355, 1.442695
  %v3357 = vpow.pop %v3356
  %v3358 = vadd.f32 %v3357, 1.0
  %v3359 = vrcp.pop %v3358
  %v3360 = vmul.f32 %v3358, %v3359
  %v3361 = vsub.f32 1.0, %v3360
  %v3362 = vmul.f32 %v3359, %v3361
  %v3363 = vadd.f32 %v3359, %v3362
  %vm3364 = vweird.f32 %v3358
  %vm3365 = vweird.f32 %v3359
  %vm3366 = vmor %vm3364, %vm3365
  %v3367 = vsel %vm3366, %v3359, %v3363
  %v3368 = vand.u32 2147483647, %v3358
  %vm3369 = vcmp.eq.f32.partialorder %v3368, 8.507059e+37
  %v3370 = vand.u32 %v3358, 2147483648
  %v3371 = vor.u32 1.1754944e-38, %v3370
  %v3372 = vsel %vm3369, %v3371, %v3367
  %v3373 = vmul.f32 1.0, %v3372
  %v3374 = vmul.f32 %v3353, %v3227
  %v3375 = vmul.f32 %v3334, %v3354
  %v3376 = vadd.f32 %v3374, %v3375
  %v3377 = vtanh.pop %v3376
  %v3378 = vmul.f32 %v3373, %v3377
  %v3379 = vsel %vm1754, %v3378, %v3226
  %3380 = vst [vmem:[#allocation4] sm:$0xff] %v3379
  %v3381 = vsel %vm1754, %v3376, %v3227
  %3382 = vst [vmem:[#allocation5] sm:$0xff] %v3381
  %v3383 = vsel %vm1754, %v3378, 0.0
  %3384 = vst [vmem:[#allocation3 + $0x38] sm:$0xff] %v3383
  %v3385 = vld [vmem:[#allocation4] sm:$0xff]
  %s3386 = scalar_lea.vmem %s13, 8
  %3387 = vst [vmem:[%s3386] sm:$0xff] %v3385
  %v3388 = vld [vmem:[#allocation5] sm:$0xff]
  %s3389 = scalar_lea.vmem %s14, 8
  %3390 = vst [vmem:[%s3389] sm:$0xff] %v3388
  %v3391 = vld [vmem:[#allocation3] sm:$0xff]
  %v3392 = vld [vmem:[#allocation3 + $0x8] sm:$0xff]
  %v3393 = vld [vmem:[#allocation3 + $0x10] sm:$0xff]
  %v3394 = vld [vmem:[#allocation3 + $0x18] sm:$0xff]
  %v3395 = vld [vmem:[#allocation3 + $0x20] sm:$0xff]
  %v3396 = vld [vmem:[#allocation3 + $0x28] sm:$0xff]
  %v3397 = vld [vmem:[#allocation3 + $0x30] sm:$0xff]
  %v3398 = vld [vmem:[#allocation3 + $0x38] sm:$0xff]
  %v3399 = vld [vmem:[%s8] sm:$0xff]
  %v3400 = vld [vmem:[%s8 + $0x8] sm:$0xff]
  %v3401 = vld [vmem:[%s8 + $0x10] sm:$0xff]
  %v3402 = vld [vmem:[%s8 + $0x18] sm:$0xff]
  %v3403 = vld [vmem:[%s8 + $0x20] sm:$0xff]
  %v3404 = vld [vmem:[%s8 + $0x28] sm:$0xff]
  %v3405 = vld [vmem:[%s8 + $0x30] sm:$0xff]
  %v3406 = vld [vmem:[%s8 + $0x38] sm:$0xff]
  %v3407 = vld [vmem:[%s8 + $0x40] sm:$0xff]
  %v3408 = vld [vmem:[%s8 + $0x48] sm:$0xff]
  %v3409 = vld [vmem:[%s8 + $0x50] sm:$0xff]
  %v3410 = vld [vmem:[%s8 + $0x58] sm:$0xff]
  %v3411 = vld [vmem:[%s8 + $0x60] sm:$0xff]
  %v3412 = vld [vmem:[%s8 + $0x68] sm:$0xff]
  %v3413 = vld [vmem:[%s8 + $0x70] sm:$0xff]
  %v3414 = vld [vmem:[%s8 + $0x78] sm:$0xff]
  %v3415 = vld [vmem:[%s9] sm:$0x1]
  %v3417 = vperm.slane %v3415, 0
  %3419 = vmatpush.msra.mxu0 %v3414
  %3420 = vmatpush.msra.mxu0 %v3413
  %3421 = vmatpush.msra.mxu0 %v3412
  %3422 = vmatpush.msra.mxu0 %v3411
  %3423 = vmatpush.msra.mxu0 %v3410
  %3424 = vmatpush.msra.mxu0 %v3409
  %3425 = vmatpush.msra.mxu0 %v3408
  %3426 = vmatpush.msra.mxu0 %v3407
  %3427 = vmatpush.msra.mxu0 %v3406
  %3428 = vmatpush.msra.mxu0 %v3405
  %3429 = vmatpush.msra.mxu0 %v3404
  %3430 = vmatpush.msra.mxu0 %v3403
  %3431 = vmatpush.msra.mxu0 %v3402
  %3432 = vmatpush.msra.mxu0 %v3401
  %3433 = vmatpush.msra.mxu0 %v3400
  %3434 = vmatpush.msra.mxu0 %v3399
  %3435 = vmatmul.f32.gmra.mxu0 %v3391
  %v3436 = vpop.f32.mrf.mxu0
  %v3437 = vadd.f32 %v3417, %v3436
  %3438 = vmatmul.f32.gmra.mxu0 %v3392
  %v3439 = vpop.f32.mrf.mxu0
  %v3440 = vadd.f32 %v3417, %v3439
  %3441 = vmatmul.f32.gmra.mxu0 %v3393
  %v3442 = vpop.f32.mrf.mxu0
  %v3443 = vadd.f32 %v3417, %v3442
  %3444 = vmatmul.f32.gmra.mxu0 %v3394
  %v3445 = vpop.f32.mrf.mxu0
  %v3446 = vadd.f32 %v3417, %v3445
  %3447 = vmatmul.f32.gmra.mxu0 %v3395
  %v3448 = vpop.f32.mrf.mxu0
  %v3449 = vadd.f32 %v3417, %v3448
  %3450 = vmatmul.f32.gmra.mxu0 %v3396
  %v3451 = vpop.f32.mrf.mxu0
  %v3452 = vadd.f32 %v3417, %v3451
  %3453 = vmatmul.f32.gmra.mxu0 %v3397
  %v3454 = vpop.f32.mrf.mxu0
  %v3455 = vadd.f32 %v3417, %v3454
  %3456 = vmatmul.f32.gmra.mxu0 %v3398
  %v3457 = vpop.f32.mrf.mxu0
  %v3458 = vadd.f32 %v3417, %v3457
  %3459 = vdwg.mxu0
  %3460 = vst [vmem:[%s12] sm:$0xff] %v3437
  %s3461 = scalar_lea.vmem %s12, 8
  %3462 = vst [vmem:[%s3461] sm:$0xff] %v3440
  %s3463 = scalar_lea.vmem %s12, 16
  %3464 = vst [vmem:[%s3463] sm:$0xff] %v3443
  %s3465 = scalar_lea.vmem %s12, 24
  %3466 = vst [vmem:[%s3465] sm:$0xff] %v3446
  %s3467 = scalar_lea.vmem %s12, 32
  %3468 = vst [vmem:[%s3467] sm:$0xff] %v3449
  %s3469 = scalar_lea.vmem %s12, 40
  %3470 = vst [vmem:[%s3469] sm:$0xff] %v3452
  %s3471 = scalar_lea.vmem %s12, 48
  %3472 = vst [vmem:[%s3471] sm:$0xff] %v3455
  %s3473 = scalar_lea.vmem %s12, 56
  %3474 = vst [vmem:[%s3473] sm:$0xff] %v3458
  // Predicated region
  $region50: #{_generator_forward.1} parent=0 // pred_check
    _
  $region51: #{_generator_forward.1} parent=0 // pred_check_branch
    %3476 = sbr.rel (0) target = $region53
  $region52: #{_generator_forward.1} parent=0 // pred_region
    _
  $region53: #{_generator_forward.1} parent=0 // pred_fallthru
    _
  // Predicated region
  $region54: #{_generator_forward.1} parent=0 // pred_check
    _
  $region55: #{_generator_forward.1} parent=0 // pred_check_branch
    %3478 = sbr.rel (0) target = $region57
  $region56: #{_generator_forward.1} parent=0 // pred_region
    _
  $region57: #{_generator_forward.1} parent=0 // pred_fallthru
    _
  // Predicated region
  $region58: #{_generator_forward.1} parent=0 // pred_check
    _
  $region59: #{_generator_forward.1} parent=0 // pred_check_branch
    %3480 = sbr.rel (0) target = $region61
  $region60: #{_generator_forward.1} parent=0 // pred_region
    _
  $region61: #{_generator_forward.1} parent=0 // pred_fallthru
    _
  // Predicated region
  $region62: #{_generator_forward.1} parent=0 // pred_check
    _
  $region63: #{_generator_forward.1} parent=0 // pred_check_branch
    %3482 = sbr.rel (0) target = $region65
  $region64: #{_generator_forward.1} parent=0 // pred_region
    _
  $region65: #{_generator_forward.1} parent=0 // pred_fallthru
    _
  // Predicated region
  $region66: #{_generator_forward.1} parent=0 // pred_check
    _
  $region67: #{_generator_forward.1} parent=0 // pred_check_branch
    %3484 = sbr.rel (0) target = $region69
  $region68: #{_generator_forward.1} parent=0 // pred_region
    _
  $region69: #{_generator_forward.1} parent=0 // pred_fallthru
    _
  // Predicated region
  $region70: #{_generator_forward.1} parent=0 // pred_check
    _
  $region71: #{_generator_forward.1} parent=0 // pred_check_branch
    %3486 = sbr.rel (0) target = $region73
  $region72: #{_generator_forward.1} parent=0 // pred_region
    _
  $region73: #{_generator_forward.1} parent=0 // pred_fallthru
    _

</llo_original>
